<compile_context>
chip_gen: v6e
topology: v6e:2x2x1
jax: 0.10.0
libtpu: 0.0.40
codegen_flags: <defaults>
</compile_context>

<pallas_src>
import functools

import jax
import jax.numpy as jnp
from jax import lax
from jax.experimental import pallas as pl
from jax.experimental.pallas import tpu as pltpu

# Matmul operand precision.  bf16 operands (f32 accumulation) are native on
# the MXU for all of v5e/v6e/v7x; f32 operands cost multiple MXU passes on
# the serial per-step latency chain.
MATMUL_DTYPE = jnp.bfloat16
_TOL = 1e-3 if MATMUL_DTYPE == jnp.float32 else 2e-2


# ----------------------------------------------------------------------------
# Fused LSTM + decoder kernel (single invocation, everything resident in VMEM)
# ----------------------------------------------------------------------------
def _lstm_fused_kernel(x_ref, wx_ref, wh_ref, b_ref, h0_ref, c0_ref,
                       wdec_ref, bdec_ref,
                       pred_ref, hn_ref, cn_ref,
                       xw_sc,
                       *, seq_len, hidden_dim, decode_by_reduce):
    S = seq_len
    H = hidden_dim
    B = h0_ref.shape[0]
    mm = MATMUL_DTYPE

    # ---- Input projection, split so the recurrence can start immediately ---
    # Timestep-0 rows first: a tiny (B, I) x (I, 4H) dot is all step 0 needs.
    # The bulk (S-1)*B rows follow as an independent dot whose MXU/store work
    # can overlap with the early (otherwise MXU-idle) recurrence steps.
    b = b_ref[...]                                             # (1, 4H) f32
    xw_sc[pl.ds(0, B), :] = (
        jnp.dot(x_ref[pl.ds(0, B), :].astype(mm), wx_ref[...],
                preferred_element_type=jnp.float32) + b)
    if S > 1:
        rest = (S - 1) * B
        xw_sc[pl.ds(B, rest), :] = (
            jnp.dot(x_ref[pl.ds(B, rest), :].astype(mm), wx_ref[...],
                    preferred_element_type=jnp.float32) + b)

    h0 = h0_ref[...]                                           # (B, H) f32
    c0 = c0_ref[...]                                           # (B, H) f32
    wdec = wdec_ref[...]                                       # decoder weight
    bdec = bdec_ref[...]                                       # decoder bias

    # ---- Recurrence: h/c carried in vregs, decoder fused per step ----------
    def step(t, carry):
        h, c = carry
        row = pl.multiple_of(t * B, B)                  # sublane-aligned

        # W_hh read from VMEM inside the loop (not a live value spanning the
        # unrolled recurrence).  bf16 operands, f32 accumulation; gates f32.
        gates = (jnp.dot(h.astype(mm), wh_ref[...],
                         preferred_element_type=jnp.float32)
                 + xw_sc[pl.ds(row, B), :])             # (B, 4H) f32

        # PyTorch gate order: i, f, g, o.  Sigmoid on the contiguous i|f slab
        # in one EUP pass; slices are lane-aligned for H % 128 == 0.
        i_f = jax.nn.sigmoid(gates[:, 0:2 * H])
        i = i_f[:, 0:H]
        f = i_f[:, H:2 * H]
        g = jnp.tanh(gates[:, 2 * H:3 * H])
        o = jax.nn.sigmoid(gates[:, 3 * H:4 * H])

        c_new = f * c + i * g                           # f32 state update
        h_new = o * jnp.tanh(c_new)

        # Fused decoder: output-only store, off the serial dependence chain.
        if decode_by_reduce:
            # output_dim == 1: VPU multiply + XLU lane reduce (no 1-col MXU
            # matmul).  At S*B = 64 the whole prediction is one sub-vreg
            # column; a lane-dense (O, S*B) layout only pays off at scale.
            pred_t = jnp.sum(h_new * wdec, axis=-1, keepdims=True) + bdec
        else:
            pred_t = (jnp.dot(h_new.astype(mm), wdec,
                              preferred_element_type=jnp.float32) + bdec)
        pred_ref[pl.ds(row, B), :] = pred_t.astype(pred_ref.dtype)

        return h_new, c_new

    # Full unroll only while S is small; partial unroll keeps LLO visibility
    # without blowing up code size for long sequences.
    unroll = True if S <= 16 else 8
    h_fin, c_fin = lax.fori_loop(0, S, step, (h0, c0), unroll=unroll)

    # Final states written exactly once.
    hn_ref[...] = h_fin.astype(hn_ref.dtype)
    cn_ref[...] = c_fin.astype(cn_ref.dtype)


# ----------------------------------------------------------------------------
# Wrapper: full module forward -> (prediction, (h_n, c_n))
# ----------------------------------------------------------------------------
def lstm_module_forward(x, params):
    S, B, I = x.shape
    H = params["w_hh"].shape[1]
    O = params["w_dec"].shape[0]
    mm = MATMUL_DTYPE

    wx = params["w_ih"].T.astype(mm)                    # (I, 4H)  bf16
    wh = params["w_hh"].T.astype(mm)                    # (H, 4H)  bf16
    b = (params["b_ih"] + params["b_hh"]).reshape(1, 4 * H).astype(jnp.float32)
    h0 = params["h0"][0].astype(jnp.float32)            # (B, H)
    c0 = params["c0"][0].astype(jnp.float32)            # (B, H)

    decode_by_reduce = (O == 1)
    if decode_by_reduce:
        wdec = params["w_dec"].astype(jnp.float32)      # (1, H)  VPU path
        bdec = params["b_dec"].reshape(1, 1).astype(jnp.float32)
    else:
        wdec = params["w_dec"].T.astype(mm)             # (H, O)  MXU path
        bdec = params["b_dec"].reshape(1, O).astype(jnp.float32)

    x2d = x.reshape(S * B, I)                           # f32, cast in-kernel

    kernel = functools.partial(
        _lstm_fused_kernel, seq_len=S, hidden_dim=H,
        decode_by_reduce=decode_by_reduce)

    pred2d, h_n, c_n = pl.pallas_call(
        kernel,
        out_shape=(
            jax.ShapeDtypeStruct((S * B, O), jnp.float32),   # prediction
            jax.ShapeDtypeStruct((B, H), jnp.float32),       # h_n
            jax.ShapeDtypeStruct((B, H), jnp.float32),       # c_n
        ),
        in_specs=[
            pl.BlockSpec((S * B, I), lambda: (0, 0)),        # x (flattened)
            pl.BlockSpec((I, 4 * H), lambda: (0, 0)),        # W_ih.T  (bf16)
            pl.BlockSpec((H, 4 * H), lambda: (0, 0)),        # W_hh.T  (bf16)
            pl.BlockSpec((1, 4 * H), lambda: (0, 0)),        # b_ih + b_hh
            pl.BlockSpec((B, H), lambda: (0, 0)),            # h0
            pl.BlockSpec((B, H), lambda: (0, 0)),            # c0
            pl.BlockSpec(wdec.shape, lambda: (0, 0)),        # decoder weight
            pl.BlockSpec(bdec.shape, lambda: (0, 0)),        # decoder bias
        ],
        out_specs=(
            pl.BlockSpec((S * B, O), lambda: (0, 0)),
            pl.BlockSpec((B, H), lambda: (0, 0)),
            pl.BlockSpec((B, H), lambda: (0, 0)),
        ),
        scratch_shapes=[
            pltpu.VMEM((S * B, 4 * H), jnp.float32),         # x @ W_ih.T + b
        ],
    )(x2d, wx, wh, b, h0, c0, wdec, bdec)

    pred = pred2d.reshape(S, B, O)
    return pred, (h_n[None], c_n[None])


# ----------------------------------------------------------------------------
# Pure-JAX f32 reference (for correctness check)
# ----------------------------------------------------------------------------
def lstm_module_ref(x, params):
    S, B, _ = x.shape
    H = params["w_hh"].shape[1]
    wx, wh = params["w_ih"].T, params["w_hh"].T
    b = params["b_ih"] + params["b_hh"]
    h, c = params["h0"][0], params["c0"][0]
    outs = []
    for t in range(S):
        gates = x[t] @ wx + h @ wh + b
        i = jax.nn.sigmoid(gates[:, 0 * H:1 * H])
        f = jax.nn.sigmoid(gates[:, 1 * H:2 * H])
        g = jnp.tanh(gates[:, 2 * H:3 * H])
        o = jax.nn.sigmoid(gates[:, 3 * H:4 * H])
        c = f * c + i * g
        h = o * jnp.tanh(c)
        outs.append(h)
    lstm_out = jnp.stack(outs, axis=0)
    pred = lstm_out @ params["w_dec"].T + params["b_dec"]
    return pred, (h[None], c[None])


if __name__ == "__main__":
    # Module hyper-parameters (num_layers=1, dropout=0 as in the default usage).
    input_dim, hidden_dim, batch_size = 32, 128, 8
    output_dim, num_layers, seq_len = 1, 1, 8

    key = jax.random.PRNGKey(0)
    keys = jax.random.split(key, 10)
    k = 1.0 / jnp.sqrt(hidden_dim)   # PyTorch LSTM/Linear uniform init bound

    params = {
        "w_ih": jax.random.uniform(keys[0], (4 * hidden_dim, input_dim),
                                   minval=-k, maxval=k, dtype=jnp.float32),
        "w_hh": jax.random.uniform(keys[1], (4 * hidden_dim, hidden_dim),
                                   minval=-k, maxval=k, dtype=jnp.float32),
        "b_ih": jax.random.uniform(keys[2], (4 * hidden_dim,),
                                   minval=-k, maxval=k, dtype=jnp.float32),
        "b_hh": jax.random.uniform(keys[3], (4 * hidden_dim,),
                                   minval=-k, maxval=k, dtype=jnp.float32),
        "w_dec": jax.random.uniform(keys[4], (output_dim, hidden_dim),
                                    minval=-k, maxval=k, dtype=jnp.float32),
        "b_dec": jax.random.uniform(keys[5], (output_dim,),
                                    minval=-k, maxval=k, dtype=jnp.float32),
        "h0": jax.random.normal(keys[6], (num_layers, batch_size, hidden_dim),
                                dtype=jnp.float32),
        "c0": jax.random.normal(keys[7], (num_layers, batch_size, hidden_dim),
                                dtype=jnp.float32),
    }

    x = jax.random.normal(keys[8], (seq_len, batch_size, input_dim),
                          dtype=jnp.float32)

    pred, (h_n, c_n) = lstm_module_forward(x, params)
    jax.block_until_ready((pred, h_n, c_n))

    pred_ref, (h_ref, c_ref) = lstm_module_ref(x, params)
    assert pred.shape == (seq_len, batch_size, output_dim)
    assert h_n.shape == (num_layers, batch_size, hidden_dim)
    assert c_n.shape == (num_layers, batch_size, hidden_dim)
    # Tolerance is 1e-3 for f32 matmul operands, 2e-2 for the bf16 MXU path
    # (bf16 operand rounding in the gate matmuls, f32 accumulation/state).
    assert jnp.allclose(pred, pred_ref, atol=_TOL, rtol=_TOL)
    assert jnp.allclose(h_n, h_ref, atol=_TOL, rtol=_TOL)
    assert jnp.allclose(c_n, c_ref, atol=_TOL, rtol=_TOL)

    print("KERNEL_OK")
</pallas_src>

<mosaic_0001>
module attributes {stable_mosaic.version = 11 : i64} {
  func.func @_lstm_fused_kernel(%arg0: memref<64x32xf32, #tpu.memory_space<vmem>>, %arg1: memref<32x512xbf16, #tpu.memory_space<vmem>>, %arg2: memref<128x512xbf16, #tpu.memory_space<vmem>>, %arg3: memref<1x512xf32, #tpu.memory_space<vmem>>, %arg4: memref<8x128xf32, #tpu.memory_space<vmem>>, %arg5: memref<8x128xf32, #tpu.memory_space<vmem>>, %arg6: memref<1x128xf32, #tpu.memory_space<vmem>>, %arg7: memref<1x1xf32, #tpu.memory_space<vmem>>, %arg8: memref<64x1xf32, #tpu.memory_space<vmem>>, %arg9: memref<8x128xf32, #tpu.memory_space<vmem>>, %arg10: memref<8x128xf32, #tpu.memory_space<vmem>>, %arg11: memref<64x512xf32, #tpu.memory_space<vmem>>) attributes {dimension_semantics = [], scalar_prefetch = 0 : i64, scratch_operands = 1 : i64, tpu.core_type = #tpu.core_type<tc>} {
    %c0 = arith.constant 0 : index
    %c0_0 = arith.constant 0 : index
    %0 = vector.load %arg3[%c0, %c0_0] : memref<1x512xf32, #tpu.memory_space<vmem>>, vector<1x512xf32>
    %c0_1 = arith.constant 0 : index
    %c0_2 = arith.constant 0 : index
    %1 = vector.load %arg0[%c0_1, %c0_2] : memref<64x32xf32, #tpu.memory_space<vmem>>, vector<8x32xf32>
    %2 = arith.truncf %1 : vector<8x32xf32> to vector<8x32xbf16>
    %c0_3 = arith.constant 0 : index
    %c0_4 = arith.constant 0 : index
    %3 = vector.load %arg1[%c0_3, %c0_4] : memref<32x512xbf16, #tpu.memory_space<vmem>>, vector<32x512xbf16>
    %cst = arith.constant dense<0.000000e+00> : vector<8x512xf32>
    %4 = tpu.matmul %2, %3, %cst {dimension_numbers = #tpu.dot_dimension_numbers<[1], [0], [0], [1], [0, 0, 1, 1], [], []>} : vector<8x32xbf16>, vector<32x512xbf16>, vector<8x512xf32> -> vector<8x512xf32>
    %5 = vector.broadcast %0 : vector<1x512xf32> to vector<8x512xf32>
    %6 = arith.addf %4, %5 : vector<8x512xf32>
    %c0_5 = arith.constant 0 : index
    %c0_6 = arith.constant 0 : index
    %7 = vector.load %arg11[%c0_5, %c0_6] : memref<64x512xf32, #tpu.memory_space<vmem>>, vector<8x512xf32>
    tpu.vector_store %arg11[%c0_5, %c0_6], %6 {strides = array<i32>} : memref<64x512xf32, #tpu.memory_space<vmem>>, vector<8x512xf32>,
    %c8 = arith.constant 8 : index
    %c0_7 = arith.constant 0 : index
    %8 = vector.load %arg0[%c8, %c0_7] : memref<64x32xf32, #tpu.memory_space<vmem>>, vector<56x32xf32>
    %9 = arith.truncf %8 : vector<56x32xf32> to vector<56x32xbf16>
    %c0_8 = arith.constant 0 : index
    %c0_9 = arith.constant 0 : index
    %10 = vector.load %arg1[%c0_8, %c0_9] : memref<32x512xbf16, #tpu.memory_space<vmem>>, vector<32x512xbf16>
    %cst_10 = arith.constant dense<0.000000e+00> : vector<56x512xf32>
    %11 = tpu.matmul %9, %10, %cst_10 {dimension_numbers = #tpu.dot_dimension_numbers<[1], [0], [0], [1], [0, 0, 1, 1], [], []>} : vector<56x32xbf16>, vector<32x512xbf16>, vector<56x512xf32> -> vector<56x512xf32>
    %12 = vector.broadcast %0 : vector<1x512xf32> to vector<56x512xf32>
    %13 = arith.addf %11, %12 : vector<56x512xf32>
    %c8_11 = arith.constant 8 : index
    %c0_12 = arith.constant 0 : index
    %14 = vector.load %arg11[%c8_11, %c0_12] : memref<64x512xf32, #tpu.memory_space<vmem>>, vector<56x512xf32>
    tpu.vector_store %arg11[%c8_11, %c0_12], %13 {strides = array<i32>} : memref<64x512xf32, #tpu.memory_space<vmem>>, vector<56x512xf32>,
    %c0_13 = arith.constant 0 : index
    %c0_14 = arith.constant 0 : index
    %15 = vector.load %arg4[%c0_13, %c0_14] : memref<8x128xf32, #tpu.memory_space<vmem>>, vector<8x128xf32>
    %c0_15 = arith.constant 0 : index
    %c0_16 = arith.constant 0 : index
    %16 = vector.load %arg5[%c0_15, %c0_16] : memref<8x128xf32, #tpu.memory_space<vmem>>, vector<8x128xf32>
    %c0_17 = arith.constant 0 : index
    %c0_18 = arith.constant 0 : index
    %17 = vector.load %arg6[%c0_17, %c0_18] : memref<1x128xf32, #tpu.memory_space<vmem>>, vector<1x128xf32>
    %c0_19 = arith.constant 0 : index
    %c0_20 = arith.constant 0 : index
    %18 = vector.load %arg7[%c0_19, %c0_20] : memref<1x1xf32, #tpu.memory_space<vmem>>, vector<1x1xf32>
    %c0_i32 = arith.constant 0 : i32
    %c8_i32 = arith.constant 8 : i32
    %19 = arith.muli %c0_i32, %c8_i32 : i32
    %20 = tpu.assume_multiple %19, 8 : i32
    %21 = arith.truncf %15 : vector<8x128xf32> to vector<8x128xbf16>
    %c0_21 = arith.constant 0 : index
    %c0_22 = arith.constant 0 : index
    %22 = vector.load %arg2[%c0_21, %c0_22] : memref<128x512xbf16, #tpu.memory_space<vmem>>, vector<128x512xbf16>
    %cst_23 = arith.constant dense<0.000000e+00> : vector<8x512xf32>
    %23 = tpu.matmul %21, %22, %cst_23 {dimension_numbers = #tpu.dot_dimension_numbers<[1], [0], [0], [1], [0, 0, 1, 1], [], []>} : vector<8x128xbf16>, vector<128x512xbf16>, vector<8x512xf32> -> vector<8x512xf32>
    %24 = arith.index_cast %20 : i32 to index
    %c0_24 = arith.constant 0 : index
    %25 = vector.load %arg11[%24, %c0_24] : memref<64x512xf32, #tpu.memory_space<vmem>>, vector<8x512xf32>
    %26 = arith.addf %23, %25 : vector<8x512xf32>
    %27 = vector.extract_strided_slice %26 {offsets = [0, 0], sizes = [8, 256], strides = [1, 1]} : vector<8x512xf32> to vector<8x256xf32>
    %28 = arith.negf %27 : vector<8x256xf32>
    %29 = math.exp %28 : vector<8x256xf32>
    %cst_25 = arith.constant 1.000000e+00 : f32
    %30 = vector.broadcast %cst_25 : f32 to vector<8x256xf32>
    %31 = arith.addf %30, %29 : vector<8x256xf32>
    %32 = arith.divf %30, %31 : vector<8x256xf32>
    %33 = vector.extract_strided_slice %32 {offsets = [0, 0], sizes = [8, 128], strides = [1, 1]} : vector<8x256xf32> to vector<8x128xf32>
    %34 = vector.extract_strided_slice %32 {offsets = [0, 128], sizes = [8, 128], strides = [1, 1]} : vector<8x256xf32> to vector<8x128xf32>
    %35 = vector.extract_strided_slice %26 {offsets = [0, 256], sizes = [8, 128], strides = [1, 1]} : vector<8x512xf32> to vector<8x128xf32>
    %36 = math.tanh %35 : vector<8x128xf32>
    %37 = vector.extract_strided_slice %26 {offsets = [0, 384], sizes = [8, 128], strides = [1, 1]} : vector<8x512xf32> to vector<8x128xf32>
    %38 = arith.negf %37 : vector<8x128xf32>
    %39 = math.exp %38 : vector<8x128xf32>
    %cst_26 = arith.constant 1.000000e+00 : f32
    %40 = vector.broadcast %cst_26 : f32 to vector<8x128xf32>
    %41 = arith.addf %40, %39 : vector<8x128xf32>
    %42 = arith.divf %40, %41 : vector<8x128xf32>
    %43 = arith.mulf %34, %16 : vector<8x128xf32>
    %44 = arith.mulf %33, %36 : vector<8x128xf32>
    %45 = arith.addf %43, %44 : vector<8x128xf32>
    %46 = math.tanh %45 : vector<8x128xf32>
    %47 = arith.mulf %42, %46 : vector<8x128xf32>
    %48 = vector.broadcast %17 : vector<1x128xf32> to vector<8x128xf32>
    %49 = arith.mulf %47, %48 : vector<8x128xf32>
    %cst_27 = arith.constant dense<0.000000e+00> : vector<8xf32>
    %50 = vector.multi_reduction <add>, %49, %cst_27 [1] : vector<8x128xf32> to vector<8xf32>
    %51 = vector.shape_cast %50 : vector<8xf32> to vector<8x1xf32>
    %52 = vector.broadcast %18 : vector<1x1xf32> to vector<8x1xf32>
    %53 = arith.addf %51, %52 : vector<8x1xf32>
    %54 = arith.index_cast %20 : i32 to index
    %c0_28 = arith.constant 0 : index
    %55 = vector.load %arg8[%54, %c0_28] : memref<64x1xf32, #tpu.memory_space<vmem>>, vector<8x1xf32>
    tpu.vector_store %arg8[%54, %c0_28], %53 {strides = array<i32>} : memref<64x1xf32, #tpu.memory_space<vmem>>, vector<8x1xf32>,
    %c1_i32 = arith.constant 1 : i32
    %c8_i32_29 = arith.constant 8 : i32
    %56 = arith.muli %c1_i32, %c8_i32_29 : i32
    %57 = tpu.assume_multiple %56, 8 : i32
    %58 = arith.truncf %47 : vector<8x128xf32> to vector<8x128xbf16>
    %c0_30 = arith.constant 0 : index
    %c0_31 = arith.constant 0 : index
    %59 = vector.load %arg2[%c0_30, %c0_31] : memref<128x512xbf16, #tpu.memory_space<vmem>>, vector<128x512xbf16>
    %cst_32 = arith.constant dense<0.000000e+00> : vector<8x512xf32>
    %60 = tpu.matmul %58, %59, %cst_32 {dimension_numbers = #tpu.dot_dimension_numbers<[1], [0], [0], [1], [0, 0, 1, 1], [], []>} : vector<8x128xbf16>, vector<128x512xbf16>, vector<8x512xf32> -> vector<8x512xf32>
    %61 = arith.index_cast %57 : i32 to index
    %c0_33 = arith.constant 0 : index
    %62 = vector.load %arg11[%61, %c0_33] : memref<64x512xf32, #tpu.memory_space<vmem>>, vector<8x512xf32>
    %63 = arith.addf %60, %62 : vector<8x512xf32>
    %64 = vector.extract_strided_slice %63 {offsets = [0, 0], sizes = [8, 256], strides = [1, 1]} : vector<8x512xf32> to vector<8x256xf32>
    %65 = arith.negf %64 : vector<8x256xf32>
    %66 = math.exp %65 : vector<8x256xf32>
    %cst_34 = arith.constant 1.000000e+00 : f32
    %67 = vector.broadcast %cst_34 : f32 to vector<8x256xf32>
    %68 = arith.addf %67, %66 : vector<8x256xf32>
    %69 = arith.divf %67, %68 : vector<8x256xf32>
    %70 = vector.extract_strided_slice %69 {offsets = [0, 0], sizes = [8, 128], strides = [1, 1]} : vector<8x256xf32> to vector<8x128xf32>
    %71 = vector.extract_strided_slice %69 {offsets = [0, 128], sizes = [8, 128], strides = [1, 1]} : vector<8x256xf32> to vector<8x128xf32>
    %72 = vector.extract_strided_slice %63 {offsets = [0, 256], sizes = [8, 128], strides = [1, 1]} : vector<8x512xf32> to vector<8x128xf32>
    %73 = math.tanh %72 : vector<8x128xf32>
    %74 = vector.extract_strided_slice %63 {offsets = [0, 384], sizes = [8, 128], strides = [1, 1]} : vector<8x512xf32> to vector<8x128xf32>
    %75 = arith.negf %74 : vector<8x128xf32>
    %76 = math.exp %75 : vector<8x128xf32>
    %cst_35 = arith.constant 1.000000e+00 : f32
    %77 = vector.broadcast %cst_35 : f32 to vector<8x128xf32>
    %78 = arith.addf %77, %76 : vector<8x128xf32>
    %79 = arith.divf %77, %78 : vector<8x128xf32>
    %80 = arith.mulf %71, %45 : vector<8x128xf32>
    %81 = arith.mulf %70, %73 : vector<8x128xf32>
    %82 = arith.addf %80, %81 : vector<8x128xf32>
    %83 = math.tanh %82 : vector<8x128xf32>
    %84 = arith.mulf %79, %83 : vector<8x128xf32>
    %85 = vector.broadcast %17 : vector<1x128xf32> to vector<8x128xf32>
    %86 = arith.mulf %84, %85 : vector<8x128xf32>
    %cst_36 = arith.constant dense<0.000000e+00> : vector<8xf32>
    %87 = vector.multi_reduction <add>, %86, %cst_36 [1] : vector<8x128xf32> to vector<8xf32>
    %88 = vector.shape_cast %87 : vector<8xf32> to vector<8x1xf32>
    %89 = vector.broadcast %18 : vector<1x1xf32> to vector<8x1xf32>
    %90 = arith.addf %88, %89 : vector<8x1xf32>
    %91 = arith.index_cast %57 : i32 to index
    %c0_37 = arith.constant 0 : index
    %92 = vector.load %arg8[%91, %c0_37] : memref<64x1xf32, #tpu.memory_space<vmem>>, vector<8x1xf32>
    tpu.vector_store %arg8[%91, %c0_37], %90 {strides = array<i32>} : memref<64x1xf32, #tpu.memory_space<vmem>>, vector<8x1xf32>,
    %c2_i32 = arith.constant 2 : i32
    %c8_i32_38 = arith.constant 8 : i32
    %93 = arith.muli %c2_i32, %c8_i32_38 : i32
    %94 = tpu.assume_multiple %93, 8 : i32
    %95 = arith.truncf %84 : vector<8x128xf32> to vector<8x128xbf16>
    %c0_39 = arith.constant 0 : index
    %c0_40 = arith.constant 0 : index
    %96 = vector.load %arg2[%c0_39, %c0_40] : memref<128x512xbf16, #tpu.memory_space<vmem>>, vector<128x512xbf16>
    %cst_41 = arith.constant dense<0.000000e+00> : vector<8x512xf32>
    %97 = tpu.matmul %95, %96, %cst_41 {dimension_numbers = #tpu.dot_dimension_numbers<[1], [0], [0], [1], [0, 0, 1, 1], [], []>} : vector<8x128xbf16>, vector<128x512xbf16>, vector<8x512xf32> -> vector<8x512xf32>
    %98 = arith.index_cast %94 : i32 to index
    %c0_42 = arith.constant 0 : index
    %99 = vector.load %arg11[%98, %c0_42] : memref<64x512xf32, #tpu.memory_space<vmem>>, vector<8x512xf32>
    %100 = arith.addf %97, %99 : vector<8x512xf32>
    %101 = vector.extract_strided_slice %100 {offsets = [0, 0], sizes = [8, 256], strides = [1, 1]} : vector<8x512xf32> to vector<8x256xf32>
    %102 = arith.negf %101 : vector<8x256xf32>
    %103 = math.exp %102 : vector<8x256xf32>
    %cst_43 = arith.constant 1.000000e+00 : f32
    %104 = vector.broadcast %cst_43 : f32 to vector<8x256xf32>
    %105 = arith.addf %104, %103 : vector<8x256xf32>
    %106 = arith.divf %104, %105 : vector<8x256xf32>
    %107 = vector.extract_strided_slice %106 {offsets = [0, 0], sizes = [8, 128], strides = [1, 1]} : vector<8x256xf32> to vector<8x128xf32>
    %108 = vector.extract_strided_slice %106 {offsets = [0, 128], sizes = [8, 128], strides = [1, 1]} : vector<8x256xf32> to vector<8x128xf32>
    %109 = vector.extract_strided_slice %100 {offsets = [0, 256], sizes = [8, 128], strides = [1, 1]} : vector<8x512xf32> to vector<8x128xf32>
    %110 = math.tanh %109 : vector<8x128xf32>
    %111 = vector.extract_strided_slice %100 {offsets = [0, 384], sizes = [8, 128], strides = [1, 1]} : vector<8x512xf32> to vector<8x128xf32>
    %112 = arith.negf %111 : vector<8x128xf32>
    %113 = math.exp %112 : vector<8x128xf32>
    %cst_44 = arith.constant 1.000000e+00 : f32
    %114 = vector.broadcast %cst_44 : f32 to vector<8x128xf32>
    %115 = arith.addf %114, %113 : vector<8x128xf32>
    %116 = arith.divf %114, %115 : vector<8x128xf32>
    %117 = arith.mulf %108, %82 : vector<8x128xf32>
    %118 = arith.mulf %107, %110 : vector<8x128xf32>
    %119 = arith.addf %117, %118 : vector<8x128xf32>
    %120 = math.tanh %119 : vector<8x128xf32>
    %121 = arith.mulf %116, %120 : vector<8x128xf32>
    %122 = vector.broadcast %17 : vector<1x128xf32> to vector<8x128xf32>
    %123 = arith.mulf %121, %122 : vector<8x128xf32>
    %cst_45 = arith.constant dense<0.000000e+00> : vector<8xf32>
    %124 = vector.multi_reduction <add>, %123, %cst_45 [1] : vector<8x128xf32> to vector<8xf32>
    %125 = vector.shape_cast %124 : vector<8xf32> to vector<8x1xf32>
    %126 = vector.broadcast %18 : vector<1x1xf32> to vector<8x1xf32>
    %127 = arith.addf %125, %126 : vector<8x1xf32>
    %128 = arith.index_cast %94 : i32 to index
    %c0_46 = arith.constant 0 : index
    %129 = vector.load %arg8[%128, %c0_46] : memref<64x1xf32, #tpu.memory_space<vmem>>, vector<8x1xf32>
    tpu.vector_store %arg8[%128, %c0_46], %127 {strides = array<i32>} : memref<64x1xf32, #tpu.memory_space<vmem>>, vector<8x1xf32>,
    %c3_i32 = arith.constant 3 : i32
    %c8_i32_47 = arith.constant 8 : i32
    %130 = arith.muli %c3_i32, %c8_i32_47 : i32
    %131 = tpu.assume_multiple %130, 8 : i32
    %132 = arith.truncf %121 : vector<8x128xf32> to vector<8x128xbf16>
    %c0_48 = arith.constant 0 : index
    %c0_49 = arith.constant 0 : index
    %133 = vector.load %arg2[%c0_48, %c0_49] : memref<128x512xbf16, #tpu.memory_space<vmem>>, vector<128x512xbf16>
    %cst_50 = arith.constant dense<0.000000e+00> : vector<8x512xf32>
    %134 = tpu.matmul %132, %133, %cst_50 {dimension_numbers = #tpu.dot_dimension_numbers<[1], [0], [0], [1], [0, 0, 1, 1], [], []>} : vector<8x128xbf16>, vector<128x512xbf16>, vector<8x512xf32> -> vector<8x512xf32>
    %135 = arith.index_cast %131 : i32 to index
    %c0_51 = arith.constant 0 : index
    %136 = vector.load %arg11[%135, %c0_51] : memref<64x512xf32, #tpu.memory_space<vmem>>, vector<8x512xf32>
    %137 = arith.addf %134, %136 : vector<8x512xf32>
    %138 = vector.extract_strided_slice %137 {offsets = [0, 0], sizes = [8, 256], strides = [1, 1]} : vector<8x512xf32> to vector<8x256xf32>
    %139 = arith.negf %138 : vector<8x256xf32>
    %140 = math.exp %139 : vector<8x256xf32>
    %cst_52 = arith.constant 1.000000e+00 : f32
    %141 = vector.broadcast %cst_52 : f32 to vector<8x256xf32>
    %142 = arith.addf %141, %140 : vector<8x256xf32>
    %143 = arith.divf %141, %142 : vector<8x256xf32>
    %144 = vector.extract_strided_slice %143 {offsets = [0, 0], sizes = [8, 128], strides = [1, 1]} : vector<8x256xf32> to vector<8x128xf32>
    %145 = vector.extract_strided_slice %143 {offsets = [0, 128], sizes = [8, 128], strides = [1, 1]} : vector<8x256xf32> to vector<8x128xf32>
    %146 = vector.extract_strided_slice %137 {offsets = [0, 256], sizes = [8, 128], strides = [1, 1]} : vector<8x512xf32> to vector<8x128xf32>
    %147 = math.tanh %146 : vector<8x128xf32>
    %148 = vector.extract_strided_slice %137 {offsets = [0, 384], sizes = [8, 128], strides = [1, 1]} : vector<8x512xf32> to vector<8x128xf32>
    %149 = arith.negf %148 : vector<8x128xf32>
    %150 = math.exp %149 : vector<8x128xf32>
    %cst_53 = arith.constant 1.000000e+00 : f32
    %151 = vector.broadcast %cst_53 : f32 to vector<8x128xf32>
    %152 = arith.addf %151, %150 : vector<8x128xf32>
    %153 = arith.divf %151, %152 : vector<8x128xf32>
    %154 = arith.mulf %145, %119 : vector<8x128xf32>
    %155 = arith.mulf %144, %147 : vector<8x128xf32>
    %156 = arith.addf %154, %155 : vector<8x128xf32>
    %157 = math.tanh %156 : vector<8x128xf32>
    %158 = arith.mulf %153, %157 : vector<8x128xf32>
    %159 = vector.broadcast %17 : vector<1x128xf32> to vector<8x128xf32>
    %160 = arith.mulf %158, %159 : vector<8x128xf32>
    %cst_54 = arith.constant dense<0.000000e+00> : vector<8xf32>
    %161 = vector.multi_reduction <add>, %160, %cst_54 [1] : vector<8x128xf32> to vector<8xf32>
    %162 = vector.shape_cast %161 : vector<8xf32> to vector<8x1xf32>
    %163 = vector.broadcast %18 : vector<1x1xf32> to vector<8x1xf32>
    %164 = arith.addf %162, %163 : vector<8x1xf32>
    %165 = arith.index_cast %131 : i32 to index
    %c0_55 = arith.constant 0 : index
    %166 = vector.load %arg8[%165, %c0_55] : memref<64x1xf32, #tpu.memory_space<vmem>>, vector<8x1xf32>
    tpu.vector_store %arg8[%165, %c0_55], %164 {strides = array<i32>} : memref<64x1xf32, #tpu.memory_space<vmem>>, vector<8x1xf32>,
    %c4_i32 = arith.constant 4 : i32
    %c8_i32_56 = arith.constant 8 : i32
    %167 = arith.muli %c4_i32, %c8_i32_56 : i32
    %168 = tpu.assume_multiple %167, 8 : i32
    %169 = arith.truncf %158 : vector<8x128xf32> to vector<8x128xbf16>
    %c0_57 = arith.constant 0 : index
    %c0_58 = arith.constant 0 : index
    %170 = vector.load %arg2[%c0_57, %c0_58] : memref<128x512xbf16, #tpu.memory_space<vmem>>, vector<128x512xbf16>
    %cst_59 = arith.constant dense<0.000000e+00> : vector<8x512xf32>
    %171 = tpu.matmul %169, %170, %cst_59 {dimension_numbers = #tpu.dot_dimension_numbers<[1], [0], [0], [1], [0, 0, 1, 1], [], []>} : vector<8x128xbf16>, vector<128x512xbf16>, vector<8x512xf32> -> vector<8x512xf32>
    %172 = arith.index_cast %168 : i32 to index
    %c0_60 = arith.constant 0 : index
    %173 = vector.load %arg11[%172, %c0_60] : memref<64x512xf32, #tpu.memory_space<vmem>>, vector<8x512xf32>
    %174 = arith.addf %171, %173 : vector<8x512xf32>
    %175 = vector.extract_strided_slice %174 {offsets = [0, 0], sizes = [8, 256], strides = [1, 1]} : vector<8x512xf32> to vector<8x256xf32>
    %176 = arith.negf %175 : vector<8x256xf32>
    %177 = math.exp %176 : vector<8x256xf32>
    %cst_61 = arith.constant 1.000000e+00 : f32
    %178 = vector.broadcast %cst_61 : f32 to vector<8x256xf32>
    %179 = arith.addf %178, %177 : vector<8x256xf32>
    %180 = arith.divf %178, %179 : vector<8x256xf32>
    %181 = vector.extract_strided_slice %180 {offsets = [0, 0], sizes = [8, 128], strides = [1, 1]} : vector<8x256xf32> to vector<8x128xf32>
    %182 = vector.extract_strided_slice %180 {offsets = [0, 128], sizes = [8, 128], strides = [1, 1]} : vector<8x256xf32> to vector<8x128xf32>
    %183 = vector.extract_strided_slice %174 {offsets = [0, 256], sizes = [8, 128], strides = [1, 1]} : vector<8x512xf32> to vector<8x128xf32>
    %184 = math.tanh %183 : vector<8x128xf32>
    %185 = vector.extract_strided_slice %174 {offsets = [0, 384], sizes = [8, 128], strides = [1, 1]} : vector<8x512xf32> to vector<8x128xf32>
    %186 = arith.negf %185 : vector<8x128xf32>
    %187 = math.exp %186 : vector<8x128xf32>
    %cst_62 = arith.constant 1.000000e+00 : f32
    %188 = vector.broadcast %cst_62 : f32 to vector<8x128xf32>
    %189 = arith.addf %188, %187 : vector<8x128xf32>
    %190 = arith.divf %188, %189 : vector<8x128xf32>
    %191 = arith.mulf %182, %156 : vector<8x128xf32>
    %192 = arith.mulf %181, %184 : vector<8x128xf32>
    %193 = arith.addf %191, %192 : vector<8x128xf32>
    %194 = math.tanh %193 : vector<8x128xf32>
    %195 = arith.mulf %190, %194 : vector<8x128xf32>
    %196 = vector.broadcast %17 : vector<1x128xf32> to vector<8x128xf32>
    %197 = arith.mulf %195, %196 : vector<8x128xf32>
    %cst_63 = arith.constant dense<0.000000e+00> : vector<8xf32>
    %198 = vector.multi_reduction <add>, %197, %cst_63 [1] : vector<8x128xf32> to vector<8xf32>
    %199 = vector.shape_cast %198 : vector<8xf32> to vector<8x1xf32>
    %200 = vector.broadcast %18 : vector<1x1xf32> to vector<8x1xf32>
    %201 = arith.addf %199, %200 : vector<8x1xf32>
    %202 = arith.index_cast %168 : i32 to index
    %c0_64 = arith.constant 0 : index
    %203 = vector.load %arg8[%202, %c0_64] : memref<64x1xf32, #tpu.memory_space<vmem>>, vector<8x1xf32>
    tpu.vector_store %arg8[%202, %c0_64], %201 {strides = array<i32>} : memref<64x1xf32, #tpu.memory_space<vmem>>, vector<8x1xf32>,
    %c5_i32 = arith.constant 5 : i32
    %c8_i32_65 = arith.constant 8 : i32
    %204 = arith.muli %c5_i32, %c8_i32_65 : i32
    %205 = tpu.assume_multiple %204, 8 : i32
    %206 = arith.truncf %195 : vector<8x128xf32> to vector<8x128xbf16>
    %c0_66 = arith.constant 0 : index
    %c0_67 = arith.constant 0 : index
    %207 = vector.load %arg2[%c0_66, %c0_67] : memref<128x512xbf16, #tpu.memory_space<vmem>>, vector<128x512xbf16>
    %cst_68 = arith.constant dense<0.000000e+00> : vector<8x512xf32>
    %208 = tpu.matmul %206, %207, %cst_68 {dimension_numbers = #tpu.dot_dimension_numbers<[1], [0], [0], [1], [0, 0, 1, 1], [], []>} : vector<8x128xbf16>, vector<128x512xbf16>, vector<8x512xf32> -> vector<8x512xf32>
    %209 = arith.index_cast %205 : i32 to index
    %c0_69 = arith.constant 0 : index
    %210 = vector.load %arg11[%209, %c0_69] : memref<64x512xf32, #tpu.memory_space<vmem>>, vector<8x512xf32>
    %211 = arith.addf %208, %210 : vector<8x512xf32>
    %212 = vector.extract_strided_slice %211 {offsets = [0, 0], sizes = [8, 256], strides = [1, 1]} : vector<8x512xf32> to vector<8x256xf32>
    %213 = arith.negf %212 : vector<8x256xf32>
    %214 = math.exp %213 : vector<8x256xf32>
    %cst_70 = arith.constant 1.000000e+00 : f32
    %215 = vector.broadcast %cst_70 : f32 to vector<8x256xf32>
    %216 = arith.addf %215, %214 : vector<8x256xf32>
    %217 = arith.divf %215, %216 : vector<8x256xf32>
    %218 = vector.extract_strided_slice %217 {offsets = [0, 0], sizes = [8, 128], strides = [1, 1]} : vector<8x256xf32> to vector<8x128xf32>
    %219 = vector.extract_strided_slice %217 {offsets = [0, 128], sizes = [8, 128], strides = [1, 1]} : vector<8x256xf32> to vector<8x128xf32>
    %220 = vector.extract_strided_slice %211 {offsets = [0, 256], sizes = [8, 128], strides = [1, 1]} : vector<8x512xf32> to vector<8x128xf32>
    %221 = math.tanh %220 : vector<8x128xf32>
    %222 = vector.extract_strided_slice %211 {offsets = [0, 384], sizes = [8, 128], strides = [1, 1]} : vector<8x512xf32> to vector<8x128xf32>
    %223 = arith.negf %222 : vector<8x128xf32>
    %224 = math.exp %223 : vector<8x128xf32>
    %cst_71 = arith.constant 1.000000e+00 : f32
    %225 = vector.broadcast %cst_71 : f32 to vector<8x128xf32>
    %226 = arith.addf %225, %224 : vector<8x128xf32>
    %227 = arith.divf %225, %226 : vector<8x128xf32>
    %228 = arith.mulf %219, %193 : vector<8x128xf32>
    %229 = arith.mulf %218, %221 : vector<8x128xf32>
    %230 = arith.addf %228, %229 : vector<8x128xf32>
    %231 = math.tanh %230 : vector<8x128xf32>
    %232 = arith.mulf %227, %231 : vector<8x128xf32>
    %233 = vector.broadcast %17 : vector<1x128xf32> to vector<8x128xf32>
    %234 = arith.mulf %232, %233 : vector<8x128xf32>
    %cst_72 = arith.constant dense<0.000000e+00> : vector<8xf32>
    %235 = vector.multi_reduction <add>, %234, %cst_72 [1] : vector<8x128xf32> to vector<8xf32>
    %236 = vector.shape_cast %235 : vector<8xf32> to vector<8x1xf32>
    %237 = vector.broadcast %18 : vector<1x1xf32> to vector<8x1xf32>
    %238 = arith.addf %236, %237 : vector<8x1xf32>
    %239 = arith.index_cast %205 : i32 to index
    %c0_73 = arith.constant 0 : index
    %240 = vector.load %arg8[%239, %c0_73] : memref<64x1xf32, #tpu.memory_space<vmem>>, vector<8x1xf32>
    tpu.vector_store %arg8[%239, %c0_73], %238 {strides = array<i32>} : memref<64x1xf32, #tpu.memory_space<vmem>>, vector<8x1xf32>,
    %c6_i32 = arith.constant 6 : i32
    %c8_i32_74 = arith.constant 8 : i32
    %241 = arith.muli %c6_i32, %c8_i32_74 : i32
    %242 = tpu.assume_multiple %241, 8 : i32
    %243 = arith.truncf %232 : vector<8x128xf32> to vector<8x128xbf16>
    %c0_75 = arith.constant 0 : index
    %c0_76 = arith.constant 0 : index
    %244 = vector.load %arg2[%c0_75, %c0_76] : memref<128x512xbf16, #tpu.memory_space<vmem>>, vector<128x512xbf16>
    %cst_77 = arith.constant dense<0.000000e+00> : vector<8x512xf32>
    %245 = tpu.matmul %243, %244, %cst_77 {dimension_numbers = #tpu.dot_dimension_numbers<[1], [0], [0], [1], [0, 0, 1, 1], [], []>} : vector<8x128xbf16>, vector<128x512xbf16>, vector<8x512xf32> -> vector<8x512xf32>
    %246 = arith.index_cast %242 : i32 to index
    %c0_78 = arith.constant 0 : index
    %247 = vector.load %arg11[%246, %c0_78] : memref<64x512xf32, #tpu.memory_space<vmem>>, vector<8x512xf32>
    %248 = arith.addf %245, %247 : vector<8x512xf32>
    %249 = vector.extract_strided_slice %248 {offsets = [0, 0], sizes = [8, 256], strides = [1, 1]} : vector<8x512xf32> to vector<8x256xf32>
    %250 = arith.negf %249 : vector<8x256xf32>
    %251 = math.exp %250 : vector<8x256xf32>
    %cst_79 = arith.constant 1.000000e+00 : f32
    %252 = vector.broadcast %cst_79 : f32 to vector<8x256xf32>
    %253 = arith.addf %252, %251 : vector<8x256xf32>
    %254 = arith.divf %252, %253 : vector<8x256xf32>
    %255 = vector.extract_strided_slice %254 {offsets = [0, 0], sizes = [8, 128], strides = [1, 1]} : vector<8x256xf32> to vector<8x128xf32>
    %256 = vector.extract_strided_slice %254 {offsets = [0, 128], sizes = [8, 128], strides = [1, 1]} : vector<8x256xf32> to vector<8x128xf32>
    %257 = vector.extract_strided_slice %248 {offsets = [0, 256], sizes = [8, 128], strides = [1, 1]} : vector<8x512xf32> to vector<8x128xf32>
    %258 = math.tanh %257 : vector<8x128xf32>
    %259 = vector.extract_strided_slice %248 {offsets = [0, 384], sizes = [8, 128], strides = [1, 1]} : vector<8x512xf32> to vector<8x128xf32>
    %260 = arith.negf %259 : vector<8x128xf32>
    %261 = math.exp %260 : vector<8x128xf32>
    %cst_80 = arith.constant 1.000000e+00 : f32
    %262 = vector.broadcast %cst_80 : f32 to vector<8x128xf32>
    %263 = arith.addf %262, %261 : vector<8x128xf32>
    %264 = arith.divf %262, %263 : vector<8x128xf32>
    %265 = arith.mulf %256, %230 : vector<8x128xf32>
    %266 = arith.mulf %255, %258 : vector<8x128xf32>
    %267 = arith.addf %265, %266 : vector<8x128xf32>
    %268 = math.tanh %267 : vector<8x128xf32>
    %269 = arith.mulf %264, %268 : vector<8x128xf32>
    %270 = vector.broadcast %17 : vector<1x128xf32> to vector<8x128xf32>
    %271 = arith.mulf %269, %270 : vector<8x128xf32>
    %cst_81 = arith.constant dense<0.000000e+00> : vector<8xf32>
    %272 = vector.multi_reduction <add>, %271, %cst_81 [1] : vector<8x128xf32> to vector<8xf32>
    %273 = vector.shape_cast %272 : vector<8xf32> to vector<8x1xf32>
    %274 = vector.broadcast %18 : vector<1x1xf32> to vector<8x1xf32>
    %275 = arith.addf %273, %274 : vector<8x1xf32>
    %276 = arith.index_cast %242 : i32 to index
    %c0_82 = arith.constant 0 : index
    %277 = vector.load %arg8[%276, %c0_82] : memref<64x1xf32, #tpu.memory_space<vmem>>, vector<8x1xf32>
    tpu.vector_store %arg8[%276, %c0_82], %275 {strides = array<i32>} : memref<64x1xf32, #tpu.memory_space<vmem>>, vector<8x1xf32>,
    %c7_i32 = arith.constant 7 : i32
    %c8_i32_83 = arith.constant 8 : i32
    %278 = arith.muli %c7_i32, %c8_i32_83 : i32
    %279 = tpu.assume_multiple %278, 8 : i32
    %280 = arith.truncf %269 : vector<8x128xf32> to vector<8x128xbf16>
    %c0_84 = arith.constant 0 : index
    %c0_85 = arith.constant 0 : index
    %281 = vector.load %arg2[%c0_84, %c0_85] : memref<128x512xbf16, #tpu.memory_space<vmem>>, vector<128x512xbf16>
    %cst_86 = arith.constant dense<0.000000e+00> : vector<8x512xf32>
    %282 = tpu.matmul %280, %281, %cst_86 {dimension_numbers = #tpu.dot_dimension_numbers<[1], [0], [0], [1], [0, 0, 1, 1], [], []>} : vector<8x128xbf16>, vector<128x512xbf16>, vector<8x512xf32> -> vector<8x512xf32>
    %283 = arith.index_cast %279 : i32 to index
    %c0_87 = arith.constant 0 : index
    %284 = vector.load %arg11[%283, %c0_87] : memref<64x512xf32, #tpu.memory_space<vmem>>, vector<8x512xf32>
    %285 = arith.addf %282, %284 : vector<8x512xf32>
    %286 = vector.extract_strided_slice %285 {offsets = [0, 0], sizes = [8, 256], strides = [1, 1]} : vector<8x512xf32> to vector<8x256xf32>
    %287 = arith.negf %286 : vector<8x256xf32>
    %288 = math.exp %287 : vector<8x256xf32>
    %cst_88 = arith.constant 1.000000e+00 : f32
    %289 = vector.broadcast %cst_88 : f32 to vector<8x256xf32>
    %290 = arith.addf %289, %288 : vector<8x256xf32>
    %291 = arith.divf %289, %290 : vector<8x256xf32>
    %292 = vector.extract_strided_slice %291 {offsets = [0, 0], sizes = [8, 128], strides = [1, 1]} : vector<8x256xf32> to vector<8x128xf32>
    %293 = vector.extract_strided_slice %291 {offsets = [0, 128], sizes = [8, 128], strides = [1, 1]} : vector<8x256xf32> to vector<8x128xf32>
    %294 = vector.extract_strided_slice %285 {offsets = [0, 256], sizes = [8, 128], strides = [1, 1]} : vector<8x512xf32> to vector<8x128xf32>
    %295 = math.tanh %294 : vector<8x128xf32>
    %296 = vector.extract_strided_slice %285 {offsets = [0, 384], sizes = [8, 128], strides = [1, 1]} : vector<8x512xf32> to vector<8x128xf32>
    %297 = arith.negf %296 : vector<8x128xf32>
    %298 = math.exp %297 : vector<8x128xf32>
    %cst_89 = arith.constant 1.000000e+00 : f32
    %299 = vector.broadcast %cst_89 : f32 to vector<8x128xf32>
    %300 = arith.addf %299, %298 : vector<8x128xf32>
    %301 = arith.divf %299, %300 : vector<8x128xf32>
    %302 = arith.mulf %293, %267 : vector<8x128xf32>
    %303 = arith.mulf %292, %295 : vector<8x128xf32>
    %304 = arith.addf %302, %303 : vector<8x128xf32>
    %305 = math.tanh %304 : vector<8x128xf32>
    %306 = arith.mulf %301, %305 : vector<8x128xf32>
    %307 = vector.broadcast %17 : vector<1x128xf32> to vector<8x128xf32>
    %308 = arith.mulf %306, %307 : vector<8x128xf32>
    %cst_90 = arith.constant dense<0.000000e+00> : vector<8xf32>
    %309 = vector.multi_reduction <add>, %308, %cst_90 [1] : vector<8x128xf32> to vector<8xf32>
    %310 = vector.shape_cast %309 : vector<8xf32> to vector<8x1xf32>
    %311 = vector.broadcast %18 : vector<1x1xf32> to vector<8x1xf32>
    %312 = arith.addf %310, %311 : vector<8x1xf32>
    %313 = arith.index_cast %279 : i32 to index
    %c0_91 = arith.constant 0 : index
    %314 = vector.load %arg8[%313, %c0_91] : memref<64x1xf32, #tpu.memory_space<vmem>>, vector<8x1xf32>
    tpu.vector_store %arg8[%313, %c0_91], %312 {strides = array<i32>} : memref<64x1xf32, #tpu.memory_space<vmem>>, vector<8x1xf32>,
    %c8_i32_92 = arith.constant 8 : i32
    %c0_93 = arith.constant 0 : index
    %c0_94 = arith.constant 0 : index
    %315 = vector.load %arg9[%c0_93, %c0_94] : memref<8x128xf32, #tpu.memory_space<vmem>>, vector<8x128xf32>
    tpu.vector_store %arg9[%c0_93, %c0_94], %306 {strides = array<i32>} : memref<8x128xf32, #tpu.memory_space<vmem>>, vector<8x128xf32>,
    %c0_95 = arith.constant 0 : index
    %c0_96 = arith.constant 0 : index
    %316 = vector.load %arg10[%c0_95, %c0_96] : memref<8x128xf32, #tpu.memory_space<vmem>>, vector<8x128xf32>
    tpu.vector_store %arg10[%c0_95, %c0_96], %304 {strides = array<i32>} : memref<8x128xf32, #tpu.memory_space<vmem>>, vector<8x128xf32>,
    return
  }
}

</mosaic_0001>

<llo_original>
// kernel: tpu_custom_call.1
$region0: #{tpu_custom_call.1}
  #allocation0 [shape = 'u32[]', space=smem, size = 0x4, offset = 0x4, fixed_abs, tag = 'smem constant byte address 0x4 - core index']
  #allocation1 [shape = 'u32[144,128]{1,0:T(1,128)}', space=vmem, size = 0x12000, scoped, tag = 'internal scratch']
  #allocation2 [shape = 'f32[64,512]{1,0:T(8,128)}', space=vmem, size = 0x20000, scoped, tag = 'scratch operand']
  #allocation3 [shape = 'f32[1,1]{1,0:T(1,128)S(1)}', space=vmem, size = 0x200, scoped, tag = 'scoped memory for tpu_custom_call.1']
  %s0 = inlined_call_operand.vmem [shape: f32[64,32], index: 0, kind: input, shape index: {}]
  %s1 = inlined_call_operand.vmem [shape: bf16[32,512], index: 1, kind: input, shape index: {}]
  %s2 = inlined_call_operand.hbm [shape: bf16[128,512], index: 2, kind: input, shape index: {}]
  %s3 = inlined_call_operand.vmem [shape: f32[1,512], index: 3, kind: input, shape index: {}]
  %s4 = inlined_call_operand.vmem [shape: f32[8,128], index: 4, kind: input, shape index: {}]
  %s5 = inlined_call_operand.vmem [shape: f32[8,128], index: 5, kind: input, shape index: {}]
  %s6 = inlined_call_operand.vmem [shape: f32[1,128], index: 6, kind: input, shape index: {}]
  %s7 = inlined_call_operand.<no memory space> [shape: f32[1,1], index: 7, kind: input, shape index: {}]
  %s8 = inlined_call_operand.vmem [shape: f32[64,1], index: 8, kind: output, shape index: {0}]
  %s9 = inlined_call_operand.hbm [shape: f32[8,128], index: 9, kind: output, shape index: {1}]
  %s10 = inlined_call_operand.hbm [shape: f32[8,128], index: 10, kind: output, shape index: {2}]
  %11 = xla_tuple %s8, %s9, %s10
  %s12 = sld [smem:[#allocation0]]
  $region62: #{tpu_custom_call.1} parent=0
    _
  %s14 = ssub.s32 1, %s12
  %s15 = scalar_select 0, %s14, %s12
  %v16 = vstv %s7
  %17 = vst [vmem:[#allocation3] sm:$0x1] %v16
  $region1: #{tpu_custom_call.1} parent=0
    #allocation4 [shape = 'u8[131072]{0}', space=vmem, size = 0x20000, scoped, tag = 'input window, operand 2, single buffered']
    #allocation5 [shape = 's32[1]{0}', space=sflag, size = 0x4, scoped, tag = 'scoped memory for tpu_custom_call.1']
    #allocation6 [shape = 's32[1]{0}', space=sflag, size = 0x4, scoped, tag = 'scoped memory for tpu_custom_call.1']
    #allocation7 [shape = 'u8[4096]{0}', space=vmem, size = 0x1000, scoped, tag = 'output window, operand 1, single buffered']
    #allocation8 [shape = 'u8[4096]{0}', space=vmem, size = 0x1000, scoped, tag = 'output window, operand 2, single buffered']
    #allocation9 [shape = 's32[1]{0}', space=sflag, size = 0x4, scoped, tag = 'scoped memory for tpu_custom_call.1']
    %18 = vsyncpa [#allocation5], 0
    %19 = vsyncpa [#allocation6], 0
    %20 = vsyncpa [#allocation9], 0
    // Predicated region
    $region2: #{tpu_custom_call.1} parent=1 // pred_check
      _
    $region3: #{tpu_custom_call.1} parent=1 // pred_check_branch
      %22 = sbr.rel (0) target = $region5
    $region4: #{tpu_custom_call.1} parent=1 // pred_region
      _
    $region5: #{tpu_custom_call.1} parent=1 // pred_fallthru
      _
    // Predicated region
    $region6: #{tpu_custom_call.1} parent=1 // pred_check
      _
    $region7: #{tpu_custom_call.1} parent=1 // pred_check_branch
      %24 = sbr.rel (0) target = $region9
    $region8: #{tpu_custom_call.1} parent=1 // pred_region
      _
    $region9: #{tpu_custom_call.1} parent=1 // pred_fallthru
      _
    // Predicated region
    $region10: #{tpu_custom_call.1} parent=1 // pred_check
      _
    $region11: #{tpu_custom_call.1} parent=1 // pred_check_branch
      %26 = sbr.rel (0) target = $region13
    $region12: #{tpu_custom_call.1} parent=1 // pred_region
      %s28 = ssub.s32 4096, 4096
      %29 = vsyncadd [#allocation5], %s28
      %s30 = sshll.u32 [#allocation4], 4
      %s31 = int_to_ptr.vmem [resolvable:$true] %s30
      %36 = dma.hbm_to_vmem [thread:$0]  %s2, 4096, %s31, [#allocation5], 256, 256, 16
    $region13: #{tpu_custom_call.1} parent=1 // pred_fallthru
      _
    // Predicated region
    $region14: #{tpu_custom_call.1} parent=1 // pred_check
      _
    $region15: #{tpu_custom_call.1} parent=1 // pred_check_branch
      %38 = sbr.rel (0) target = $region17
    $region16: #{tpu_custom_call.1} parent=1 // pred_region
      _
    $region17: #{tpu_custom_call.1} parent=1 // pred_fallthru
      _
    // Predicated region
    $region18: #{tpu_custom_call.1} parent=1 // pred_check
      _
    $region19: #{tpu_custom_call.1} parent=1 // pred_check_branch
      %40 = sbr.rel (0) target = $region21
    $region20: #{tpu_custom_call.1} parent=1 // pred_region
      _
    $region21: #{tpu_custom_call.1} parent=1 // pred_fallthru
      _
    // Predicated region
    $region22: #{tpu_custom_call.1} parent=1 // pred_check
      _
    $region23: #{tpu_custom_call.1} parent=1 // pred_check_branch
      %42 = sbr.rel (0) target = $region25
    $region24: #{tpu_custom_call.1} parent=1 // pred_region
      _
    $region25: #{tpu_custom_call.1} parent=1 // pred_fallthru
      _
    // Predicated region
    $region26: #{tpu_custom_call.1} parent=1 // pred_check
      _
    $region27: #{tpu_custom_call.1} parent=1 // pred_check_branch
      %44 = sbr.rel (0) target = $region29
    $region28: #{tpu_custom_call.1} parent=1 // pred_region
      _
    $region29: #{tpu_custom_call.1} parent=1 // pred_fallthru
      _
    // Predicated region
    $region30: #{tpu_custom_call.1} parent=1 // pred_check
      _
    $region31: #{tpu_custom_call.1} parent=1 // pred_check_branch
      %46 = sbr.rel (0) target = $region33
    $region32: #{tpu_custom_call.1} parent=1 // pred_region
      _
    $region33: #{tpu_custom_call.1} parent=1 // pred_fallthru
      _
    // Predicated region
    $region34: #{tpu_custom_call.1} parent=1 // pred_check
      _
    $region35: #{tpu_custom_call.1} parent=1 // pred_check_branch
      %48 = sbr.rel (0) target = $region37
    $region36: #{tpu_custom_call.1} parent=1 // pred_region
      %49 = dma.done [#allocation5], 4096
    $region37: #{tpu_custom_call.1} parent=1 // pred_fallthru
      _
    %v51 = vld [vmem:[%s3] sm:$0xf]
    %v52 = vld [vmem:[%s0] sm:$0xff]
    %v53 = vpack.c.bf16 %v52, %v52
    %v54 = vld [vmem:[%s1] sm:$0xff]
    %v55 = vld [vmem:[%s1 + $0x8] sm:$0xff]
    %v56 = vld [vmem:[%s1 + $0x10] sm:$0xff]
    %v57 = vld [vmem:[%s1 + $0x18] sm:$0xff]
    %v58 = vld [vmem:[%s1 + $0x20] sm:$0xff]
    %v59 = vld [vmem:[%s1 + $0x28] sm:$0xff]
    %v60 = vld [vmem:[%s1 + $0x30] sm:$0xff]
    %v61 = vld [vmem:[%s1 + $0x38] sm:$0xff]
    %v63 = vlaneseq
    %v64 = vshrl.u32 %v63, 7
    %v65 = vsub.s32 0, %v64
    %v66 = vrot.slane %v51, %v65
    %v67 = vlaneseq
    %v68 = vshrl.u32 %v67, 7
    %v69 = vsub.s32 1, %v68
    %v70 = vrot.slane %v51, %v69
    %v71 = vlaneseq
    %v72 = vshrl.u32 %v71, 7
    %v73 = vsub.s32 2, %v72
    %v74 = vrot.slane %v51, %v73
    %v75 = vlaneseq
    %v76 = vshrl.u32 %v75, 7
    %v77 = vsub.s32 3, %v76
    %v78 = vrot.slane %v51, %v77
    %v91 = vunpack.c.l.b16 %v54
    %v92 = vunpack.c.h.b16 %v54
    %v93 = vunpack.c.l.b16 %v55
    %v94 = vunpack.c.h.b16 %v55
    %v95 = vunpack.c.l.b16 %v56
    %v96 = vunpack.c.h.b16 %v56
    %v97 = vunpack.c.l.b16 %v57
    %v98 = vunpack.c.h.b16 %v57
    %v99 = vunpack.c.l.b16 %v58
    %v100 = vunpack.c.h.b16 %v58
    %v101 = vunpack.c.l.b16 %v59
    %v102 = vunpack.c.h.b16 %v59
    %v103 = vunpack.c.l.b16 %v60
    %v104 = vunpack.c.h.b16 %v60
    %v105 = vunpack.c.l.b16 %v61
    %v106 = vunpack.c.h.b16 %v61
    %v107 = vpack.c.b16 %v95, %v91
    %v108 = vpack.c.b16 %v96, %v92
    %v109 = vpack.c.b16 %v97, %v93
    %v110 = vpack.c.b16 %v98, %v94
    %v111 = vpack.c.b16 %v103, %v99
    %v112 = vpack.c.b16 %v104, %v100
    %v113 = vpack.c.b16 %v105, %v101
    %v114 = vpack.c.b16 %v106, %v102
    %vm123 = vcmask 261120
    %v125 = vsel %vm123, %v53, 0
    %127 = vmatprep.subr.bf16.mxu0 0
    %128 = vmatpush1.bf16.msra.mxu0 0
    %129 = vmatprep.subr.bf16.mxu0 0
    %130 = vmatpush1.bf16.msra.mxu0 0
    %131 = vmatprep.subr.bf16.mxu0 0
    %132 = vmatpush1.bf16.msra.mxu0 0
    %133 = vmatprep.subr.bf16.mxu0 0
    %134 = vmatpush1.bf16.msra.mxu0 0
    %135 = vmatprep.subr.bf16.mxu0 0
    %136 = vmatpush1.bf16.msra.mxu0 0
    %137 = vmatprep.subr.bf16.mxu0 0
    %138 = vmatpush1.bf16.msra.mxu0 0
    %139 = vmatprep.subr.bf16.mxu0 %v112
    %140 = vmatpush1.bf16.msra.mxu0 %v111
    %141 = vmatprep.subr.bf16.mxu0 %v108
    %142 = vmatpush1.bf16.msra.mxu0 %v107
    %143 = vmatprep.subr.bf16.mxu0 0
    %144 = vmatpush2.bf16.msra.mxu0 0
    %145 = vmatprep.subr.bf16.mxu0 0
    %146 = vmatpush2.bf16.msra.mxu0 0
    %147 = vmatprep.subr.bf16.mxu0 0
    %148 = vmatpush2.bf16.msra.mxu0 0
    %149 = vmatprep.subr.bf16.mxu0 0
    %150 = vmatpush2.bf16.msra.mxu0 0
    %151 = vmatprep.subr.bf16.mxu0 0
    %152 = vmatpush2.bf16.msra.mxu0 0
    %153 = vmatprep.subr.bf16.mxu0 0
    %154 = vmatpush2.bf16.msra.mxu0 0
    %155 = vmatprep.subr.bf16.mxu0 0
    %156 = vmatpush2.bf16.msra.mxu0 0
    %157 = vmatprep.subr.bf16.mxu0 0
    %158 = vmatpush2.bf16.msra.mxu0 0
    %159 = vmatprep.mubr.bf16.mxu0 0
    %160 = vmatmul.mubr.bf16.gmra.mxu0 %v125
    %v161 = vpop.f32.mrf.mxu0
    %v162 = vadd.f32 %v66, %v161
    %v163 = vpop.f32.mrf.mxu0
    %v164 = vadd.f32 %v70, %v163
    %v165 = vpop.f32.mrf.mxu0
    %v166 = vpop.f32.mrf.mxu0
    %167 = vdwg.mxu0
    %168 = vmatprep.subr.bf16.mxu0 0
    %169 = vmatpush1.bf16.msra.mxu0 0
    %170 = vmatprep.subr.bf16.mxu0 0
    %171 = vmatpush1.bf16.msra.mxu0 0
    %172 = vmatprep.subr.bf16.mxu0 0
    %173 = vmatpush1.bf16.msra.mxu0 0
    %174 = vmatprep.subr.bf16.mxu0 0
    %175 = vmatpush1.bf16.msra.mxu0 0
    %176 = vmatprep.subr.bf16.mxu0 0
    %177 = vmatpush1.bf16.msra.mxu0 0
    %178 = vmatprep.subr.bf16.mxu0 0
    %179 = vmatpush1.bf16.msra.mxu0 0
    %180 = vmatprep.subr.bf16.mxu0 %v114
    %181 = vmatpush1.bf16.msra.mxu0 %v113
    %182 = vmatprep.subr.bf16.mxu0 %v110
    %183 = vmatpush1.bf16.msra.mxu0 %v109
    %184 = vmatprep.subr.bf16.mxu0 0
    %185 = vmatpush2.bf16.msra.mxu0 0
    %186 = vmatprep.subr.bf16.mxu0 0
    %187 = vmatpush2.bf16.msra.mxu0 0
    %188 = vmatprep.subr.bf16.mxu0 0
    %189 = vmatpush2.bf16.msra.mxu0 0
    %190 = vmatprep.subr.bf16.mxu0 0
    %191 = vmatpush2.bf16.msra.mxu0 0
    %192 = vmatprep.subr.bf16.mxu0 0
    %193 = vmatpush2.bf16.msra.mxu0 0
    %194 = vmatprep.subr.bf16.mxu0 0
    %195 = vmatpush2.bf16.msra.mxu0 0
    %196 = vmatprep.subr.bf16.mxu0 0
    %197 = vmatpush2.bf16.msra.mxu0 0
    %198 = vmatprep.subr.bf16.mxu0 0
    %199 = vmatpush2.bf16.msra.mxu0 0
    %200 = vmatprep.mubr.bf16.mxu0 0
    %201 = vmatmul.mubr.bf16.gmra.mxu0 %v125
    %v202 = vpop.f32.mrf.mxu0
    %v203 = vadd.f32 %v74, %v202
    %v204 = vpop.f32.mrf.mxu0
    %v205 = vadd.f32 %v78, %v204
    %v206 = vpop.f32.mrf.mxu0
    %v207 = vpop.f32.mrf.mxu0
    %208 = vdwg.mxu0
    %209 = vst [vmem:[#allocation2] sm:$0xff] %v162
    %210 = vst [vmem:[#allocation2 + $0x8] sm:$0xff] %v164
    %211 = vst [vmem:[#allocation2 + $0x10] sm:$0xff] %v203
    %212 = vst [vmem:[#allocation2 + $0x18] sm:$0xff] %v205
    %v213 = vld [vmem:[%s0 + $0x8] sm:$0xff]
    %v214 = vld [vmem:[%s0 + $0x10] sm:$0xff]
    %v215 = vld [vmem:[%s0 + $0x18] sm:$0xff]
    %v216 = vld [vmem:[%s0 + $0x20] sm:$0xff]
    %v217 = vld [vmem:[%s0 + $0x28] sm:$0xff]
    %v218 = vld [vmem:[%s0 + $0x30] sm:$0xff]
    %v219 = vld [vmem:[%s0 + $0x38] sm:$0xff]
    %v220 = vpack.c.bf16 %v214, %v213
    %v221 = vpack.c.bf16 %v216, %v215
    %v222 = vpack.c.bf16 %v218, %v217
    %v223 = vpack.c.bf16 %v219, %v219
    %v224 = vld [vmem:[%s1] sm:$0xff]
    %v225 = vld [vmem:[%s1 + $0x8] sm:$0xff]
    %v226 = vld [vmem:[%s1 + $0x10] sm:$0xff]
    %v227 = vld [vmem:[%s1 + $0x18] sm:$0xff]
    %v228 = vld [vmem:[%s1 + $0x20] sm:$0xff]
    %v229 = vld [vmem:[%s1 + $0x28] sm:$0xff]
    %v230 = vld [vmem:[%s1 + $0x30] sm:$0xff]
    %v231 = vld [vmem:[%s1 + $0x38] sm:$0xff]
    %v240 = vunpack.c.l.b16 %v224
    %v241 = vunpack.c.h.b16 %v224
    %v242 = vunpack.c.l.b16 %v225
    %v243 = vunpack.c.h.b16 %v225
    %v244 = vunpack.c.l.b16 %v226
    %v245 = vunpack.c.h.b16 %v226
    %v246 = vunpack.c.l.b16 %v227
    %v247 = vunpack.c.h.b16 %v227
    %v248 = vunpack.c.l.b16 %v228
    %v249 = vunpack.c.h.b16 %v228
    %v250 = vunpack.c.l.b16 %v229
    %v251 = vunpack.c.h.b16 %v229
    %v252 = vunpack.c.l.b16 %v230
    %v253 = vunpack.c.h.b16 %v230
    %v254 = vunpack.c.l.b16 %v231
    %v255 = vunpack.c.h.b16 %v231
    %v256 = vpack.c.b16 %v244, %v240
    %v257 = vpack.c.b16 %v245, %v241
    %v258 = vpack.c.b16 %v246, %v242
    %v259 = vpack.c.b16 %v247, %v243
    %v260 = vpack.c.b16 %v252, %v248
    %v261 = vpack.c.b16 %v253, %v249
    %v262 = vpack.c.b16 %v254, %v250
    %v263 = vpack.c.b16 %v255, %v251
    %v273 = vsel %vm123, %v220, 0
    %v276 = vsel %vm123, %v221, 0
    %v279 = vsel %vm123, %v222, 0
    %v282 = vsel %vm123, %v223, 0
    %284 = vmatprep.subr.bf16.mxu0 0
    %285 = vmatpush1.bf16.msra.mxu0 0
    %286 = vmatprep.subr.bf16.mxu0 0
    %287 = vmatpush1.bf16.msra.mxu0 0
    %288 = vmatprep.subr.bf16.mxu0 0
    %289 = vmatpush1.bf16.msra.mxu0 0
    %290 = vmatprep.subr.bf16.mxu0 0
    %291 = vmatpush1.bf16.msra.mxu0 0
    %292 = vmatprep.subr.bf16.mxu0 0
    %293 = vmatpush1.bf16.msra.mxu0 0
    %294 = vmatprep.subr.bf16.mxu0 0
    %295 = vmatpush1.bf16.msra.mxu0 0
    %296 = vmatprep.subr.bf16.mxu0 %v261
    %297 = vmatpush1.bf16.msra.mxu0 %v260
    %298 = vmatprep.subr.bf16.mxu0 %v257
    %299 = vmatpush1.bf16.msra.mxu0 %v256
    %300 = vmatprep.subr.bf16.mxu0 0
    %301 = vmatpush2.bf16.msra.mxu0 0
    %302 = vmatprep.subr.bf16.mxu0 0
    %303 = vmatpush2.bf16.msra.mxu0 0
    %304 = vmatprep.subr.bf16.mxu0 0
    %305 = vmatpush2.bf16.msra.mxu0 0
    %306 = vmatprep.subr.bf16.mxu0 0
    %307 = vmatpush2.bf16.msra.mxu0 0
    %308 = vmatprep.subr.bf16.mxu0 0
    %309 = vmatpush2.bf16.msra.mxu0 0
    %310 = vmatprep.subr.bf16.mxu0 0
    %311 = vmatpush2.bf16.msra.mxu0 0
    %312 = vmatprep.subr.bf16.mxu0 0
    %313 = vmatpush2.bf16.msra.mxu0 0
    %314 = vmatprep.subr.bf16.mxu0 0
    %315 = vmatpush2.bf16.msra.mxu0 0
    %316 = vmatprep.mubr.bf16.mxu0 0
    %317 = vmatmul.mubr.bf16.gmra.mxu0 %v273
    %v318 = vpop.f32.mrf.mxu0
    %v319 = vadd.f32 %v66, %v318
    %v320 = vpop.f32.mrf.mxu0
    %v321 = vadd.f32 %v70, %v320
    %v322 = vpop.f32.mrf.mxu0
    %v323 = vadd.f32 %v66, %v322
    %v324 = vpop.f32.mrf.mxu0
    %v325 = vadd.f32 %v70, %v324
    %326 = vmatprep.mubr.bf16.mxu0 0
    %327 = vmatmul.mubr.bf16.gmra.mxu0 %v276
    %v328 = vpop.f32.mrf.mxu0
    %v329 = vadd.f32 %v66, %v328
    %v330 = vpop.f32.mrf.mxu0
    %v331 = vadd.f32 %v70, %v330
    %v332 = vpop.f32.mrf.mxu0
    %v333 = vadd.f32 %v66, %v332
    %v334 = vpop.f32.mrf.mxu0
    %v335 = vadd.f32 %v70, %v334
    %336 = vmatprep.mubr.bf16.mxu0 0
    %337 = vmatmul.mubr.bf16.gmra.mxu0 %v279
    %v338 = vpop.f32.mrf.mxu0
    %v339 = vadd.f32 %v66, %v338
    %v340 = vpop.f32.mrf.mxu0
    %v341 = vadd.f32 %v70, %v340
    %v342 = vpop.f32.mrf.mxu0
    %v343 = vadd.f32 %v66, %v342
    %v344 = vpop.f32.mrf.mxu0
    %v345 = vadd.f32 %v70, %v344
    %346 = vmatprep.mubr.bf16.mxu0 0
    %347 = vmatmul.mubr.bf16.gmra.mxu0 %v282
    %v348 = vpop.f32.mrf.mxu0
    %v349 = vadd.f32 %v66, %v348
    %v350 = vpop.f32.mrf.mxu0
    %v351 = vadd.f32 %v70, %v350
    %v352 = vpop.f32.mrf.mxu0
    %v353 = vpop.f32.mrf.mxu0
    %354 = vdwg.mxu0
    %355 = vmatprep.subr.bf16.mxu0 0
    %356 = vmatpush1.bf16.msra.mxu0 0
    %357 = vmatprep.subr.bf16.mxu0 0
    %358 = vmatpush1.bf16.msra.mxu0 0
    %359 = vmatprep.subr.bf16.mxu0 0
    %360 = vmatpush1.bf16.msra.mxu0 0
    %361 = vmatprep.subr.bf16.mxu0 0
    %362 = vmatpush1.bf16.msra.mxu0 0
    %363 = vmatprep.subr.bf16.mxu0 0
    %364 = vmatpush1.bf16.msra.mxu0 0
    %365 = vmatprep.subr.bf16.mxu0 0
    %366 = vmatpush1.bf16.msra.mxu0 0
    %367 = vmatprep.subr.bf16.mxu0 %v263
    %368 = vmatpush1.bf16.msra.mxu0 %v262
    %369 = vmatprep.subr.bf16.mxu0 %v259
    %370 = vmatpush1.bf16.msra.mxu0 %v258
    %371 = vmatprep.subr.bf16.mxu0 0
    %372 = vmatpush2.bf16.msra.mxu0 0
    %373 = vmatprep.subr.bf16.mxu0 0
    %374 = vmatpush2.bf16.msra.mxu0 0
    %375 = vmatprep.subr.bf16.mxu0 0
    %376 = vmatpush2.bf16.msra.mxu0 0
    %377 = vmatprep.subr.bf16.mxu0 0
    %378 = vmatpush2.bf16.msra.mxu0 0
    %379 = vmatprep.subr.bf16.mxu0 0
    %380 = vmatpush2.bf16.msra.mxu0 0
    %381 = vmatprep.subr.bf16.mxu0 0
    %382 = vmatpush2.bf16.msra.mxu0 0
    %383 = vmatprep.subr.bf16.mxu0 0
    %384 = vmatpush2.bf16.msra.mxu0 0
    %385 = vmatprep.subr.bf16.mxu0 0
    %386 = vmatpush2.bf16.msra.mxu0 0
    %387 = vmatprep.mubr.bf16.mxu0 0
    %388 = vmatmul.mubr.bf16.gmra.mxu0 %v273
    %v389 = vpop.f32.mrf.mxu0
    %v390 = vadd.f32 %v74, %v389
    %v391 = vpop.f32.mrf.mxu0
    %v392 = vadd.f32 %v78, %v391
    %v393 = vpop.f32.mrf.mxu0
    %v394 = vadd.f32 %v74, %v393
    %v395 = vpop.f32.mrf.mxu0
    %v396 = vadd.f32 %v78, %v395
    %397 = vmatprep.mubr.bf16.mxu0 0
    %398 = vmatmul.mubr.bf16.gmra.mxu0 %v276
    %v399 = vpop.f32.mrf.mxu0
    %v400 = vadd.f32 %v74, %v399
    %v401 = vpop.f32.mrf.mxu0
    %v402 = vadd.f32 %v78, %v401
    %v403 = vpop.f32.mrf.mxu0
    %v404 = vadd.f32 %v74, %v403
    %v405 = vpop.f32.mrf.mxu0
    %v406 = vadd.f32 %v78, %v405
    %407 = vmatprep.mubr.bf16.mxu0 0
    %408 = vmatmul.mubr.bf16.gmra.mxu0 %v279
    %v409 = vpop.f32.mrf.mxu0
    %v410 = vadd.f32 %v74, %v409
    %v411 = vpop.f32.mrf.mxu0
    %v412 = vadd.f32 %v78, %v411
    %v413 = vpop.f32.mrf.mxu0
    %v414 = vadd.f32 %v74, %v413
    %v415 = vpop.f32.mrf.mxu0
    %v416 = vadd.f32 %v78, %v415
    %417 = vmatprep.mubr.bf16.mxu0 0
    %418 = vmatmul.mubr.bf16.gmra.mxu0 %v282
    %v419 = vpop.f32.mrf.mxu0
    %v420 = vadd.f32 %v74, %v419
    %v421 = vpop.f32.mrf.mxu0
    %v422 = vadd.f32 %v78, %v421
    %v423 = vpop.f32.mrf.mxu0
    %v424 = vpop.f32.mrf.mxu0
    %425 = vdwg.mxu0
    %426 = vst [vmem:[#allocation2 + $0x20] sm:$0xff] %v319
    %427 = vst [vmem:[#allocation2 + $0x28] sm:$0xff] %v321
    %428 = vst [vmem:[#allocation2 + $0x30] sm:$0xff] %v390
    %429 = vst [vmem:[#allocation2 + $0x38] sm:$0xff] %v392
    %430 = vst [vmem:[#allocation2 + $0x40] sm:$0xff] %v323
    %431 = vst [vmem:[#allocation2 + $0x48] sm:$0xff] %v325
    %432 = vst [vmem:[#allocation2 + $0x50] sm:$0xff] %v394
    %433 = vst [vmem:[#allocation2 + $0x58] sm:$0xff] %v396
    %434 = vst [vmem:[#allocation2 + $0x60] sm:$0xff] %v329
    %435 = vst [vmem:[#allocation2 + $0x68] sm:$0xff] %v331
    %436 = vst [vmem:[#allocation2 + $0x70] sm:$0xff] %v400
    %437 = vst [vmem:[#allocation2 + $0x78] sm:$0xff] %v402
    %438 = vst [vmem:[#allocation2 + $0x80] sm:$0xff] %v333
    %439 = vst [vmem:[#allocation2 + $0x88] sm:$0xff] %v335
    %440 = vst [vmem:[#allocation2 + $0x90] sm:$0xff] %v404
    %441 = vst [vmem:[#allocation2 + $0x98] sm:$0xff] %v406
    %442 = vst [vmem:[#allocation2 + $0xa0] sm:$0xff] %v339
    %443 = vst [vmem:[#allocation2 + $0xa8] sm:$0xff] %v341
    %444 = vst [vmem:[#allocation2 + $0xb0] sm:$0xff] %v410
    %445 = vst [vmem:[#allocation2 + $0xb8] sm:$0xff] %v412
    %446 = vst [vmem:[#allocation2 + $0xc0] sm:$0xff] %v343
    %447 = vst [vmem:[#allocation2 + $0xc8] sm:$0xff] %v345
    %448 = vst [vmem:[#allocation2 + $0xd0] sm:$0xff] %v414
    %449 = vst [vmem:[#allocation2 + $0xd8] sm:$0xff] %v416
    %450 = vst [vmem:[#allocation2 + $0xe0] sm:$0xff] %v349
    %451 = vst [vmem:[#allocation2 + $0xe8] sm:$0xff] %v351
    %452 = vst [vmem:[#allocation2 + $0xf0] sm:$0xff] %v420
    %453 = vst [vmem:[#allocation2 + $0xf8] sm:$0xff] %v422
    %v454 = vld [vmem:[%s4] sm:$0xff]
    %v455 = vld [vmem:[%s5] sm:$0xff]
    %v456 = vld [vmem:[%s6] sm:$0x1]
    %v457 = vld [vmem:[#allocation3] sm:$0x1]
    %v458 = vpack.c.bf16 %v454, %v454
    %v459 = vld [vmem:[#allocation4] sm:$0xff]
    %v460 = vld [vmem:[#allocation4 + $0x8] sm:$0xff]
    %v461 = vld [vmem:[#allocation4 + $0x10] sm:$0xff]
    %v462 = vld [vmem:[#allocation4 + $0x18] sm:$0xff]
    %v463 = vld [vmem:[#allocation4 + $0x20] sm:$0xff]
    %v464 = vld [vmem:[#allocation4 + $0x28] sm:$0xff]
    %v465 = vld [vmem:[#allocation4 + $0x30] sm:$0xff]
    %v466 = vld [vmem:[#allocation4 + $0x38] sm:$0xff]
    %v467 = vld [vmem:[#allocation4 + $0x40] sm:$0xff]
    %v468 = vld [vmem:[#allocation4 + $0x48] sm:$0xff]
    %v469 = vld [vmem:[#allocation4 + $0x50] sm:$0xff]
    %v470 = vld [vmem:[#allocation4 + $0x58] sm:$0xff]
    %v471 = vld [vmem:[#allocation4 + $0x60] sm:$0xff]
    %v472 = vld [vmem:[#allocation4 + $0x68] sm:$0xff]
    %v473 = vld [vmem:[#allocation4 + $0x70] sm:$0xff]
    %v474 = vld [vmem:[#allocation4 + $0x78] sm:$0xff]
    %v475 = vld [vmem:[#allocation4 + $0x80] sm:$0xff]
    %v476 = vld [vmem:[#allocation4 + $0x88] sm:$0xff]
    %v477 = vld [vmem:[#allocation4 + $0x90] sm:$0xff]
    %v478 = vld [vmem:[#allocation4 + $0x98] sm:$0xff]
    %v479 = vld [vmem:[#allocation4 + $0xa0] sm:$0xff]
    %v480 = vld [vmem:[#allocation4 + $0xa8] sm:$0xff]
    %v481 = vld [vmem:[#allocation4 + $0xb0] sm:$0xff]
    %v482 = vld [vmem:[#allocation4 + $0xb8] sm:$0xff]
    %v483 = vld [vmem:[#allocation4 + $0xc0] sm:$0xff]
    %v484 = vld [vmem:[#allocation4 + $0xc8] sm:$0xff]
    %v485 = vld [vmem:[#allocation4 + $0xd0] sm:$0xff]
    %v486 = vld [vmem:[#allocation4 + $0xd8] sm:$0xff]
    %v487 = vld [vmem:[#allocation4 + $0xe0] sm:$0xff]
    %v488 = vld [vmem:[#allocation4 + $0xe8] sm:$0xff]
    %v489 = vld [vmem:[#allocation4 + $0xf0] sm:$0xff]
    %v490 = vld [vmem:[#allocation4 + $0xf8] sm:$0xff]
    %s491 = smul.u32 0, 4
    %s492 = smul.addr %s491, 8
    %s493 = scalar_lea.vmem [#allocation2], %s492
    %v494 = vld [vmem:[%s493] sm:$0xff]
    %v495 = vld [vmem:[%s493 + $0x8] sm:$0xff]
    %v496 = vld [vmem:[%s493 + $0x10] sm:$0xff]
    %v497 = vld [vmem:[%s493 + $0x18] sm:$0xff]
    %v530 = vunpack.c.l.b16 %v459
    %v531 = vunpack.c.h.b16 %v459
    %v532 = vunpack.c.l.b16 %v460
    %v533 = vunpack.c.h.b16 %v460
    %v534 = vunpack.c.l.b16 %v461
    %v535 = vunpack.c.h.b16 %v461
    %v536 = vunpack.c.l.b16 %v462
    %v537 = vunpack.c.h.b16 %v462
    %v538 = vunpack.c.l.b16 %v463
    %v539 = vunpack.c.h.b16 %v463
    %v540 = vunpack.c.l.b16 %v464
    %v541 = vunpack.c.h.b16 %v464
    %v542 = vunpack.c.l.b16 %v465
    %v543 = vunpack.c.h.b16 %v465
    %v544 = vunpack.c.l.b16 %v466
    %v545 = vunpack.c.h.b16 %v466
    %v546 = vunpack.c.l.b16 %v467
    %v547 = vunpack.c.h.b16 %v467
    %v548 = vunpack.c.l.b16 %v468
    %v549 = vunpack.c.h.b16 %v468
    %v550 = vunpack.c.l.b16 %v469
    %v551 = vunpack.c.h.b16 %v469
    %v552 = vunpack.c.l.b16 %v470
    %v553 = vunpack.c.h.b16 %v470
    %v554 = vunpack.c.l.b16 %v471
    %v555 = vunpack.c.h.b16 %v471
    %v556 = vunpack.c.l.b16 %v472
    %v557 = vunpack.c.h.b16 %v472
    %v558 = vunpack.c.l.b16 %v473
    %v559 = vunpack.c.h.b16 %v473
    %v560 = vunpack.c.l.b16 %v474
    %v561 = vunpack.c.h.b16 %v474
    %v562 = vunpack.c.l.b16 %v475
    %v563 = vunpack.c.h.b16 %v475
    %v564 = vunpack.c.l.b16 %v476
    %v565 = vunpack.c.h.b16 %v476
    %v566 = vunpack.c.l.b16 %v477
    %v567 = vunpack.c.h.b16 %v477
    %v568 = vunpack.c.l.b16 %v478
    %v569 = vunpack.c.h.b16 %v478
    %v570 = vunpack.c.l.b16 %v479
    %v571 = vunpack.c.h.b16 %v479
    %v572 = vunpack.c.l.b16 %v480
    %v573 = vunpack.c.h.b16 %v480
    %v574 = vunpack.c.l.b16 %v481
    %v575 = vunpack.c.h.b16 %v481
    %v576 = vunpack.c.l.b16 %v482
    %v577 = vunpack.c.h.b16 %v482
    %v578 = vunpack.c.l.b16 %v483
    %v579 = vunpack.c.h.b16 %v483
    %v580 = vunpack.c.l.b16 %v484
    %v581 = vunpack.c.h.b16 %v484
    %v582 = vunpack.c.l.b16 %v485
    %v583 = vunpack.c.h.b16 %v485
    %v584 = vunpack.c.l.b16 %v486
    %v585 = vunpack.c.h.b16 %v486
    %v586 = vunpack.c.l.b16 %v487
    %v587 = vunpack.c.h.b16 %v487
    %v588 = vunpack.c.l.b16 %v488
    %v589 = vunpack.c.h.b16 %v488
    %v590 = vunpack.c.l.b16 %v489
    %v591 = vunpack.c.h.b16 %v489
    %v592 = vunpack.c.l.b16 %v490
    %v593 = vunpack.c.h.b16 %v490
    %v594 = vpack.c.b16 %v534, %v530
    %v595 = vpack.c.b16 %v535, %v531
    %v596 = vpack.c.b16 %v536, %v532
    %v597 = vpack.c.b16 %v537, %v533
    %v598 = vpack.c.b16 %v542, %v538
    %v599 = vpack.c.b16 %v543, %v539
    %v600 = vpack.c.b16 %v544, %v540
    %v601 = vpack.c.b16 %v545, %v541
    %v602 = vpack.c.b16 %v550, %v546
    %v603 = vpack.c.b16 %v551, %v547
    %v604 = vpack.c.b16 %v552, %v548
    %v605 = vpack.c.b16 %v553, %v549
    %v606 = vpack.c.b16 %v558, %v554
    %v607 = vpack.c.b16 %v559, %v555
    %v608 = vpack.c.b16 %v560, %v556
    %v609 = vpack.c.b16 %v561, %v557
    %v610 = vpack.c.b16 %v566, %v562
    %v611 = vpack.c.b16 %v567, %v563
    %v612 = vpack.c.b16 %v568, %v564
    %v613 = vpack.c.b16 %v569, %v565
    %v614 = vpack.c.b16 %v574, %v570
    %v615 = vpack.c.b16 %v575, %v571
    %v616 = vpack.c.b16 %v576, %v572
    %v617 = vpack.c.b16 %v577, %v573
    %v618 = vpack.c.b16 %v582, %v578
    %v619 = vpack.c.b16 %v583, %v579
    %v620 = vpack.c.b16 %v584, %v580
    %v621 = vpack.c.b16 %v585, %v581
    %v622 = vpack.c.b16 %v590, %v586
    %v623 = vpack.c.b16 %v591, %v587
    %v624 = vpack.c.b16 %v592, %v588
    %v625 = vpack.c.b16 %v593, %v589
    %658 = vmatprep.subr.bf16.mxu0 %v623
    %659 = vmatpush1.bf16.msra.mxu0 %v622
    %660 = vmatprep.subr.bf16.mxu0 %v619
    %661 = vmatpush1.bf16.msra.mxu0 %v618
    %662 = vmatprep.subr.bf16.mxu0 %v615
    %663 = vmatpush1.bf16.msra.mxu0 %v614
    %664 = vmatprep.subr.bf16.mxu0 %v611
    %665 = vmatpush1.bf16.msra.mxu0 %v610
    %666 = vmatprep.subr.bf16.mxu0 %v607
    %667 = vmatpush1.bf16.msra.mxu0 %v606
    %668 = vmatprep.subr.bf16.mxu0 %v603
    %669 = vmatpush1.bf16.msra.mxu0 %v602
    %670 = vmatprep.subr.bf16.mxu0 %v599
    %671 = vmatpush1.bf16.msra.mxu0 %v598
    %672 = vmatprep.subr.bf16.mxu0 %v595
    %673 = vmatpush1.bf16.msra.mxu0 %v594
    %674 = vmatprep.subr.bf16.mxu0 0
    %675 = vmatpush2.bf16.msra.mxu0 0
    %676 = vmatprep.subr.bf16.mxu0 0
    %677 = vmatpush2.bf16.msra.mxu0 0
    %678 = vmatprep.subr.bf16.mxu0 0
    %679 = vmatpush2.bf16.msra.mxu0 0
    %680 = vmatprep.subr.bf16.mxu0 0
    %681 = vmatpush2.bf16.msra.mxu0 0
    %682 = vmatprep.subr.bf16.mxu0 0
    %683 = vmatpush2.bf16.msra.mxu0 0
    %684 = vmatprep.subr.bf16.mxu0 0
    %685 = vmatpush2.bf16.msra.mxu0 0
    %686 = vmatprep.subr.bf16.mxu0 0
    %687 = vmatpush2.bf16.msra.mxu0 0
    %688 = vmatprep.subr.bf16.mxu0 0
    %689 = vmatpush2.bf16.msra.mxu0 0
    %690 = vmatprep.mubr.bf16.mxu0 0
    %691 = vmatmul.mubr.bf16.gmra.mxu0 %v458
    %v692 = vpop.f32.mrf.mxu0
    %v693 = vadd.f32 %v494, %v692
    %v694 = vpop.f32.mrf.mxu0
    %v695 = vadd.f32 %v495, %v694
    %v696 = vpop.f32.mrf.mxu0
    %v697 = vpop.f32.mrf.mxu0
    %698 = vdwg.mxu0
    %699 = vmatprep.subr.bf16.mxu0 %v625
    %700 = vmatpush1.bf16.msra.mxu0 %v624
    %701 = vmatprep.subr.bf16.mxu0 %v621
    %702 = vmatpush1.bf16.msra.mxu0 %v620
    %703 = vmatprep.subr.bf16.mxu0 %v617
    %704 = vmatpush1.bf16.msra.mxu0 %v616
    %705 = vmatprep.subr.bf16.mxu0 %v613
    %706 = vmatpush1.bf16.msra.mxu0 %v612
    %707 = vmatprep.subr.bf16.mxu0 %v609
    %708 = vmatpush1.bf16.msra.mxu0 %v608
    %709 = vmatprep.subr.bf16.mxu0 %v605
    %710 = vmatpush1.bf16.msra.mxu0 %v604
    %711 = vmatprep.subr.bf16.mxu0 %v601
    %712 = vmatpush1.bf16.msra.mxu0 %v600
    %713 = vmatprep.subr.bf16.mxu0 %v597
    %714 = vmatpush1.bf16.msra.mxu0 %v596
    %715 = vmatprep.subr.bf16.mxu0 0
    %716 = vmatpush2.bf16.msra.mxu0 0
    %717 = vmatprep.subr.bf16.mxu0 0
    %718 = vmatpush2.bf16.msra.mxu0 0
    %719 = vmatprep.subr.bf16.mxu0 0
    %720 = vmatpush2.bf16.msra.mxu0 0
    %721 = vmatprep.subr.bf16.mxu0 0
    %722 = vmatpush2.bf16.msra.mxu0 0
    %723 = vmatprep.subr.bf16.mxu0 0
    %724 = vmatpush2.bf16.msra.mxu0 0
    %725 = vmatprep.subr.bf16.mxu0 0
    %726 = vmatpush2.bf16.msra.mxu0 0
    %727 = vmatprep.subr.bf16.mxu0 0
    %728 = vmatpush2.bf16.msra.mxu0 0
    %729 = vmatprep.subr.bf16.mxu0 0
    %730 = vmatpush2.bf16.msra.mxu0 0
    %731 = vmatprep.mubr.bf16.mxu0 0
    %732 = vmatmul.mubr.bf16.gmra.mxu0 %v458
    %v733 = vpop.f32.mrf.mxu0
    %v734 = vadd.f32 %v496, %v733
    %v735 = vpop.f32.mrf.mxu0
    %v736 = vadd.f32 %v497, %v735
    %v737 = vpop.f32.mrf.mxu0
    %v738 = vpop.f32.mrf.mxu0
    %739 = vdwg.mxu0
    %v740 = vxor.u32 %v693, 2147483648
    %v741 = vxor.u32 %v695, 2147483648
    %v742 = vmul.f32 %v740, 1.442695
    %v743 = vpow.pop %v742
    %v744 = vmul.f32 %v741, 1.442695
    %v745 = vpow.pop %v744
    %v746 = vadd.f32 %v743, 1.0
    %v747 = vadd.f32 %v745, 1.0
    %v748 = vrcp.pop %v746
    %v749 = vmul.f32 1.0, %v748
    %v750 = vrcp.pop %v747
    %v751 = vmul.f32 1.0, %v750
    %v752 = vtanh.pop %v734
    %v753 = vxor.u32 %v736, 2147483648
    %v754 = vmul.f32 %v753, 1.442695
    %v755 = vpow.pop %v754
    %v756 = vadd.f32 %v755, 1.0
    %v757 = vrcp.pop %v756
    %v758 = vmul.f32 1.0, %v757
    %v759 = vmul.f32 %v751, %v455
    %v760 = vmul.f32 %v749, %v752
    %v761 = vadd.f32 %v759, %v760
    %v762 = vtanh.pop %v761
    %v763 = vmul.f32 %v758, %v762
    %v765 = vlaneseq
    %v766 = vshrl.u32 %v765, 7
    %v767 = vsub.s32 0, %v766
    %v768 = vrot.slane %v456, %v767
    %v770 = vmul.f32 %v763, %v768
    %771 = vadd.xlane.f32.xlu0 %v770
    %v772 = vpop.xlane.xlu0 %771
    %v774 = vlaneseq
    %v775 = vshrl.u32 %v774, 7
    %v776 = vsub.s32 0, %v775
    %v777 = vrot.slane %v457, %v776
    %v779 = vadd.f32 %v772, %v777
    %vm780 = vcmask 7168
    %781 = vst.msk [vmem:[%s8] sm:$0xff] %vm780, %v779
    %v782 = vpack.c.bf16 %v763, %v763
    %v783 = vld [vmem:[#allocation4] sm:$0xff]
    %v784 = vld [vmem:[#allocation4 + $0x8] sm:$0xff]
    %v785 = vld [vmem:[#allocation4 + $0x10] sm:$0xff]
    %v786 = vld [vmem:[#allocation4 + $0x18] sm:$0xff]
    %v787 = vld [vmem:[#allocation4 + $0x20] sm:$0xff]
    %v788 = vld [vmem:[#allocation4 + $0x28] sm:$0xff]
    %v789 = vld [vmem:[#allocation4 + $0x30] sm:$0xff]
    %v790 = vld [vmem:[#allocation4 + $0x38] sm:$0xff]
    %v791 = vld [vmem:[#allocation4 + $0x40] sm:$0xff]
    %v792 = vld [vmem:[#allocation4 + $0x48] sm:$0xff]
    %v793 = vld [vmem:[#allocation4 + $0x50] sm:$0xff]
    %v794 = vld [vmem:[#allocation4 + $0x58] sm:$0xff]
    %v795 = vld [vmem:[#allocation4 + $0x60] sm:$0xff]
    %v796 = vld [vmem:[#allocation4 + $0x68] sm:$0xff]
    %v797 = vld [vmem:[#allocation4 + $0x70] sm:$0xff]
    %v798 = vld [vmem:[#allocation4 + $0x78] sm:$0xff]
    %v799 = vld [vmem:[#allocation4 + $0x80] sm:$0xff]
    %v800 = vld [vmem:[#allocation4 + $0x88] sm:$0xff]
    %v801 = vld [vmem:[#allocation4 + $0x90] sm:$0xff]
    %v802 = vld [vmem:[#allocation4 + $0x98] sm:$0xff]
    %v803 = vld [vmem:[#allocation4 + $0xa0] sm:$0xff]
    %v804 = vld [vmem:[#allocation4 + $0xa8] sm:$0xff]
    %v805 = vld [vmem:[#allocation4 + $0xb0] sm:$0xff]
    %v806 = vld [vmem:[#allocation4 + $0xb8] sm:$0xff]
    %v807 = vld [vmem:[#allocation4 + $0xc0] sm:$0xff]
    %v808 = vld [vmem:[#allocation4 + $0xc8] sm:$0xff]
    %v809 = vld [vmem:[#allocation4 + $0xd0] sm:$0xff]
    %v810 = vld [vmem:[#allocation4 + $0xd8] sm:$0xff]
    %v811 = vld [vmem:[#allocation4 + $0xe0] sm:$0xff]
    %v812 = vld [vmem:[#allocation4 + $0xe8] sm:$0xff]
    %v813 = vld [vmem:[#allocation4 + $0xf0] sm:$0xff]
    %v814 = vld [vmem:[#allocation4 + $0xf8] sm:$0xff]
    %s815 = smul.u32 1, 4
    %s816 = smul.addr %s815, 8
    %s817 = scalar_lea.vmem [#allocation2], %s816
    %v818 = vld [vmem:[%s817] sm:$0xff]
    %v819 = vld [vmem:[%s817 + $0x8] sm:$0xff]
    %v820 = vld [vmem:[%s817 + $0x10] sm:$0xff]
    %v821 = vld [vmem:[%s817 + $0x18] sm:$0xff]
    %v854 = vunpack.c.l.b16 %v783
    %v855 = vunpack.c.h.b16 %v783
    %v856 = vunpack.c.l.b16 %v784
    %v857 = vunpack.c.h.b16 %v784
    %v858 = vunpack.c.l.b16 %v785
    %v859 = vunpack.c.h.b16 %v785
    %v860 = vunpack.c.l.b16 %v786
    %v861 = vunpack.c.h.b16 %v786
    %v862 = vunpack.c.l.b16 %v787
    %v863 = vunpack.c.h.b16 %v787
    %v864 = vunpack.c.l.b16 %v788
    %v865 = vunpack.c.h.b16 %v788
    %v866 = vunpack.c.l.b16 %v789
    %v867 = vunpack.c.h.b16 %v789
    %v868 = vunpack.c.l.b16 %v790
    %v869 = vunpack.c.h.b16 %v790
    %v870 = vunpack.c.l.b16 %v791
    %v871 = vunpack.c.h.b16 %v791
    %v872 = vunpack.c.l.b16 %v792
    %v873 = vunpack.c.h.b16 %v792
    %v874 = vunpack.c.l.b16 %v793
    %v875 = vunpack.c.h.b16 %v793
    %v876 = vunpack.c.l.b16 %v794
    %v877 = vunpack.c.h.b16 %v794
    %v878 = vunpack.c.l.b16 %v795
    %v879 = vunpack.c.h.b16 %v795
    %v880 = vunpack.c.l.b16 %v796
    %v881 = vunpack.c.h.b16 %v796
    %v882 = vunpack.c.l.b16 %v797
    %v883 = vunpack.c.h.b16 %v797
    %v884 = vunpack.c.l.b16 %v798
    %v885 = vunpack.c.h.b16 %v798
    %v886 = vunpack.c.l.b16 %v799
    %v887 = vunpack.c.h.b16 %v799
    %v888 = vunpack.c.l.b16 %v800
    %v889 = vunpack.c.h.b16 %v800
    %v890 = vunpack.c.l.b16 %v801
    %v891 = vunpack.c.h.b16 %v801
    %v892 = vunpack.c.l.b16 %v802
    %v893 = vunpack.c.h.b16 %v802
    %v894 = vunpack.c.l.b16 %v803
    %v895 = vunpack.c.h.b16 %v803
    %v896 = vunpack.c.l.b16 %v804
    %v897 = vunpack.c.h.b16 %v804
    %v898 = vunpack.c.l.b16 %v805
    %v899 = vunpack.c.h.b16 %v805
    %v900 = vunpack.c.l.b16 %v806
    %v901 = vunpack.c.h.b16 %v806
    %v902 = vunpack.c.l.b16 %v807
    %v903 = vunpack.c.h.b16 %v807
    %v904 = vunpack.c.l.b16 %v808
    %v905 = vunpack.c.h.b16 %v808
    %v906 = vunpack.c.l.b16 %v809
    %v907 = vunpack.c.h.b16 %v809
    %v908 = vunpack.c.l.b16 %v810
    %v909 = vunpack.c.h.b16 %v810
    %v910 = vunpack.c.l.b16 %v811
    %v911 = vunpack.c.h.b16 %v811
    %v912 = vunpack.c.l.b16 %v812
    %v913 = vunpack.c.h.b16 %v812
    %v914 = vunpack.c.l.b16 %v813
    %v915 = vunpack.c.h.b16 %v813
    %v916 = vunpack.c.l.b16 %v814
    %v917 = vunpack.c.h.b16 %v814
    %v918 = vpack.c.b16 %v858, %v854
    %v919 = vpack.c.b16 %v859, %v855
    %v920 = vpack.c.b16 %v860, %v856
    %v921 = vpack.c.b16 %v861, %v857
    %v922 = vpack.c.b16 %v866, %v862
    %v923 = vpack.c.b16 %v867, %v863
    %v924 = vpack.c.b16 %v868, %v864
    %v925 = vpack.c.b16 %v869, %v865
    %v926 = vpack.c.b16 %v874, %v870
    %v927 = vpack.c.b16 %v875, %v871
    %v928 = vpack.c.b16 %v876, %v872
    %v929 = vpack.c.b16 %v877, %v873
    %v930 = vpack.c.b16 %v882, %v878
    %v931 = vpack.c.b16 %v883, %v879
    %v932 = vpack.c.b16 %v884, %v880
    %v933 = vpack.c.b16 %v885, %v881
    %v934 = vpack.c.b16 %v890, %v886
    %v935 = vpack.c.b16 %v891, %v887
    %v936 = vpack.c.b16 %v892, %v888
    %v937 = vpack.c.b16 %v893, %v889
    %v938 = vpack.c.b16 %v898, %v894
    %v939 = vpack.c.b16 %v899, %v895
    %v940 = vpack.c.b16 %v900, %v896
    %v941 = vpack.c.b16 %v901, %v897
    %v942 = vpack.c.b16 %v906, %v902
    %v943 = vpack.c.b16 %v907, %v903
    %v944 = vpack.c.b16 %v908, %v904
    %v945 = vpack.c.b16 %v909, %v905
    %v946 = vpack.c.b16 %v914, %v910
    %v947 = vpack.c.b16 %v915, %v911
    %v948 = vpack.c.b16 %v916, %v912
    %v949 = vpack.c.b16 %v917, %v913
    %982 = vmatprep.subr.bf16.mxu0 %v947
    %983 = vmatpush1.bf16.msra.mxu0 %v946
    %984 = vmatprep.subr.bf16.mxu0 %v943
    %985 = vmatpush1.bf16.msra.mxu0 %v942
    %986 = vmatprep.subr.bf16.mxu0 %v939
    %987 = vmatpush1.bf16.msra.mxu0 %v938
    %988 = vmatprep.subr.bf16.mxu0 %v935
    %989 = vmatpush1.bf16.msra.mxu0 %v934
    %990 = vmatprep.subr.bf16.mxu0 %v931
    %991 = vmatpush1.bf16.msra.mxu0 %v930
    %992 = vmatprep.subr.bf16.mxu0 %v927
    %993 = vmatpush1.bf16.msra.mxu0 %v926
    %994 = vmatprep.subr.bf16.mxu0 %v923
    %995 = vmatpush1.bf16.msra.mxu0 %v922
    %996 = vmatprep.subr.bf16.mxu0 %v919
    %997 = vmatpush1.bf16.msra.mxu0 %v918
    %998 = vmatprep.subr.bf16.mxu0 0
    %999 = vmatpush2.bf16.msra.mxu0 0
    %1000 = vmatprep.subr.bf16.mxu0 0
    %1001 = vmatpush2.bf16.msra.mxu0 0
    %1002 = vmatprep.subr.bf16.mxu0 0
    %1003 = vmatpush2.bf16.msra.mxu0 0
    %1004 = vmatprep.subr.bf16.mxu0 0
    %1005 = vmatpush2.bf16.msra.mxu0 0
    %1006 = vmatprep.subr.bf16.mxu0 0
    %1007 = vmatpush2.bf16.msra.mxu0 0
    %1008 = vmatprep.subr.bf16.mxu0 0
    %1009 = vmatpush2.bf16.msra.mxu0 0
    %1010 = vmatprep.subr.bf16.mxu0 0
    %1011 = vmatpush2.bf16.msra.mxu0 0
    %1012 = vmatprep.subr.bf16.mxu0 0
    %1013 = vmatpush2.bf16.msra.mxu0 0
    %1014 = vmatprep.mubr.bf16.mxu0 0
    %1015 = vmatmul.mubr.bf16.gmra.mxu0 %v782
    %v1016 = vpop.f32.mrf.mxu0
    %v1017 = vadd.f32 %v818, %v1016
    %v1018 = vpop.f32.mrf.mxu0
    %v1019 = vadd.f32 %v819, %v1018
    %v1020 = vpop.f32.mrf.mxu0
    %v1021 = vpop.f32.mrf.mxu0
    %1022 = vdwg.mxu0
    %1023 = vmatprep.subr.bf16.mxu0 %v949
    %1024 = vmatpush1.bf16.msra.mxu0 %v948
    %1025 = vmatprep.subr.bf16.mxu0 %v945
    %1026 = vmatpush1.bf16.msra.mxu0 %v944
    %1027 = vmatprep.subr.bf16.mxu0 %v941
    %1028 = vmatpush1.bf16.msra.mxu0 %v940
    %1029 = vmatprep.subr.bf16.mxu0 %v937
    %1030 = vmatpush1.bf16.msra.mxu0 %v936
    %1031 = vmatprep.subr.bf16.mxu0 %v933
    %1032 = vmatpush1.bf16.msra.mxu0 %v932
    %1033 = vmatprep.subr.bf16.mxu0 %v929
    %1034 = vmatpush1.bf16.msra.mxu0 %v928
    %1035 = vmatprep.subr.bf16.mxu0 %v925
    %1036 = vmatpush1.bf16.msra.mxu0 %v924
    %1037 = vmatprep.subr.bf16.mxu0 %v921
    %1038 = vmatpush1.bf16.msra.mxu0 %v920
    %1039 = vmatprep.subr.bf16.mxu0 0
    %1040 = vmatpush2.bf16.msra.mxu0 0
    %1041 = vmatprep.subr.bf16.mxu0 0
    %1042 = vmatpush2.bf16.msra.mxu0 0
    %1043 = vmatprep.subr.bf16.mxu0 0
    %1044 = vmatpush2.bf16.msra.mxu0 0
    %1045 = vmatprep.subr.bf16.mxu0 0
    %1046 = vmatpush2.bf16.msra.mxu0 0
    %1047 = vmatprep.subr.bf16.mxu0 0
    %1048 = vmatpush2.bf16.msra.mxu0 0
    %1049 = vmatprep.subr.bf16.mxu0 0
    %1050 = vmatpush2.bf16.msra.mxu0 0
    %1051 = vmatprep.subr.bf16.mxu0 0
    %1052 = vmatpush2.bf16.msra.mxu0 0
    %1053 = vmatprep.subr.bf16.mxu0 0
    %1054 = vmatpush2.bf16.msra.mxu0 0
    %1055 = vmatprep.mubr.bf16.mxu0 0
    %1056 = vmatmul.mubr.bf16.gmra.mxu0 %v782
    %v1057 = vpop.f32.mrf.mxu0
    %v1058 = vadd.f32 %v820, %v1057
    %v1059 = vpop.f32.mrf.mxu0
    %v1060 = vadd.f32 %v821, %v1059
    %v1061 = vpop.f32.mrf.mxu0
    %v1062 = vpop.f32.mrf.mxu0
    %1063 = vdwg.mxu0
    %v1064 = vxor.u32 %v1017, 2147483648
    %v1065 = vxor.u32 %v1019, 2147483648
    %v1066 = vmul.f32 %v1064, 1.442695
    %v1067 = vpow.pop %v1066
    %v1068 = vmul.f32 %v1065, 1.442695
    %v1069 = vpow.pop %v1068
    %v1070 = vadd.f32 %v1067, 1.0
    %v1071 = vadd.f32 %v1069, 1.0
    %v1072 = vrcp.pop %v1070
    %v1073 = vmul.f32 1.0, %v1072
    %v1074 = vrcp.pop %v1071
    %v1075 = vmul.f32 1.0, %v1074
    %v1076 = vtanh.pop %v1058
    %v1077 = vxor.u32 %v1060, 2147483648
    %v1078 = vmul.f32 %v1077, 1.442695
    %v1079 = vpow.pop %v1078
    %v1080 = vadd.f32 %v1079, 1.0
    %v1081 = vrcp.pop %v1080
    %v1082 = vmul.f32 1.0, %v1081
    %v1083 = vmul.f32 %v1075, %v761
    %v1084 = vmul.f32 %v1073, %v1076
    %v1085 = vadd.f32 %v1083, %v1084
    %v1086 = vtanh.pop %v1085
    %v1087 = vmul.f32 %v1082, %v1086
    %v1088 = vmul.f32 %v1087, %v768
    %1089 = vadd.xlane.f32.xlu0 %v1088
    %v1090 = vpop.xlane.xlu0 %1089
    %v1091 = vadd.f32 %v1090, %v777
    %s1092 = scalar_lea.vmem %s8, 8
    %1093 = vst.msk [vmem:[%s1092] sm:$0xff] %vm780, %v1091
    %v1094 = vpack.c.bf16 %v1087, %v1087
    %v1095 = vld [vmem:[#allocation4] sm:$0xff]
    %v1096 = vld [vmem:[#allocation4 + $0x8] sm:$0xff]
    %v1097 = vld [vmem:[#allocation4 + $0x10] sm:$0xff]
    %v1098 = vld [vmem:[#allocation4 + $0x18] sm:$0xff]
    %v1099 = vld [vmem:[#allocation4 + $0x20] sm:$0xff]
    %v1100 = vld [vmem:[#allocation4 + $0x28] sm:$0xff]
    %v1101 = vld [vmem:[#allocation4 + $0x30] sm:$0xff]
    %v1102 = vld [vmem:[#allocation4 + $0x38] sm:$0xff]
    %v1103 = vld [vmem:[#allocation4 + $0x40] sm:$0xff]
    %v1104 = vld [vmem:[#allocation4 + $0x48] sm:$0xff]
    %v1105 = vld [vmem:[#allocation4 + $0x50] sm:$0xff]
    %v1106 = vld [vmem:[#allocation4 + $0x58] sm:$0xff]
    %v1107 = vld [vmem:[#allocation4 + $0x60] sm:$0xff]
    %v1108 = vld [vmem:[#allocation4 + $0x68] sm:$0xff]
    %v1109 = vld [vmem:[#allocation4 + $0x70] sm:$0xff]
    %v1110 = vld [vmem:[#allocation4 + $0x78] sm:$0xff]
    %v1111 = vld [vmem:[#allocation4 + $0x80] sm:$0xff]
    %v1112 = vld [vmem:[#allocation4 + $0x88] sm:$0xff]
    %v1113 = vld [vmem:[#allocation4 + $0x90] sm:$0xff]
    %v1114 = vld [vmem:[#allocation4 + $0x98] sm:$0xff]
    %v1115 = vld [vmem:[#allocation4 + $0xa0] sm:$0xff]
    %v1116 = vld [vmem:[#allocation4 + $0xa8] sm:$0xff]
    %v1117 = vld [vmem:[#allocation4 + $0xb0] sm:$0xff]
    %v1118 = vld [vmem:[#allocation4 + $0xb8] sm:$0xff]
    %v1119 = vld [vmem:[#allocation4 + $0xc0] sm:$0xff]
    %v1120 = vld [vmem:[#allocation4 + $0xc8] sm:$0xff]
    %v1121 = vld [vmem:[#allocation4 + $0xd0] sm:$0xff]
    %v1122 = vld [vmem:[#allocation4 + $0xd8] sm:$0xff]
    %v1123 = vld [vmem:[#allocation4 + $0xe0] sm:$0xff]
    %v1124 = vld [vmem:[#allocation4 + $0xe8] sm:$0xff]
    %v1125 = vld [vmem:[#allocation4 + $0xf0] sm:$0xff]
    %v1126 = vld [vmem:[#allocation4 + $0xf8] sm:$0xff]
    %s1127 = smul.u32 2, 4
    %s1128 = smul.addr %s1127, 8
    %s1129 = scalar_lea.vmem [#allocation2], %s1128
    %v1130 = vld [vmem:[%s1129] sm:$0xff]
    %v1131 = vld [vmem:[%s1129 + $0x8] sm:$0xff]
    %v1132 = vld [vmem:[%s1129 + $0x10] sm:$0xff]
    %v1133 = vld [vmem:[%s1129 + $0x18] sm:$0xff]
    %v1166 = vunpack.c.l.b16 %v1095
    %v1167 = vunpack.c.h.b16 %v1095
    %v1168 = vunpack.c.l.b16 %v1096
    %v1169 = vunpack.c.h.b16 %v1096
    %v1170 = vunpack.c.l.b16 %v1097
    %v1171 = vunpack.c.h.b16 %v1097
    %v1172 = vunpack.c.l.b16 %v1098
    %v1173 = vunpack.c.h.b16 %v1098
    %v1174 = vunpack.c.l.b16 %v1099
    %v1175 = vunpack.c.h.b16 %v1099
    %v1176 = vunpack.c.l.b16 %v1100
    %v1177 = vunpack.c.h.b16 %v1100
    %v1178 = vunpack.c.l.b16 %v1101
    %v1179 = vunpack.c.h.b16 %v1101
    %v1180 = vunpack.c.l.b16 %v1102
    %v1181 = vunpack.c.h.b16 %v1102
    %v1182 = vunpack.c.l.b16 %v1103
    %v1183 = vunpack.c.h.b16 %v1103
    %v1184 = vunpack.c.l.b16 %v1104
    %v1185 = vunpack.c.h.b16 %v1104
    %v1186 = vunpack.c.l.b16 %v1105
    %v1187 = vunpack.c.h.b16 %v1105
    %v1188 = vunpack.c.l.b16 %v1106
    %v1189 = vunpack.c.h.b16 %v1106
    %v1190 = vunpack.c.l.b16 %v1107
    %v1191 = vunpack.c.h.b16 %v1107
    %v1192 = vunpack.c.l.b16 %v1108
    %v1193 = vunpack.c.h.b16 %v1108
    %v1194 = vunpack.c.l.b16 %v1109
    %v1195 = vunpack.c.h.b16 %v1109
    %v1196 = vunpack.c.l.b16 %v1110
    %v1197 = vunpack.c.h.b16 %v1110
    %v1198 = vunpack.c.l.b16 %v1111
    %v1199 = vunpack.c.h.b16 %v1111
    %v1200 = vunpack.c.l.b16 %v1112
    %v1201 = vunpack.c.h.b16 %v1112
    %v1202 = vunpack.c.l.b16 %v1113
    %v1203 = vunpack.c.h.b16 %v1113
    %v1204 = vunpack.c.l.b16 %v1114
    %v1205 = vunpack.c.h.b16 %v1114
    %v1206 = vunpack.c.l.b16 %v1115
    %v1207 = vunpack.c.h.b16 %v1115
    %v1208 = vunpack.c.l.b16 %v1116
    %v1209 = vunpack.c.h.b16 %v1116
    %v1210 = vunpack.c.l.b16 %v1117
    %v1211 = vunpack.c.h.b16 %v1117
    %v1212 = vunpack.c.l.b16 %v1118
    %v1213 = vunpack.c.h.b16 %v1118
    %v1214 = vunpack.c.l.b16 %v1119
    %v1215 = vunpack.c.h.b16 %v1119
    %v1216 = vunpack.c.l.b16 %v1120
    %v1217 = vunpack.c.h.b16 %v1120
    %v1218 = vunpack.c.l.b16 %v1121
    %v1219 = vunpack.c.h.b16 %v1121
    %v1220 = vunpack.c.l.b16 %v1122
    %v1221 = vunpack.c.h.b16 %v1122
    %v1222 = vunpack.c.l.b16 %v1123
    %v1223 = vunpack.c.h.b16 %v1123
    %v1224 = vunpack.c.l.b16 %v1124
    %v1225 = vunpack.c.h.b16 %v1124
    %v1226 = vunpack.c.l.b16 %v1125
    %v1227 = vunpack.c.h.b16 %v1125
    %v1228 = vunpack.c.l.b16 %v1126
    %v1229 = vunpack.c.h.b16 %v1126
    %v1230 = vpack.c.b16 %v1170, %v1166
    %v1231 = vpack.c.b16 %v1171, %v1167
    %v1232 = vpack.c.b16 %v1172, %v1168
    %v1233 = vpack.c.b16 %v1173, %v1169
    %v1234 = vpack.c.b16 %v1178, %v1174
    %v1235 = vpack.c.b16 %v1179, %v1175
    %v1236 = vpack.c.b16 %v1180, %v1176
    %v1237 = vpack.c.b16 %v1181, %v1177
    %v1238 = vpack.c.b16 %v1186, %v1182
    %v1239 = vpack.c.b16 %v1187, %v1183
    %v1240 = vpack.c.b16 %v1188, %v1184
    %v1241 = vpack.c.b16 %v1189, %v1185
    %v1242 = vpack.c.b16 %v1194, %v1190
    %v1243 = vpack.c.b16 %v1195, %v1191
    %v1244 = vpack.c.b16 %v1196, %v1192
    %v1245 = vpack.c.b16 %v1197, %v1193
    %v1246 = vpack.c.b16 %v1202, %v1198
    %v1247 = vpack.c.b16 %v1203, %v1199
    %v1248 = vpack.c.b16 %v1204, %v1200
    %v1249 = vpack.c.b16 %v1205, %v1201
    %v1250 = vpack.c.b16 %v1210, %v1206
    %v1251 = vpack.c.b16 %v1211, %v1207
    %v1252 = vpack.c.b16 %v1212, %v1208
    %v1253 = vpack.c.b16 %v1213, %v1209
    %v1254 = vpack.c.b16 %v1218, %v1214
    %v1255 = vpack.c.b16 %v1219, %v1215
    %v1256 = vpack.c.b16 %v1220, %v1216
    %v1257 = vpack.c.b16 %v1221, %v1217
    %v1258 = vpack.c.b16 %v1226, %v1222
    %v1259 = vpack.c.b16 %v1227, %v1223
    %v1260 = vpack.c.b16 %v1228, %v1224
    %v1261 = vpack.c.b16 %v1229, %v1225
    %1294 = vmatprep.subr.bf16.mxu0 %v1259
    %1295 = vmatpush1.bf16.msra.mxu0 %v1258
    %1296 = vmatprep.subr.bf16.mxu0 %v1255
    %1297 = vmatpush1.bf16.msra.mxu0 %v1254
    %1298 = vmatprep.subr.bf16.mxu0 %v1251
    %1299 = vmatpush1.bf16.msra.mxu0 %v1250
    %1300 = vmatprep.subr.bf16.mxu0 %v1247
    %1301 = vmatpush1.bf16.msra.mxu0 %v1246
    %1302 = vmatprep.subr.bf16.mxu0 %v1243
    %1303 = vmatpush1.bf16.msra.mxu0 %v1242
    %1304 = vmatprep.subr.bf16.mxu0 %v1239
    %1305 = vmatpush1.bf16.msra.mxu0 %v1238
    %1306 = vmatprep.subr.bf16.mxu0 %v1235
    %1307 = vmatpush1.bf16.msra.mxu0 %v1234
    %1308 = vmatprep.subr.bf16.mxu0 %v1231
    %1309 = vmatpush1.bf16.msra.mxu0 %v1230
    %1310 = vmatprep.subr.bf16.mxu0 0
    %1311 = vmatpush2.bf16.msra.mxu0 0
    %1312 = vmatprep.subr.bf16.mxu0 0
    %1313 = vmatpush2.bf16.msra.mxu0 0
    %1314 = vmatprep.subr.bf16.mxu0 0
    %1315 = vmatpush2.bf16.msra.mxu0 0
    %1316 = vmatprep.subr.bf16.mxu0 0
    %1317 = vmatpush2.bf16.msra.mxu0 0
    %1318 = vmatprep.subr.bf16.mxu0 0
    %1319 = vmatpush2.bf16.msra.mxu0 0
    %1320 = vmatprep.subr.bf16.mxu0 0
    %1321 = vmatpush2.bf16.msra.mxu0 0
    %1322 = vmatprep.subr.bf16.mxu0 0
    %1323 = vmatpush2.bf16.msra.mxu0 0
    %1324 = vmatprep.subr.bf16.mxu0 0
    %1325 = vmatpush2.bf16.msra.mxu0 0
    %1326 = vmatprep.mubr.bf16.mxu0 0
    %1327 = vmatmul.mubr.bf16.gmra.mxu0 %v1094
    %v1328 = vpop.f32.mrf.mxu0
    %v1329 = vadd.f32 %v1130, %v1328
    %v1330 = vpop.f32.mrf.mxu0
    %v1331 = vadd.f32 %v1131, %v1330
    %v1332 = vpop.f32.mrf.mxu0
    %v1333 = vpop.f32.mrf.mxu0
    %1334 = vdwg.mxu0
    %1335 = vmatprep.subr.bf16.mxu0 %v1261
    %1336 = vmatpush1.bf16.msra.mxu0 %v1260
    %1337 = vmatprep.subr.bf16.mxu0 %v1257
    %1338 = vmatpush1.bf16.msra.mxu0 %v1256
    %1339 = vmatprep.subr.bf16.mxu0 %v1253
    %1340 = vmatpush1.bf16.msra.mxu0 %v1252
    %1341 = vmatprep.subr.bf16.mxu0 %v1249
    %1342 = vmatpush1.bf16.msra.mxu0 %v1248
    %1343 = vmatprep.subr.bf16.mxu0 %v1245
    %1344 = vmatpush1.bf16.msra.mxu0 %v1244
    %1345 = vmatprep.subr.bf16.mxu0 %v1241
    %1346 = vmatpush1.bf16.msra.mxu0 %v1240
    %1347 = vmatprep.subr.bf16.mxu0 %v1237
    %1348 = vmatpush1.bf16.msra.mxu0 %v1236
    %1349 = vmatprep.subr.bf16.mxu0 %v1233
    %1350 = vmatpush1.bf16.msra.mxu0 %v1232
    %1351 = vmatprep.subr.bf16.mxu0 0
    %1352 = vmatpush2.bf16.msra.mxu0 0
    %1353 = vmatprep.subr.bf16.mxu0 0
    %1354 = vmatpush2.bf16.msra.mxu0 0
    %1355 = vmatprep.subr.bf16.mxu0 0
    %1356 = vmatpush2.bf16.msra.mxu0 0
    %1357 = vmatprep.subr.bf16.mxu0 0
    %1358 = vmatpush2.bf16.msra.mxu0 0
    %1359 = vmatprep.subr.bf16.mxu0 0
    %1360 = vmatpush2.bf16.msra.mxu0 0
    %1361 = vmatprep.subr.bf16.mxu0 0
    %1362 = vmatpush2.bf16.msra.mxu0 0
    %1363 = vmatprep.subr.bf16.mxu0 0
    %1364 = vmatpush2.bf16.msra.mxu0 0
    %1365 = vmatprep.subr.bf16.mxu0 0
    %1366 = vmatpush2.bf16.msra.mxu0 0
    %1367 = vmatprep.mubr.bf16.mxu0 0
    %1368 = vmatmul.mubr.bf16.gmra.mxu0 %v1094
    %v1369 = vpop.f32.mrf.mxu0
    %v1370 = vadd.f32 %v1132, %v1369
    %v1371 = vpop.f32.mrf.mxu0
    %v1372 = vadd.f32 %v1133, %v1371
    %v1373 = vpop.f32.mrf.mxu0
    %v1374 = vpop.f32.mrf.mxu0
    %1375 = vdwg.mxu0
    %v1376 = vxor.u32 %v1329, 2147483648
    %v1377 = vxor.u32 %v1331, 2147483648
    %v1378 = vmul.f32 %v1376, 1.442695
    %v1379 = vpow.pop %v1378
    %v1380 = vmul.f32 %v1377, 1.442695
    %v1381 = vpow.pop %v1380
    %v1382 = vadd.f32 %v1379, 1.0
    %v1383 = vadd.f32 %v1381, 1.0
    %v1384 = vrcp.pop %v1382
    %v1385 = vmul.f32 1.0, %v1384
    %v1386 = vrcp.pop %v1383
    %v1387 = vmul.f32 1.0, %v1386
    %v1388 = vtanh.pop %v1370
    %v1389 = vxor.u32 %v1372, 2147483648
    %v1390 = vmul.f32 %v1389, 1.442695
    %v1391 = vpow.pop %v1390
    %v1392 = vadd.f32 %v1391, 1.0
    %v1393 = vrcp.pop %v1392
    %v1394 = vmul.f32 1.0, %v1393
    %v1395 = vmul.f32 %v1387, %v1085
    %v1396 = vmul.f32 %v1385, %v1388
    %v1397 = vadd.f32 %v1395, %v1396
    %v1398 = vtanh.pop %v1397
    %v1399 = vmul.f32 %v1394, %v1398
    %v1400 = vmul.f32 %v1399, %v768
    %1401 = vadd.xlane.f32.xlu0 %v1400
    %v1402 = vpop.xlane.xlu0 %1401
    %v1403 = vadd.f32 %v1402, %v777
    %s1404 = scalar_lea.vmem %s8, 16
    %1405 = vst.msk [vmem:[%s1404] sm:$0xff] %vm780, %v1403
    %v1406 = vpack.c.bf16 %v1399, %v1399
    %v1407 = vld [vmem:[#allocation4] sm:$0xff]
    %v1408 = vld [vmem:[#allocation4 + $0x8] sm:$0xff]
    %v1409 = vld [vmem:[#allocation4 + $0x10] sm:$0xff]
    %v1410 = vld [vmem:[#allocation4 + $0x18] sm:$0xff]
    %v1411 = vld [vmem:[#allocation4 + $0x20] sm:$0xff]
    %v1412 = vld [vmem:[#allocation4 + $0x28] sm:$0xff]
    %v1413 = vld [vmem:[#allocation4 + $0x30] sm:$0xff]
    %v1414 = vld [vmem:[#allocation4 + $0x38] sm:$0xff]
    %v1415 = vld [vmem:[#allocation4 + $0x40] sm:$0xff]
    %v1416 = vld [vmem:[#allocation4 + $0x48] sm:$0xff]
    %v1417 = vld [vmem:[#allocation4 + $0x50] sm:$0xff]
    %v1418 = vld [vmem:[#allocation4 + $0x58] sm:$0xff]
    %v1419 = vld [vmem:[#allocation4 + $0x60] sm:$0xff]
    %v1420 = vld [vmem:[#allocation4 + $0x68] sm:$0xff]
    %v1421 = vld [vmem:[#allocation4 + $0x70] sm:$0xff]
    %v1422 = vld [vmem:[#allocation4 + $0x78] sm:$0xff]
    %v1423 = vld [vmem:[#allocation4 + $0x80] sm:$0xff]
    %v1424 = vld [vmem:[#allocation4 + $0x88] sm:$0xff]
    %v1425 = vld [vmem:[#allocation4 + $0x90] sm:$0xff]
    %v1426 = vld [vmem:[#allocation4 + $0x98] sm:$0xff]
    %v1427 = vld [vmem:[#allocation4 + $0xa0] sm:$0xff]
    %v1428 = vld [vmem:[#allocation4 + $0xa8] sm:$0xff]
    %v1429 = vld [vmem:[#allocation4 + $0xb0] sm:$0xff]
    %v1430 = vld [vmem:[#allocation4 + $0xb8] sm:$0xff]
    %v1431 = vld [vmem:[#allocation4 + $0xc0] sm:$0xff]
    %v1432 = vld [vmem:[#allocation4 + $0xc8] sm:$0xff]
    %v1433 = vld [vmem:[#allocation4 + $0xd0] sm:$0xff]
    %v1434 = vld [vmem:[#allocation4 + $0xd8] sm:$0xff]
    %v1435 = vld [vmem:[#allocation4 + $0xe0] sm:$0xff]
    %v1436 = vld [vmem:[#allocation4 + $0xe8] sm:$0xff]
    %v1437 = vld [vmem:[#allocation4 + $0xf0] sm:$0xff]
    %v1438 = vld [vmem:[#allocation4 + $0xf8] sm:$0xff]
    %s1439 = smul.u32 3, 4
    %s1440 = smul.addr %s1439, 8
    %s1441 = scalar_lea.vmem [#allocation2], %s1440
    %v1442 = vld [vmem:[%s1441] sm:$0xff]
    %v1443 = vld [vmem:[%s1441 + $0x8] sm:$0xff]
    %v1444 = vld [vmem:[%s1441 + $0x10] sm:$0xff]
    %v1445 = vld [vmem:[%s1441 + $0x18] sm:$0xff]
    %v1478 = vunpack.c.l.b16 %v1407
    %v1479 = vunpack.c.h.b16 %v1407
    %v1480 = vunpack.c.l.b16 %v1408
    %v1481 = vunpack.c.h.b16 %v1408
    %v1482 = vunpack.c.l.b16 %v1409
    %v1483 = vunpack.c.h.b16 %v1409
    %v1484 = vunpack.c.l.b16 %v1410
    %v1485 = vunpack.c.h.b16 %v1410
    %v1486 = vunpack.c.l.b16 %v1411
    %v1487 = vunpack.c.h.b16 %v1411
    %v1488 = vunpack.c.l.b16 %v1412
    %v1489 = vunpack.c.h.b16 %v1412
    %v1490 = vunpack.c.l.b16 %v1413
    %v1491 = vunpack.c.h.b16 %v1413
    %v1492 = vunpack.c.l.b16 %v1414
    %v1493 = vunpack.c.h.b16 %v1414
    %v1494 = vunpack.c.l.b16 %v1415
    %v1495 = vunpack.c.h.b16 %v1415
    %v1496 = vunpack.c.l.b16 %v1416
    %v1497 = vunpack.c.h.b16 %v1416
    %v1498 = vunpack.c.l.b16 %v1417
    %v1499 = vunpack.c.h.b16 %v1417
    %v1500 = vunpack.c.l.b16 %v1418
    %v1501 = vunpack.c.h.b16 %v1418
    %v1502 = vunpack.c.l.b16 %v1419
    %v1503 = vunpack.c.h.b16 %v1419
    %v1504 = vunpack.c.l.b16 %v1420
    %v1505 = vunpack.c.h.b16 %v1420
    %v1506 = vunpack.c.l.b16 %v1421
    %v1507 = vunpack.c.h.b16 %v1421
    %v1508 = vunpack.c.l.b16 %v1422
    %v1509 = vunpack.c.h.b16 %v1422
    %v1510 = vunpack.c.l.b16 %v1423
    %v1511 = vunpack.c.h.b16 %v1423
    %v1512 = vunpack.c.l.b16 %v1424
    %v1513 = vunpack.c.h.b16 %v1424
    %v1514 = vunpack.c.l.b16 %v1425
    %v1515 = vunpack.c.h.b16 %v1425
    %v1516 = vunpack.c.l.b16 %v1426
    %v1517 = vunpack.c.h.b16 %v1426
    %v1518 = vunpack.c.l.b16 %v1427
    %v1519 = vunpack.c.h.b16 %v1427
    %v1520 = vunpack.c.l.b16 %v1428
    %v1521 = vunpack.c.h.b16 %v1428
    %v1522 = vunpack.c.l.b16 %v1429
    %v1523 = vunpack.c.h.b16 %v1429
    %v1524 = vunpack.c.l.b16 %v1430
    %v1525 = vunpack.c.h.b16 %v1430
    %v1526 = vunpack.c.l.b16 %v1431
    %v1527 = vunpack.c.h.b16 %v1431
    %v1528 = vunpack.c.l.b16 %v1432
    %v1529 = vunpack.c.h.b16 %v1432
    %v1530 = vunpack.c.l.b16 %v1433
    %v1531 = vunpack.c.h.b16 %v1433
    %v1532 = vunpack.c.l.b16 %v1434
    %v1533 = vunpack.c.h.b16 %v1434
    %v1534 = vunpack.c.l.b16 %v1435
    %v1535 = vunpack.c.h.b16 %v1435
    %v1536 = vunpack.c.l.b16 %v1436
    %v1537 = vunpack.c.h.b16 %v1436
    %v1538 = vunpack.c.l.b16 %v1437
    %v1539 = vunpack.c.h.b16 %v1437
    %v1540 = vunpack.c.l.b16 %v1438
    %v1541 = vunpack.c.h.b16 %v1438
    %v1542 = vpack.c.b16 %v1482, %v1478
    %v1543 = vpack.c.b16 %v1483, %v1479
    %v1544 = vpack.c.b16 %v1484, %v1480
    %v1545 = vpack.c.b16 %v1485, %v1481
    %v1546 = vpack.c.b16 %v1490, %v1486
    %v1547 = vpack.c.b16 %v1491, %v1487
    %v1548 = vpack.c.b16 %v1492, %v1488
    %v1549 = vpack.c.b16 %v1493, %v1489
    %v1550 = vpack.c.b16 %v1498, %v1494
    %v1551 = vpack.c.b16 %v1499, %v1495
    %v1552 = vpack.c.b16 %v1500, %v1496
    %v1553 = vpack.c.b16 %v1501, %v1497
    %v1554 = vpack.c.b16 %v1506, %v1502
    %v1555 = vpack.c.b16 %v1507, %v1503
    %v1556 = vpack.c.b16 %v1508, %v1504
    %v1557 = vpack.c.b16 %v1509, %v1505
    %v1558 = vpack.c.b16 %v1514, %v1510
    %v1559 = vpack.c.b16 %v1515, %v1511
    %v1560 = vpack.c.b16 %v1516, %v1512
    %v1561 = vpack.c.b16 %v1517, %v1513
    %v1562 = vpack.c.b16 %v1522, %v1518
    %v1563 = vpack.c.b16 %v1523, %v1519
    %v1564 = vpack.c.b16 %v1524, %v1520
    %v1565 = vpack.c.b16 %v1525, %v1521
    %v1566 = vpack.c.b16 %v1530, %v1526
    %v1567 = vpack.c.b16 %v1531, %v1527
    %v1568 = vpack.c.b16 %v1532, %v1528
    %v1569 = vpack.c.b16 %v1533, %v1529
    %v1570 = vpack.c.b16 %v1538, %v1534
    %v1571 = vpack.c.b16 %v1539, %v1535
    %v1572 = vpack.c.b16 %v1540, %v1536
    %v1573 = vpack.c.b16 %v1541, %v1537
    %1606 = vmatprep.subr.bf16.mxu0 %v1571
    %1607 = vmatpush1.bf16.msra.mxu0 %v1570
    %1608 = vmatprep.subr.bf16.mxu0 %v1567
    %1609 = vmatpush1.bf16.msra.mxu0 %v1566
    %1610 = vmatprep.subr.bf16.mxu0 %v1563
    %1611 = vmatpush1.bf16.msra.mxu0 %v1562
    %1612 = vmatprep.subr.bf16.mxu0 %v1559
    %1613 = vmatpush1.bf16.msra.mxu0 %v1558
    %1614 = vmatprep.subr.bf16.mxu0 %v1555
    %1615 = vmatpush1.bf16.msra.mxu0 %v1554
    %1616 = vmatprep.subr.bf16.mxu0 %v1551
    %1617 = vmatpush1.bf16.msra.mxu0 %v1550
    %1618 = vmatprep.subr.bf16.mxu0 %v1547
    %1619 = vmatpush1.bf16.msra.mxu0 %v1546
    %1620 = vmatprep.subr.bf16.mxu0 %v1543
    %1621 = vmatpush1.bf16.msra.mxu0 %v1542
    %1622 = vmatprep.subr.bf16.mxu0 0
    %1623 = vmatpush2.bf16.msra.mxu0 0
    %1624 = vmatprep.subr.bf16.mxu0 0
    %1625 = vmatpush2.bf16.msra.mxu0 0
    %1626 = vmatprep.subr.bf16.mxu0 0
    %1627 = vmatpush2.bf16.msra.mxu0 0
    %1628 = vmatprep.subr.bf16.mxu0 0
    %1629 = vmatpush2.bf16.msra.mxu0 0
    %1630 = vmatprep.subr.bf16.mxu0 0
    %1631 = vmatpush2.bf16.msra.mxu0 0
    %1632 = vmatprep.subr.bf16.mxu0 0
    %1633 = vmatpush2.bf16.msra.mxu0 0
    %1634 = vmatprep.subr.bf16.mxu0 0
    %1635 = vmatpush2.bf16.msra.mxu0 0
    %1636 = vmatprep.subr.bf16.mxu0 0
    %1637 = vmatpush2.bf16.msra.mxu0 0
    %1638 = vmatprep.mubr.bf16.mxu0 0
    %1639 = vmatmul.mubr.bf16.gmra.mxu0 %v1406
    %v1640 = vpop.f32.mrf.mxu0
    %v1641 = vadd.f32 %v1442, %v1640
    %v1642 = vpop.f32.mrf.mxu0
    %v1643 = vadd.f32 %v1443, %v1642
    %v1644 = vpop.f32.mrf.mxu0
    %v1645 = vpop.f32.mrf.mxu0
    %1646 = vdwg.mxu0
    %1647 = vmatprep.subr.bf16.mxu0 %v1573
    %1648 = vmatpush1.bf16.msra.mxu0 %v1572
    %1649 = vmatprep.subr.bf16.mxu0 %v1569
    %1650 = vmatpush1.bf16.msra.mxu0 %v1568
    %1651 = vmatprep.subr.bf16.mxu0 %v1565
    %1652 = vmatpush1.bf16.msra.mxu0 %v1564
    %1653 = vmatprep.subr.bf16.mxu0 %v1561
    %1654 = vmatpush1.bf16.msra.mxu0 %v1560
    %1655 = vmatprep.subr.bf16.mxu0 %v1557
    %1656 = vmatpush1.bf16.msra.mxu0 %v1556
    %1657 = vmatprep.subr.bf16.mxu0 %v1553
    %1658 = vmatpush1.bf16.msra.mxu0 %v1552
    %1659 = vmatprep.subr.bf16.mxu0 %v1549
    %1660 = vmatpush1.bf16.msra.mxu0 %v1548
    %1661 = vmatprep.subr.bf16.mxu0 %v1545
    %1662 = vmatpush1.bf16.msra.mxu0 %v1544
    %1663 = vmatprep.subr.bf16.mxu0 0
    %1664 = vmatpush2.bf16.msra.mxu0 0
    %1665 = vmatprep.subr.bf16.mxu0 0
    %1666 = vmatpush2.bf16.msra.mxu0 0
    %1667 = vmatprep.subr.bf16.mxu0 0
    %1668 = vmatpush2.bf16.msra.mxu0 0
    %1669 = vmatprep.subr.bf16.mxu0 0
    %1670 = vmatpush2.bf16.msra.mxu0 0
    %1671 = vmatprep.subr.bf16.mxu0 0
    %1672 = vmatpush2.bf16.msra.mxu0 0
    %1673 = vmatprep.subr.bf16.mxu0 0
    %1674 = vmatpush2.bf16.msra.mxu0 0
    %1675 = vmatprep.subr.bf16.mxu0 0
    %1676 = vmatpush2.bf16.msra.mxu0 0
    %1677 = vmatprep.subr.bf16.mxu0 0
    %1678 = vmatpush2.bf16.msra.mxu0 0
    %1679 = vmatprep.mubr.bf16.mxu0 0
    %1680 = vmatmul.mubr.bf16.gmra.mxu0 %v1406
    %v1681 = vpop.f32.mrf.mxu0
    %v1682 = vadd.f32 %v1444, %v1681
    %v1683 = vpop.f32.mrf.mxu0
    %v1684 = vadd.f32 %v1445, %v1683
    %v1685 = vpop.f32.mrf.mxu0
    %v1686 = vpop.f32.mrf.mxu0
    %1687 = vdwg.mxu0
    %v1688 = vxor.u32 %v1641, 2147483648
    %v1689 = vxor.u32 %v1643, 2147483648
    %v1690 = vmul.f32 %v1688, 1.442695
    %v1691 = vpow.pop %v1690
    %v1692 = vmul.f32 %v1689, 1.442695
    %v1693 = vpow.pop %v1692
    %v1694 = vadd.f32 %v1691, 1.0
    %v1695 = vadd.f32 %v1693, 1.0
    %v1696 = vrcp.pop %v1694
    %v1697 = vmul.f32 1.0, %v1696
    %v1698 = vrcp.pop %v1695
    %v1699 = vmul.f32 1.0, %v1698
    %v1700 = vtanh.pop %v1682
    %v1701 = vxor.u32 %v1684, 2147483648
    %v1702 = vmul.f32 %v1701, 1.442695
    %v1703 = vpow.pop %v1702
    %v1704 = vadd.f32 %v1703, 1.0
    %v1705 = vrcp.pop %v1704
    %v1706 = vmul.f32 1.0, %v1705
    %v1707 = vmul.f32 %v1699, %v1397
    %v1708 = vmul.f32 %v1697, %v1700
    %v1709 = vadd.f32 %v1707, %v1708
    %v1710 = vtanh.pop %v1709
    %v1711 = vmul.f32 %v1706, %v1710
    %v1712 = vmul.f32 %v1711, %v768
    %1713 = vadd.xlane.f32.xlu0 %v1712
    %v1714 = vpop.xlane.xlu0 %1713
    %v1715 = vadd.f32 %v1714, %v777
    %s1716 = scalar_lea.vmem %s8, 24
    %1717 = vst.msk [vmem:[%s1716] sm:$0xff] %vm780, %v1715
    %v1718 = vpack.c.bf16 %v1711, %v1711
    %v1719 = vld [vmem:[#allocation4] sm:$0xff]
    %v1720 = vld [vmem:[#allocation4 + $0x8] sm:$0xff]
    %v1721 = vld [vmem:[#allocation4 + $0x10] sm:$0xff]
    %v1722 = vld [vmem:[#allocation4 + $0x18] sm:$0xff]
    %v1723 = vld [vmem:[#allocation4 + $0x20] sm:$0xff]
    %v1724 = vld [vmem:[#allocation4 + $0x28] sm:$0xff]
    %v1725 = vld [vmem:[#allocation4 + $0x30] sm:$0xff]
    %v1726 = vld [vmem:[#allocation4 + $0x38] sm:$0xff]
    %v1727 = vld [vmem:[#allocation4 + $0x40] sm:$0xff]
    %v1728 = vld [vmem:[#allocation4 + $0x48] sm:$0xff]
    %v1729 = vld [vmem:[#allocation4 + $0x50] sm:$0xff]
    %v1730 = vld [vmem:[#allocation4 + $0x58] sm:$0xff]
    %v1731 = vld [vmem:[#allocation4 + $0x60] sm:$0xff]
    %v1732 = vld [vmem:[#allocation4 + $0x68] sm:$0xff]
    %v1733 = vld [vmem:[#allocation4 + $0x70] sm:$0xff]
    %v1734 = vld [vmem:[#allocation4 + $0x78] sm:$0xff]
    %v1735 = vld [vmem:[#allocation4 + $0x80] sm:$0xff]
    %v1736 = vld [vmem:[#allocation4 + $0x88] sm:$0xff]
    %v1737 = vld [vmem:[#allocation4 + $0x90] sm:$0xff]
    %v1738 = vld [vmem:[#allocation4 + $0x98] sm:$0xff]
    %v1739 = vld [vmem:[#allocation4 + $0xa0] sm:$0xff]
    %v1740 = vld [vmem:[#allocation4 + $0xa8] sm:$0xff]
    %v1741 = vld [vmem:[#allocation4 + $0xb0] sm:$0xff]
    %v1742 = vld [vmem:[#allocation4 + $0xb8] sm:$0xff]
    %v1743 = vld [vmem:[#allocation4 + $0xc0] sm:$0xff]
    %v1744 = vld [vmem:[#allocation4 + $0xc8] sm:$0xff]
    %v1745 = vld [vmem:[#allocation4 + $0xd0] sm:$0xff]
    %v1746 = vld [vmem:[#allocation4 + $0xd8] sm:$0xff]
    %v1747 = vld [vmem:[#allocation4 + $0xe0] sm:$0xff]
    %v1748 = vld [vmem:[#allocation4 + $0xe8] sm:$0xff]
    %v1749 = vld [vmem:[#allocation4 + $0xf0] sm:$0xff]
    %v1750 = vld [vmem:[#allocation4 + $0xf8] sm:$0xff]
    %s1751 = smul.u32 4, 4
    %s1752 = smul.addr %s1751, 8
    %s1753 = scalar_lea.vmem [#allocation2], %s1752
    %v1754 = vld [vmem:[%s1753] sm:$0xff]
    %v1755 = vld [vmem:[%s1753 + $0x8] sm:$0xff]
    %v1756 = vld [vmem:[%s1753 + $0x10] sm:$0xff]
    %v1757 = vld [vmem:[%s1753 + $0x18] sm:$0xff]
    %v1790 = vunpack.c.l.b16 %v1719
    %v1791 = vunpack.c.h.b16 %v1719
    %v1792 = vunpack.c.l.b16 %v1720
    %v1793 = vunpack.c.h.b16 %v1720
    %v1794 = vunpack.c.l.b16 %v1721
    %v1795 = vunpack.c.h.b16 %v1721
    %v1796 = vunpack.c.l.b16 %v1722
    %v1797 = vunpack.c.h.b16 %v1722
    %v1798 = vunpack.c.l.b16 %v1723
    %v1799 = vunpack.c.h.b16 %v1723
    %v1800 = vunpack.c.l.b16 %v1724
    %v1801 = vunpack.c.h.b16 %v1724
    %v1802 = vunpack.c.l.b16 %v1725
    %v1803 = vunpack.c.h.b16 %v1725
    %v1804 = vunpack.c.l.b16 %v1726
    %v1805 = vunpack.c.h.b16 %v1726
    %v1806 = vunpack.c.l.b16 %v1727
    %v1807 = vunpack.c.h.b16 %v1727
    %v1808 = vunpack.c.l.b16 %v1728
    %v1809 = vunpack.c.h.b16 %v1728
    %v1810 = vunpack.c.l.b16 %v1729
    %v1811 = vunpack.c.h.b16 %v1729
    %v1812 = vunpack.c.l.b16 %v1730
    %v1813 = vunpack.c.h.b16 %v1730
    %v1814 = vunpack.c.l.b16 %v1731
    %v1815 = vunpack.c.h.b16 %v1731
    %v1816 = vunpack.c.l.b16 %v1732
    %v1817 = vunpack.c.h.b16 %v1732
    %v1818 = vunpack.c.l.b16 %v1733
    %v1819 = vunpack.c.h.b16 %v1733
    %v1820 = vunpack.c.l.b16 %v1734
    %v1821 = vunpack.c.h.b16 %v1734
    %v1822 = vunpack.c.l.b16 %v1735
    %v1823 = vunpack.c.h.b16 %v1735
    %v1824 = vunpack.c.l.b16 %v1736
    %v1825 = vunpack.c.h.b16 %v1736
    %v1826 = vunpack.c.l.b16 %v1737
    %v1827 = vunpack.c.h.b16 %v1737
    %v1828 = vunpack.c.l.b16 %v1738
    %v1829 = vunpack.c.h.b16 %v1738
    %v1830 = vunpack.c.l.b16 %v1739
    %v1831 = vunpack.c.h.b16 %v1739
    %v1832 = vunpack.c.l.b16 %v1740
    %v1833 = vunpack.c.h.b16 %v1740
    %v1834 = vunpack.c.l.b16 %v1741
    %v1835 = vunpack.c.h.b16 %v1741
    %v1836 = vunpack.c.l.b16 %v1742
    %v1837 = vunpack.c.h.b16 %v1742
    %v1838 = vunpack.c.l.b16 %v1743
    %v1839 = vunpack.c.h.b16 %v1743
    %v1840 = vunpack.c.l.b16 %v1744
    %v1841 = vunpack.c.h.b16 %v1744
    %v1842 = vunpack.c.l.b16 %v1745
    %v1843 = vunpack.c.h.b16 %v1745
    %v1844 = vunpack.c.l.b16 %v1746
    %v1845 = vunpack.c.h.b16 %v1746
    %v1846 = vunpack.c.l.b16 %v1747
    %v1847 = vunpack.c.h.b16 %v1747
    %v1848 = vunpack.c.l.b16 %v1748
    %v1849 = vunpack.c.h.b16 %v1748
    %v1850 = vunpack.c.l.b16 %v1749
    %v1851 = vunpack.c.h.b16 %v1749
    %v1852 = vunpack.c.l.b16 %v1750
    %v1853 = vunpack.c.h.b16 %v1750
    %v1854 = vpack.c.b16 %v1794, %v1790
    %v1855 = vpack.c.b16 %v1795, %v1791
    %v1856 = vpack.c.b16 %v1796, %v1792
    %v1857 = vpack.c.b16 %v1797, %v1793
    %v1858 = vpack.c.b16 %v1802, %v1798
    %v1859 = vpack.c.b16 %v1803, %v1799
    %v1860 = vpack.c.b16 %v1804, %v1800
    %v1861 = vpack.c.b16 %v1805, %v1801
    %v1862 = vpack.c.b16 %v1810, %v1806
    %v1863 = vpack.c.b16 %v1811, %v1807
    %v1864 = vpack.c.b16 %v1812, %v1808
    %v1865 = vpack.c.b16 %v1813, %v1809
    %v1866 = vpack.c.b16 %v1818, %v1814
    %v1867 = vpack.c.b16 %v1819, %v1815
    %v1868 = vpack.c.b16 %v1820, %v1816
    %v1869 = vpack.c.b16 %v1821, %v1817
    %v1870 = vpack.c.b16 %v1826, %v1822
    %v1871 = vpack.c.b16 %v1827, %v1823
    %v1872 = vpack.c.b16 %v1828, %v1824
    %v1873 = vpack.c.b16 %v1829, %v1825
    %v1874 = vpack.c.b16 %v1834, %v1830
    %v1875 = vpack.c.b16 %v1835, %v1831
    %v1876 = vpack.c.b16 %v1836, %v1832
    %v1877 = vpack.c.b16 %v1837, %v1833
    %v1878 = vpack.c.b16 %v1842, %v1838
    %v1879 = vpack.c.b16 %v1843, %v1839
    %v1880 = vpack.c.b16 %v1844, %v1840
    %v1881 = vpack.c.b16 %v1845, %v1841
    %v1882 = vpack.c.b16 %v1850, %v1846
    %v1883 = vpack.c.b16 %v1851, %v1847
    %v1884 = vpack.c.b16 %v1852, %v1848
    %v1885 = vpack.c.b16 %v1853, %v1849
    %1918 = vmatprep.subr.bf16.mxu0 %v1883
    %1919 = vmatpush1.bf16.msra.mxu0 %v1882
    %1920 = vmatprep.subr.bf16.mxu0 %v1879
    %1921 = vmatpush1.bf16.msra.mxu0 %v1878
    %1922 = vmatprep.subr.bf16.mxu0 %v1875
    %1923 = vmatpush1.bf16.msra.mxu0 %v1874
    %1924 = vmatprep.subr.bf16.mxu0 %v1871
    %1925 = vmatpush1.bf16.msra.mxu0 %v1870
    %1926 = vmatprep.subr.bf16.mxu0 %v1867
    %1927 = vmatpush1.bf16.msra.mxu0 %v1866
    %1928 = vmatprep.subr.bf16.mxu0 %v1863
    %1929 = vmatpush1.bf16.msra.mxu0 %v1862
    %1930 = vmatprep.subr.bf16.mxu0 %v1859
    %1931 = vmatpush1.bf16.msra.mxu0 %v1858
    %1932 = vmatprep.subr.bf16.mxu0 %v1855
    %1933 = vmatpush1.bf16.msra.mxu0 %v1854
    %1934 = vmatprep.subr.bf16.mxu0 0
    %1935 = vmatpush2.bf16.msra.mxu0 0
    %1936 = vmatprep.subr.bf16.mxu0 0
    %1937 = vmatpush2.bf16.msra.mxu0 0
    %1938 = vmatprep.subr.bf16.mxu0 0
    %1939 = vmatpush2.bf16.msra.mxu0 0
    %1940 = vmatprep.subr.bf16.mxu0 0
    %1941 = vmatpush2.bf16.msra.mxu0 0
    %1942 = vmatprep.subr.bf16.mxu0 0
    %1943 = vmatpush2.bf16.msra.mxu0 0
    %1944 = vmatprep.subr.bf16.mxu0 0
    %1945 = vmatpush2.bf16.msra.mxu0 0
    %1946 = vmatprep.subr.bf16.mxu0 0
    %1947 = vmatpush2.bf16.msra.mxu0 0
    %1948 = vmatprep.subr.bf16.mxu0 0
    %1949 = vmatpush2.bf16.msra.mxu0 0
    %1950 = vmatprep.mubr.bf16.mxu0 0
    %1951 = vmatmul.mubr.bf16.gmra.mxu0 %v1718
    %v1952 = vpop.f32.mrf.mxu0
    %v1953 = vadd.f32 %v1754, %v1952
    %v1954 = vpop.f32.mrf.mxu0
    %v1955 = vadd.f32 %v1755, %v1954
    %v1956 = vpop.f32.mrf.mxu0
    %v1957 = vpop.f32.mrf.mxu0
    %1958 = vdwg.mxu0
    %1959 = vmatprep.subr.bf16.mxu0 %v1885
    %1960 = vmatpush1.bf16.msra.mxu0 %v1884
    %1961 = vmatprep.subr.bf16.mxu0 %v1881
    %1962 = vmatpush1.bf16.msra.mxu0 %v1880
    %1963 = vmatprep.subr.bf16.mxu0 %v1877
    %1964 = vmatpush1.bf16.msra.mxu0 %v1876
    %1965 = vmatprep.subr.bf16.mxu0 %v1873
    %1966 = vmatpush1.bf16.msra.mxu0 %v1872
    %1967 = vmatprep.subr.bf16.mxu0 %v1869
    %1968 = vmatpush1.bf16.msra.mxu0 %v1868
    %1969 = vmatprep.subr.bf16.mxu0 %v1865
    %1970 = vmatpush1.bf16.msra.mxu0 %v1864
    %1971 = vmatprep.subr.bf16.mxu0 %v1861
    %1972 = vmatpush1.bf16.msra.mxu0 %v1860
    %1973 = vmatprep.subr.bf16.mxu0 %v1857
    %1974 = vmatpush1.bf16.msra.mxu0 %v1856
    %1975 = vmatprep.subr.bf16.mxu0 0
    %1976 = vmatpush2.bf16.msra.mxu0 0
    %1977 = vmatprep.subr.bf16.mxu0 0
    %1978 = vmatpush2.bf16.msra.mxu0 0
    %1979 = vmatprep.subr.bf16.mxu0 0
    %1980 = vmatpush2.bf16.msra.mxu0 0
    %1981 = vmatprep.subr.bf16.mxu0 0
    %1982 = vmatpush2.bf16.msra.mxu0 0
    %1983 = vmatprep.subr.bf16.mxu0 0
    %1984 = vmatpush2.bf16.msra.mxu0 0
    %1985 = vmatprep.subr.bf16.mxu0 0
    %1986 = vmatpush2.bf16.msra.mxu0 0
    %1987 = vmatprep.subr.bf16.mxu0 0
    %1988 = vmatpush2.bf16.msra.mxu0 0
    %1989 = vmatprep.subr.bf16.mxu0 0
    %1990 = vmatpush2.bf16.msra.mxu0 0
    %1991 = vmatprep.mubr.bf16.mxu0 0
    %1992 = vmatmul.mubr.bf16.gmra.mxu0 %v1718
    %v1993 = vpop.f32.mrf.mxu0
    %v1994 = vadd.f32 %v1756, %v1993
    %v1995 = vpop.f32.mrf.mxu0
    %v1996 = vadd.f32 %v1757, %v1995
    %v1997 = vpop.f32.mrf.mxu0
    %v1998 = vpop.f32.mrf.mxu0
    %1999 = vdwg.mxu0
    %v2000 = vxor.u32 %v1953, 2147483648
    %v2001 = vxor.u32 %v1955, 2147483648
    %v2002 = vmul.f32 %v2000, 1.442695
    %v2003 = vpow.pop %v2002
    %v2004 = vmul.f32 %v2001, 1.442695
    %v2005 = vpow.pop %v2004
    %v2006 = vadd.f32 %v2003, 1.0
    %v2007 = vadd.f32 %v2005, 1.0
    %v2008 = vrcp.pop %v2006
    %v2009 = vmul.f32 1.0, %v2008
    %v2010 = vrcp.pop %v2007
    %v2011 = vmul.f32 1.0, %v2010
    %v2012 = vtanh.pop %v1994
    %v2013 = vxor.u32 %v1996, 2147483648
    %v2014 = vmul.f32 %v2013, 1.442695
    %v2015 = vpow.pop %v2014
    %v2016 = vadd.f32 %v2015, 1.0
    %v2017 = vrcp.pop %v2016
    %v2018 = vmul.f32 1.0, %v2017
    %v2019 = vmul.f32 %v2011, %v1709
    %v2020 = vmul.f32 %v2009, %v2012
    %v2021 = vadd.f32 %v2019, %v2020
    %v2022 = vtanh.pop %v2021
    %v2023 = vmul.f32 %v2018, %v2022
    %v2024 = vmul.f32 %v2023, %v768
    %2025 = vadd.xlane.f32.xlu0 %v2024
    %v2026 = vpop.xlane.xlu0 %2025
    %v2027 = vadd.f32 %v2026, %v777
    %s2028 = scalar_lea.vmem %s8, 32
    %2029 = vst.msk [vmem:[%s2028] sm:$0xff] %vm780, %v2027
    %v2030 = vpack.c.bf16 %v2023, %v2023
    %v2031 = vld [vmem:[#allocation4] sm:$0xff]
    %v2032 = vld [vmem:[#allocation4 + $0x8] sm:$0xff]
    %v2033 = vld [vmem:[#allocation4 + $0x10] sm:$0xff]
    %v2034 = vld [vmem:[#allocation4 + $0x18] sm:$0xff]
    %v2035 = vld [vmem:[#allocation4 + $0x20] sm:$0xff]
    %v2036 = vld [vmem:[#allocation4 + $0x28] sm:$0xff]
    %v2037 = vld [vmem:[#allocation4 + $0x30] sm:$0xff]
    %v2038 = vld [vmem:[#allocation4 + $0x38] sm:$0xff]
    %v2039 = vld [vmem:[#allocation4 + $0x40] sm:$0xff]
    %v2040 = vld [vmem:[#allocation4 + $0x48] sm:$0xff]
    %v2041 = vld [vmem:[#allocation4 + $0x50] sm:$0xff]
    %v2042 = vld [vmem:[#allocation4 + $0x58] sm:$0xff]
    %v2043 = vld [vmem:[#allocation4 + $0x60] sm:$0xff]
    %v2044 = vld [vmem:[#allocation4 + $0x68] sm:$0xff]
    %v2045 = vld [vmem:[#allocation4 + $0x70] sm:$0xff]
    %v2046 = vld [vmem:[#allocation4 + $0x78] sm:$0xff]
    %v2047 = vld [vmem:[#allocation4 + $0x80] sm:$0xff]
    %v2048 = vld [vmem:[#allocation4 + $0x88] sm:$0xff]
    %v2049 = vld [vmem:[#allocation4 + $0x90] sm:$0xff]
    %v2050 = vld [vmem:[#allocation4 + $0x98] sm:$0xff]
    %v2051 = vld [vmem:[#allocation4 + $0xa0] sm:$0xff]
    %v2052 = vld [vmem:[#allocation4 + $0xa8] sm:$0xff]
    %v2053 = vld [vmem:[#allocation4 + $0xb0] sm:$0xff]
    %v2054 = vld [vmem:[#allocation4 + $0xb8] sm:$0xff]
    %v2055 = vld [vmem:[#allocation4 + $0xc0] sm:$0xff]
    %v2056 = vld [vmem:[#allocation4 + $0xc8] sm:$0xff]
    %v2057 = vld [vmem:[#allocation4 + $0xd0] sm:$0xff]
    %v2058 = vld [vmem:[#allocation4 + $0xd8] sm:$0xff]
    %v2059 = vld [vmem:[#allocation4 + $0xe0] sm:$0xff]
    %v2060 = vld [vmem:[#allocation4 + $0xe8] sm:$0xff]
    %v2061 = vld [vmem:[#allocation4 + $0xf0] sm:$0xff]
    %v2062 = vld [vmem:[#allocation4 + $0xf8] sm:$0xff]
    %s2063 = smul.u32 5, 4
    %s2064 = smul.addr %s2063, 8
    %s2065 = scalar_lea.vmem [#allocation2], %s2064
    %v2066 = vld [vmem:[%s2065] sm:$0xff]
    %v2067 = vld [vmem:[%s2065 + $0x8] sm:$0xff]
    %v2068 = vld [vmem:[%s2065 + $0x10] sm:$0xff]
    %v2069 = vld [vmem:[%s2065 + $0x18] sm:$0xff]
    %v2102 = vunpack.c.l.b16 %v2031
    %v2103 = vunpack.c.h.b16 %v2031
    %v2104 = vunpack.c.l.b16 %v2032
    %v2105 = vunpack.c.h.b16 %v2032
    %v2106 = vunpack.c.l.b16 %v2033
    %v2107 = vunpack.c.h.b16 %v2033
    %v2108 = vunpack.c.l.b16 %v2034
    %v2109 = vunpack.c.h.b16 %v2034
    %v2110 = vunpack.c.l.b16 %v2035
    %v2111 = vunpack.c.h.b16 %v2035
    %v2112 = vunpack.c.l.b16 %v2036
    %v2113 = vunpack.c.h.b16 %v2036
    %v2114 = vunpack.c.l.b16 %v2037
    %v2115 = vunpack.c.h.b16 %v2037
    %v2116 = vunpack.c.l.b16 %v2038
    %v2117 = vunpack.c.h.b16 %v2038
    %v2118 = vunpack.c.l.b16 %v2039
    %v2119 = vunpack.c.h.b16 %v2039
    %v2120 = vunpack.c.l.b16 %v2040
    %v2121 = vunpack.c.h.b16 %v2040
    %v2122 = vunpack.c.l.b16 %v2041
    %v2123 = vunpack.c.h.b16 %v2041
    %v2124 = vunpack.c.l.b16 %v2042
    %v2125 = vunpack.c.h.b16 %v2042
    %v2126 = vunpack.c.l.b16 %v2043
    %v2127 = vunpack.c.h.b16 %v2043
    %v2128 = vunpack.c.l.b16 %v2044
    %v2129 = vunpack.c.h.b16 %v2044
    %v2130 = vunpack.c.l.b16 %v2045
    %v2131 = vunpack.c.h.b16 %v2045
    %v2132 = vunpack.c.l.b16 %v2046
    %v2133 = vunpack.c.h.b16 %v2046
    %v2134 = vunpack.c.l.b16 %v2047
    %v2135 = vunpack.c.h.b16 %v2047
    %v2136 = vunpack.c.l.b16 %v2048
    %v2137 = vunpack.c.h.b16 %v2048
    %v2138 = vunpack.c.l.b16 %v2049
    %v2139 = vunpack.c.h.b16 %v2049
    %v2140 = vunpack.c.l.b16 %v2050
    %v2141 = vunpack.c.h.b16 %v2050
    %v2142 = vunpack.c.l.b16 %v2051
    %v2143 = vunpack.c.h.b16 %v2051
    %v2144 = vunpack.c.l.b16 %v2052
    %v2145 = vunpack.c.h.b16 %v2052
    %v2146 = vunpack.c.l.b16 %v2053
    %v2147 = vunpack.c.h.b16 %v2053
    %v2148 = vunpack.c.l.b16 %v2054
    %v2149 = vunpack.c.h.b16 %v2054
    %v2150 = vunpack.c.l.b16 %v2055
    %v2151 = vunpack.c.h.b16 %v2055
    %v2152 = vunpack.c.l.b16 %v2056
    %v2153 = vunpack.c.h.b16 %v2056
    %v2154 = vunpack.c.l.b16 %v2057
    %v2155 = vunpack.c.h.b16 %v2057
    %v2156 = vunpack.c.l.b16 %v2058
    %v2157 = vunpack.c.h.b16 %v2058
    %v2158 = vunpack.c.l.b16 %v2059
    %v2159 = vunpack.c.h.b16 %v2059
    %v2160 = vunpack.c.l.b16 %v2060
    %v2161 = vunpack.c.h.b16 %v2060
    %v2162 = vunpack.c.l.b16 %v2061
    %v2163 = vunpack.c.h.b16 %v2061
    %v2164 = vunpack.c.l.b16 %v2062
    %v2165 = vunpack.c.h.b16 %v2062
    %v2166 = vpack.c.b16 %v2106, %v2102
    %v2167 = vpack.c.b16 %v2107, %v2103
    %v2168 = vpack.c.b16 %v2108, %v2104
    %v2169 = vpack.c.b16 %v2109, %v2105
    %v2170 = vpack.c.b16 %v2114, %v2110
    %v2171 = vpack.c.b16 %v2115, %v2111
    %v2172 = vpack.c.b16 %v2116, %v2112
    %v2173 = vpack.c.b16 %v2117, %v2113
    %v2174 = vpack.c.b16 %v2122, %v2118
    %v2175 = vpack.c.b16 %v2123, %v2119
    %v2176 = vpack.c.b16 %v2124, %v2120
    %v2177 = vpack.c.b16 %v2125, %v2121
    %v2178 = vpack.c.b16 %v2130, %v2126
    %v2179 = vpack.c.b16 %v2131, %v2127
    %v2180 = vpack.c.b16 %v2132, %v2128
    %v2181 = vpack.c.b16 %v2133, %v2129
    %v2182 = vpack.c.b16 %v2138, %v2134
    %v2183 = vpack.c.b16 %v2139, %v2135
    %v2184 = vpack.c.b16 %v2140, %v2136
    %v2185 = vpack.c.b16 %v2141, %v2137
    %v2186 = vpack.c.b16 %v2146, %v2142
    %v2187 = vpack.c.b16 %v2147, %v2143
    %v2188 = vpack.c.b16 %v2148, %v2144
    %v2189 = vpack.c.b16 %v2149, %v2145
    %v2190 = vpack.c.b16 %v2154, %v2150
    %v2191 = vpack.c.b16 %v2155, %v2151
    %v2192 = vpack.c.b16 %v2156, %v2152
    %v2193 = vpack.c.b16 %v2157, %v2153
    %v2194 = vpack.c.b16 %v2162, %v2158
    %v2195 = vpack.c.b16 %v2163, %v2159
    %v2196 = vpack.c.b16 %v2164, %v2160
    %v2197 = vpack.c.b16 %v2165, %v2161
    %2230 = vmatprep.subr.bf16.mxu0 %v2195
    %2231 = vmatpush1.bf16.msra.mxu0 %v2194
    %2232 = vmatprep.subr.bf16.mxu0 %v2191
    %2233 = vmatpush1.bf16.msra.mxu0 %v2190
    %2234 = vmatprep.subr.bf16.mxu0 %v2187
    %2235 = vmatpush1.bf16.msra.mxu0 %v2186
    %2236 = vmatprep.subr.bf16.mxu0 %v2183
    %2237 = vmatpush1.bf16.msra.mxu0 %v2182
    %2238 = vmatprep.subr.bf16.mxu0 %v2179
    %2239 = vmatpush1.bf16.msra.mxu0 %v2178
    %2240 = vmatprep.subr.bf16.mxu0 %v2175
    %2241 = vmatpush1.bf16.msra.mxu0 %v2174
    %2242 = vmatprep.subr.bf16.mxu0 %v2171
    %2243 = vmatpush1.bf16.msra.mxu0 %v2170
    %2244 = vmatprep.subr.bf16.mxu0 %v2167
    %2245 = vmatpush1.bf16.msra.mxu0 %v2166
    %2246 = vmatprep.subr.bf16.mxu0 0
    %2247 = vmatpush2.bf16.msra.mxu0 0
    %2248 = vmatprep.subr.bf16.mxu0 0
    %2249 = vmatpush2.bf16.msra.mxu0 0
    %2250 = vmatprep.subr.bf16.mxu0 0
    %2251 = vmatpush2.bf16.msra.mxu0 0
    %2252 = vmatprep.subr.bf16.mxu0 0
    %2253 = vmatpush2.bf16.msra.mxu0 0
    %2254 = vmatprep.subr.bf16.mxu0 0
    %2255 = vmatpush2.bf16.msra.mxu0 0
    %2256 = vmatprep.subr.bf16.mxu0 0
    %2257 = vmatpush2.bf16.msra.mxu0 0
    %2258 = vmatprep.subr.bf16.mxu0 0
    %2259 = vmatpush2.bf16.msra.mxu0 0
    %2260 = vmatprep.subr.bf16.mxu0 0
    %2261 = vmatpush2.bf16.msra.mxu0 0
    %2262 = vmatprep.mubr.bf16.mxu0 0
    %2263 = vmatmul.mubr.bf16.gmra.mxu0 %v2030
    %v2264 = vpop.f32.mrf.mxu0
    %v2265 = vadd.f32 %v2066, %v2264
    %v2266 = vpop.f32.mrf.mxu0
    %v2267 = vadd.f32 %v2067, %v2266
    %v2268 = vpop.f32.mrf.mxu0
    %v2269 = vpop.f32.mrf.mxu0
    %2270 = vdwg.mxu0
    %2271 = vmatprep.subr.bf16.mxu0 %v2197
    %2272 = vmatpush1.bf16.msra.mxu0 %v2196
    %2273 = vmatprep.subr.bf16.mxu0 %v2193
    %2274 = vmatpush1.bf16.msra.mxu0 %v2192
    %2275 = vmatprep.subr.bf16.mxu0 %v2189
    %2276 = vmatpush1.bf16.msra.mxu0 %v2188
    %2277 = vmatprep.subr.bf16.mxu0 %v2185
    %2278 = vmatpush1.bf16.msra.mxu0 %v2184
    %2279 = vmatprep.subr.bf16.mxu0 %v2181
    %2280 = vmatpush1.bf16.msra.mxu0 %v2180
    %2281 = vmatprep.subr.bf16.mxu0 %v2177
    %2282 = vmatpush1.bf16.msra.mxu0 %v2176
    %2283 = vmatprep.subr.bf16.mxu0 %v2173
    %2284 = vmatpush1.bf16.msra.mxu0 %v2172
    %2285 = vmatprep.subr.bf16.mxu0 %v2169
    %2286 = vmatpush1.bf16.msra.mxu0 %v2168
    %2287 = vmatprep.subr.bf16.mxu0 0
    %2288 = vmatpush2.bf16.msra.mxu0 0
    %2289 = vmatprep.subr.bf16.mxu0 0
    %2290 = vmatpush2.bf16.msra.mxu0 0
    %2291 = vmatprep.subr.bf16.mxu0 0
    %2292 = vmatpush2.bf16.msra.mxu0 0
    %2293 = vmatprep.subr.bf16.mxu0 0
    %2294 = vmatpush2.bf16.msra.mxu0 0
    %2295 = vmatprep.subr.bf16.mxu0 0
    %2296 = vmatpush2.bf16.msra.mxu0 0
    %2297 = vmatprep.subr.bf16.mxu0 0
    %2298 = vmatpush2.bf16.msra.mxu0 0
    %2299 = vmatprep.subr.bf16.mxu0 0
    %2300 = vmatpush2.bf16.msra.mxu0 0
    %2301 = vmatprep.subr.bf16.mxu0 0
    %2302 = vmatpush2.bf16.msra.mxu0 0
    %2303 = vmatprep.mubr.bf16.mxu0 0
    %2304 = vmatmul.mubr.bf16.gmra.mxu0 %v2030
    %v2305 = vpop.f32.mrf.mxu0
    %v2306 = vadd.f32 %v2068, %v2305
    %v2307 = vpop.f32.mrf.mxu0
    %v2308 = vadd.f32 %v2069, %v2307
    %v2309 = vpop.f32.mrf.mxu0
    %v2310 = vpop.f32.mrf.mxu0
    %2311 = vdwg.mxu0
    %v2312 = vxor.u32 %v2265, 2147483648
    %v2313 = vxor.u32 %v2267, 2147483648
    %v2314 = vmul.f32 %v2312, 1.442695
    %v2315 = vpow.pop %v2314
    %v2316 = vmul.f32 %v2313, 1.442695
    %v2317 = vpow.pop %v2316
    %v2318 = vadd.f32 %v2315, 1.0
    %v2319 = vadd.f32 %v2317, 1.0
    %v2320 = vrcp.pop %v2318
    %v2321 = vmul.f32 1.0, %v2320
    %v2322 = vrcp.pop %v2319
    %v2323 = vmul.f32 1.0, %v2322
    %v2324 = vtanh.pop %v2306
    %v2325 = vxor.u32 %v2308, 2147483648
    %v2326 = vmul.f32 %v2325, 1.442695
    %v2327 = vpow.pop %v2326
    %v2328 = vadd.f32 %v2327, 1.0
    %v2329 = vrcp.pop %v2328
    %v2330 = vmul.f32 1.0, %v2329
    %v2331 = vmul.f32 %v2323, %v2021
    %v2332 = vmul.f32 %v2321, %v2324
    %v2333 = vadd.f32 %v2331, %v2332
    %v2334 = vtanh.pop %v2333
    %v2335 = vmul.f32 %v2330, %v2334
    %v2336 = vmul.f32 %v2335, %v768
    %2337 = vadd.xlane.f32.xlu0 %v2336
    %v2338 = vpop.xlane.xlu0 %2337
    %v2339 = vadd.f32 %v2338, %v777
    %s2340 = scalar_lea.vmem %s8, 40
    %2341 = vst.msk [vmem:[%s2340] sm:$0xff] %vm780, %v2339
    %v2342 = vpack.c.bf16 %v2335, %v2335
    %v2343 = vld [vmem:[#allocation4] sm:$0xff]
    %v2344 = vld [vmem:[#allocation4 + $0x8] sm:$0xff]
    %v2345 = vld [vmem:[#allocation4 + $0x10] sm:$0xff]
    %v2346 = vld [vmem:[#allocation4 + $0x18] sm:$0xff]
    %v2347 = vld [vmem:[#allocation4 + $0x20] sm:$0xff]
    %v2348 = vld [vmem:[#allocation4 + $0x28] sm:$0xff]
    %v2349 = vld [vmem:[#allocation4 + $0x30] sm:$0xff]
    %v2350 = vld [vmem:[#allocation4 + $0x38] sm:$0xff]
    %v2351 = vld [vmem:[#allocation4 + $0x40] sm:$0xff]
    %v2352 = vld [vmem:[#allocation4 + $0x48] sm:$0xff]
    %v2353 = vld [vmem:[#allocation4 + $0x50] sm:$0xff]
    %v2354 = vld [vmem:[#allocation4 + $0x58] sm:$0xff]
    %v2355 = vld [vmem:[#allocation4 + $0x60] sm:$0xff]
    %v2356 = vld [vmem:[#allocation4 + $0x68] sm:$0xff]
    %v2357 = vld [vmem:[#allocation4 + $0x70] sm:$0xff]
    %v2358 = vld [vmem:[#allocation4 + $0x78] sm:$0xff]
    %v2359 = vld [vmem:[#allocation4 + $0x80] sm:$0xff]
    %v2360 = vld [vmem:[#allocation4 + $0x88] sm:$0xff]
    %v2361 = vld [vmem:[#allocation4 + $0x90] sm:$0xff]
    %v2362 = vld [vmem:[#allocation4 + $0x98] sm:$0xff]
    %v2363 = vld [vmem:[#allocation4 + $0xa0] sm:$0xff]
    %v2364 = vld [vmem:[#allocation4 + $0xa8] sm:$0xff]
    %v2365 = vld [vmem:[#allocation4 + $0xb0] sm:$0xff]
    %v2366 = vld [vmem:[#allocation4 + $0xb8] sm:$0xff]
    %v2367 = vld [vmem:[#allocation4 + $0xc0] sm:$0xff]
    %v2368 = vld [vmem:[#allocation4 + $0xc8] sm:$0xff]
    %v2369 = vld [vmem:[#allocation4 + $0xd0] sm:$0xff]
    %v2370 = vld [vmem:[#allocation4 + $0xd8] sm:$0xff]
    %v2371 = vld [vmem:[#allocation4 + $0xe0] sm:$0xff]
    %v2372 = vld [vmem:[#allocation4 + $0xe8] sm:$0xff]
    %v2373 = vld [vmem:[#allocation4 + $0xf0] sm:$0xff]
    %v2374 = vld [vmem:[#allocation4 + $0xf8] sm:$0xff]
    %s2375 = smul.u32 6, 4
    %s2376 = smul.addr %s2375, 8
    %s2377 = scalar_lea.vmem [#allocation2], %s2376
    %v2378 = vld [vmem:[%s2377] sm:$0xff]
    %v2379 = vld [vmem:[%s2377 + $0x8] sm:$0xff]
    %v2380 = vld [vmem:[%s2377 + $0x10] sm:$0xff]
    %v2381 = vld [vmem:[%s2377 + $0x18] sm:$0xff]
    %v2414 = vunpack.c.l.b16 %v2343
    %v2415 = vunpack.c.h.b16 %v2343
    %v2416 = vunpack.c.l.b16 %v2344
    %v2417 = vunpack.c.h.b16 %v2344
    %v2418 = vunpack.c.l.b16 %v2345
    %v2419 = vunpack.c.h.b16 %v2345
    %v2420 = vunpack.c.l.b16 %v2346
    %v2421 = vunpack.c.h.b16 %v2346
    %v2422 = vunpack.c.l.b16 %v2347
    %v2423 = vunpack.c.h.b16 %v2347
    %v2424 = vunpack.c.l.b16 %v2348
    %v2425 = vunpack.c.h.b16 %v2348
    %v2426 = vunpack.c.l.b16 %v2349
    %v2427 = vunpack.c.h.b16 %v2349
    %v2428 = vunpack.c.l.b16 %v2350
    %v2429 = vunpack.c.h.b16 %v2350
    %v2430 = vunpack.c.l.b16 %v2351
    %v2431 = vunpack.c.h.b16 %v2351
    %v2432 = vunpack.c.l.b16 %v2352
    %v2433 = vunpack.c.h.b16 %v2352
    %v2434 = vunpack.c.l.b16 %v2353
    %v2435 = vunpack.c.h.b16 %v2353
    %v2436 = vunpack.c.l.b16 %v2354
    %v2437 = vunpack.c.h.b16 %v2354
    %v2438 = vunpack.c.l.b16 %v2355
    %v2439 = vunpack.c.h.b16 %v2355
    %v2440 = vunpack.c.l.b16 %v2356
    %v2441 = vunpack.c.h.b16 %v2356
    %v2442 = vunpack.c.l.b16 %v2357
    %v2443 = vunpack.c.h.b16 %v2357
    %v2444 = vunpack.c.l.b16 %v2358
    %v2445 = vunpack.c.h.b16 %v2358
    %v2446 = vunpack.c.l.b16 %v2359
    %v2447 = vunpack.c.h.b16 %v2359
    %v2448 = vunpack.c.l.b16 %v2360
    %v2449 = vunpack.c.h.b16 %v2360
    %v2450 = vunpack.c.l.b16 %v2361
    %v2451 = vunpack.c.h.b16 %v2361
    %v2452 = vunpack.c.l.b16 %v2362
    %v2453 = vunpack.c.h.b16 %v2362
    %v2454 = vunpack.c.l.b16 %v2363
    %v2455 = vunpack.c.h.b16 %v2363
    %v2456 = vunpack.c.l.b16 %v2364
    %v2457 = vunpack.c.h.b16 %v2364
    %v2458 = vunpack.c.l.b16 %v2365
    %v2459 = vunpack.c.h.b16 %v2365
    %v2460 = vunpack.c.l.b16 %v2366
    %v2461 = vunpack.c.h.b16 %v2366
    %v2462 = vunpack.c.l.b16 %v2367
    %v2463 = vunpack.c.h.b16 %v2367
    %v2464 = vunpack.c.l.b16 %v2368
    %v2465 = vunpack.c.h.b16 %v2368
    %v2466 = vunpack.c.l.b16 %v2369
    %v2467 = vunpack.c.h.b16 %v2369
    %v2468 = vunpack.c.l.b16 %v2370
    %v2469 = vunpack.c.h.b16 %v2370
    %v2470 = vunpack.c.l.b16 %v2371
    %v2471 = vunpack.c.h.b16 %v2371
    %v2472 = vunpack.c.l.b16 %v2372
    %v2473 = vunpack.c.h.b16 %v2372
    %v2474 = vunpack.c.l.b16 %v2373
    %v2475 = vunpack.c.h.b16 %v2373
    %v2476 = vunpack.c.l.b16 %v2374
    %v2477 = vunpack.c.h.b16 %v2374
    %v2478 = vpack.c.b16 %v2418, %v2414
    %v2479 = vpack.c.b16 %v2419, %v2415
    %v2480 = vpack.c.b16 %v2420, %v2416
    %v2481 = vpack.c.b16 %v2421, %v2417
    %v2482 = vpack.c.b16 %v2426, %v2422
    %v2483 = vpack.c.b16 %v2427, %v2423
    %v2484 = vpack.c.b16 %v2428, %v2424
    %v2485 = vpack.c.b16 %v2429, %v2425
    %v2486 = vpack.c.b16 %v2434, %v2430
    %v2487 = vpack.c.b16 %v2435, %v2431
    %v2488 = vpack.c.b16 %v2436, %v2432
    %v2489 = vpack.c.b16 %v2437, %v2433
    %v2490 = vpack.c.b16 %v2442, %v2438
    %v2491 = vpack.c.b16 %v2443, %v2439
    %v2492 = vpack.c.b16 %v2444, %v2440
    %v2493 = vpack.c.b16 %v2445, %v2441
    %v2494 = vpack.c.b16 %v2450, %v2446
    %v2495 = vpack.c.b16 %v2451, %v2447
    %v2496 = vpack.c.b16 %v2452, %v2448
    %v2497 = vpack.c.b16 %v2453, %v2449
    %v2498 = vpack.c.b16 %v2458, %v2454
    %v2499 = vpack.c.b16 %v2459, %v2455
    %v2500 = vpack.c.b16 %v2460, %v2456
    %v2501 = vpack.c.b16 %v2461, %v2457
    %v2502 = vpack.c.b16 %v2466, %v2462
    %v2503 = vpack.c.b16 %v2467, %v2463
    %v2504 = vpack.c.b16 %v2468, %v2464
    %v2505 = vpack.c.b16 %v2469, %v2465
    %v2506 = vpack.c.b16 %v2474, %v2470
    %v2507 = vpack.c.b16 %v2475, %v2471
    %v2508 = vpack.c.b16 %v2476, %v2472
    %v2509 = vpack.c.b16 %v2477, %v2473
    %2542 = vmatprep.subr.bf16.mxu0 %v2507
    %2543 = vmatpush1.bf16.msra.mxu0 %v2506
    %2544 = vmatprep.subr.bf16.mxu0 %v2503
    %2545 = vmatpush1.bf16.msra.mxu0 %v2502
    %2546 = vmatprep.subr.bf16.mxu0 %v2499
    %2547 = vmatpush1.bf16.msra.mxu0 %v2498
    %2548 = vmatprep.subr.bf16.mxu0 %v2495
    %2549 = vmatpush1.bf16.msra.mxu0 %v2494
    %2550 = vmatprep.subr.bf16.mxu0 %v2491
    %2551 = vmatpush1.bf16.msra.mxu0 %v2490
    %2552 = vmatprep.subr.bf16.mxu0 %v2487
    %2553 = vmatpush1.bf16.msra.mxu0 %v2486
    %2554 = vmatprep.subr.bf16.mxu0 %v2483
    %2555 = vmatpush1.bf16.msra.mxu0 %v2482
    %2556 = vmatprep.subr.bf16.mxu0 %v2479
    %2557 = vmatpush1.bf16.msra.mxu0 %v2478
    %2558 = vmatprep.subr.bf16.mxu0 0
    %2559 = vmatpush2.bf16.msra.mxu0 0
    %2560 = vmatprep.subr.bf16.mxu0 0
    %2561 = vmatpush2.bf16.msra.mxu0 0
    %2562 = vmatprep.subr.bf16.mxu0 0
    %2563 = vmatpush2.bf16.msra.mxu0 0
    %2564 = vmatprep.subr.bf16.mxu0 0
    %2565 = vmatpush2.bf16.msra.mxu0 0
    %2566 = vmatprep.subr.bf16.mxu0 0
    %2567 = vmatpush2.bf16.msra.mxu0 0
    %2568 = vmatprep.subr.bf16.mxu0 0
    %2569 = vmatpush2.bf16.msra.mxu0 0
    %2570 = vmatprep.subr.bf16.mxu0 0
    %2571 = vmatpush2.bf16.msra.mxu0 0
    %2572 = vmatprep.subr.bf16.mxu0 0
    %2573 = vmatpush2.bf16.msra.mxu0 0
    %2574 = vmatprep.mubr.bf16.mxu0 0
    %2575 = vmatmul.mubr.bf16.gmra.mxu0 %v2342
    %v2576 = vpop.f32.mrf.mxu0
    %v2577 = vadd.f32 %v2378, %v2576
    %v2578 = vpop.f32.mrf.mxu0
    %v2579 = vadd.f32 %v2379, %v2578
    %v2580 = vpop.f32.mrf.mxu0
    %v2581 = vpop.f32.mrf.mxu0
    %2582 = vdwg.mxu0
    %2583 = vmatprep.subr.bf16.mxu0 %v2509
    %2584 = vmatpush1.bf16.msra.mxu0 %v2508
    %2585 = vmatprep.subr.bf16.mxu0 %v2505
    %2586 = vmatpush1.bf16.msra.mxu0 %v2504
    %2587 = vmatprep.subr.bf16.mxu0 %v2501
    %2588 = vmatpush1.bf16.msra.mxu0 %v2500
    %2589 = vmatprep.subr.bf16.mxu0 %v2497
    %2590 = vmatpush1.bf16.msra.mxu0 %v2496
    %2591 = vmatprep.subr.bf16.mxu0 %v2493
    %2592 = vmatpush1.bf16.msra.mxu0 %v2492
    %2593 = vmatprep.subr.bf16.mxu0 %v2489
    %2594 = vmatpush1.bf16.msra.mxu0 %v2488
    %2595 = vmatprep.subr.bf16.mxu0 %v2485
    %2596 = vmatpush1.bf16.msra.mxu0 %v2484
    %2597 = vmatprep.subr.bf16.mxu0 %v2481
    %2598 = vmatpush1.bf16.msra.mxu0 %v2480
    %2599 = vmatprep.subr.bf16.mxu0 0
    %2600 = vmatpush2.bf16.msra.mxu0 0
    %2601 = vmatprep.subr.bf16.mxu0 0
    %2602 = vmatpush2.bf16.msra.mxu0 0
    %2603 = vmatprep.subr.bf16.mxu0 0
    %2604 = vmatpush2.bf16.msra.mxu0 0
    %2605 = vmatprep.subr.bf16.mxu0 0
    %2606 = vmatpush2.bf16.msra.mxu0 0
    %2607 = vmatprep.subr.bf16.mxu0 0
    %2608 = vmatpush2.bf16.msra.mxu0 0
    %2609 = vmatprep.subr.bf16.mxu0 0
    %2610 = vmatpush2.bf16.msra.mxu0 0
    %2611 = vmatprep.subr.bf16.mxu0 0
    %2612 = vmatpush2.bf16.msra.mxu0 0
    %2613 = vmatprep.subr.bf16.mxu0 0
    %2614 = vmatpush2.bf16.msra.mxu0 0
    %2615 = vmatprep.mubr.bf16.mxu0 0
    %2616 = vmatmul.mubr.bf16.gmra.mxu0 %v2342
    %v2617 = vpop.f32.mrf.mxu0
    %v2618 = vadd.f32 %v2380, %v2617
    %v2619 = vpop.f32.mrf.mxu0
    %v2620 = vadd.f32 %v2381, %v2619
    %v2621 = vpop.f32.mrf.mxu0
    %v2622 = vpop.f32.mrf.mxu0
    %2623 = vdwg.mxu0
    %v2624 = vxor.u32 %v2577, 2147483648
    %v2625 = vxor.u32 %v2579, 2147483648
    %v2626 = vmul.f32 %v2624, 1.442695
    %v2627 = vpow.pop %v2626
    %v2628 = vmul.f32 %v2625, 1.442695
    %v2629 = vpow.pop %v2628
    %v2630 = vadd.f32 %v2627, 1.0
    %v2631 = vadd.f32 %v2629, 1.0
    %v2632 = vrcp.pop %v2630
    %v2633 = vmul.f32 1.0, %v2632
    %v2634 = vrcp.pop %v2631
    %v2635 = vmul.f32 1.0, %v2634
    %v2636 = vtanh.pop %v2618
    %v2637 = vxor.u32 %v2620, 2147483648
    %v2638 = vmul.f32 %v2637, 1.442695
    %v2639 = vpow.pop %v2638
    %v2640 = vadd.f32 %v2639, 1.0
    %v2641 = vrcp.pop %v2640
    %v2642 = vmul.f32 1.0, %v2641
    %v2643 = vmul.f32 %v2635, %v2333
    %v2644 = vmul.f32 %v2633, %v2636
    %v2645 = vadd.f32 %v2643, %v2644
    %v2646 = vtanh.pop %v2645
    %v2647 = vmul.f32 %v2642, %v2646
    %v2648 = vmul.f32 %v2647, %v768
    %2649 = vadd.xlane.f32.xlu0 %v2648
    %v2650 = vpop.xlane.xlu0 %2649
    %v2651 = vadd.f32 %v2650, %v777
    %s2652 = scalar_lea.vmem %s8, 48
    %2653 = vst.msk [vmem:[%s2652] sm:$0xff] %vm780, %v2651
    %v2654 = vpack.c.bf16 %v2647, %v2647
    %v2655 = vld [vmem:[#allocation4] sm:$0xff]
    %v2656 = vld [vmem:[#allocation4 + $0x8] sm:$0xff]
    %v2657 = vld [vmem:[#allocation4 + $0x10] sm:$0xff]
    %v2658 = vld [vmem:[#allocation4 + $0x18] sm:$0xff]
    %v2659 = vld [vmem:[#allocation4 + $0x20] sm:$0xff]
    %v2660 = vld [vmem:[#allocation4 + $0x28] sm:$0xff]
    %v2661 = vld [vmem:[#allocation4 + $0x30] sm:$0xff]
    %v2662 = vld [vmem:[#allocation4 + $0x38] sm:$0xff]
    %v2663 = vld [vmem:[#allocation4 + $0x40] sm:$0xff]
    %v2664 = vld [vmem:[#allocation4 + $0x48] sm:$0xff]
    %v2665 = vld [vmem:[#allocation4 + $0x50] sm:$0xff]
    %v2666 = vld [vmem:[#allocation4 + $0x58] sm:$0xff]
    %v2667 = vld [vmem:[#allocation4 + $0x60] sm:$0xff]
    %v2668 = vld [vmem:[#allocation4 + $0x68] sm:$0xff]
    %v2669 = vld [vmem:[#allocation4 + $0x70] sm:$0xff]
    %v2670 = vld [vmem:[#allocation4 + $0x78] sm:$0xff]
    %v2671 = vld [vmem:[#allocation4 + $0x80] sm:$0xff]
    %v2672 = vld [vmem:[#allocation4 + $0x88] sm:$0xff]
    %v2673 = vld [vmem:[#allocation4 + $0x90] sm:$0xff]
    %v2674 = vld [vmem:[#allocation4 + $0x98] sm:$0xff]
    %v2675 = vld [vmem:[#allocation4 + $0xa0] sm:$0xff]
    %v2676 = vld [vmem:[#allocation4 + $0xa8] sm:$0xff]
    %v2677 = vld [vmem:[#allocation4 + $0xb0] sm:$0xff]
    %v2678 = vld [vmem:[#allocation4 + $0xb8] sm:$0xff]
    %v2679 = vld [vmem:[#allocation4 + $0xc0] sm:$0xff]
    %v2680 = vld [vmem:[#allocation4 + $0xc8] sm:$0xff]
    %v2681 = vld [vmem:[#allocation4 + $0xd0] sm:$0xff]
    %v2682 = vld [vmem:[#allocation4 + $0xd8] sm:$0xff]
    %v2683 = vld [vmem:[#allocation4 + $0xe0] sm:$0xff]
    %v2684 = vld [vmem:[#allocation4 + $0xe8] sm:$0xff]
    %v2685 = vld [vmem:[#allocation4 + $0xf0] sm:$0xff]
    %v2686 = vld [vmem:[#allocation4 + $0xf8] sm:$0xff]
    %s2687 = smul.u32 7, 4
    %s2688 = smul.addr %s2687, 8
    %s2689 = scalar_lea.vmem [#allocation2], %s2688
    %v2690 = vld [vmem:[%s2689] sm:$0xff]
    %v2691 = vld [vmem:[%s2689 + $0x8] sm:$0xff]
    %v2692 = vld [vmem:[%s2689 + $0x10] sm:$0xff]
    %v2693 = vld [vmem:[%s2689 + $0x18] sm:$0xff]
    %v2726 = vunpack.c.l.b16 %v2655
    %v2727 = vunpack.c.h.b16 %v2655
    %v2728 = vunpack.c.l.b16 %v2656
    %v2729 = vunpack.c.h.b16 %v2656
    %v2730 = vunpack.c.l.b16 %v2657
    %v2731 = vunpack.c.h.b16 %v2657
    %v2732 = vunpack.c.l.b16 %v2658
    %v2733 = vunpack.c.h.b16 %v2658
    %v2734 = vunpack.c.l.b16 %v2659
    %v2735 = vunpack.c.h.b16 %v2659
    %v2736 = vunpack.c.l.b16 %v2660
    %v2737 = vunpack.c.h.b16 %v2660
    %v2738 = vunpack.c.l.b16 %v2661
    %v2739 = vunpack.c.h.b16 %v2661
    %v2740 = vunpack.c.l.b16 %v2662
    %v2741 = vunpack.c.h.b16 %v2662
    %v2742 = vunpack.c.l.b16 %v2663
    %v2743 = vunpack.c.h.b16 %v2663
    %v2744 = vunpack.c.l.b16 %v2664
    %v2745 = vunpack.c.h.b16 %v2664
    %v2746 = vunpack.c.l.b16 %v2665
    %v2747 = vunpack.c.h.b16 %v2665
    %v2748 = vunpack.c.l.b16 %v2666
    %v2749 = vunpack.c.h.b16 %v2666
    %v2750 = vunpack.c.l.b16 %v2667
    %v2751 = vunpack.c.h.b16 %v2667
    %v2752 = vunpack.c.l.b16 %v2668
    %v2753 = vunpack.c.h.b16 %v2668
    %v2754 = vunpack.c.l.b16 %v2669
    %v2755 = vunpack.c.h.b16 %v2669
    %v2756 = vunpack.c.l.b16 %v2670
    %v2757 = vunpack.c.h.b16 %v2670
    %v2758 = vunpack.c.l.b16 %v2671
    %v2759 = vunpack.c.h.b16 %v2671
    %v2760 = vunpack.c.l.b16 %v2672
    %v2761 = vunpack.c.h.b16 %v2672
    %v2762 = vunpack.c.l.b16 %v2673
    %v2763 = vunpack.c.h.b16 %v2673
    %v2764 = vunpack.c.l.b16 %v2674
    %v2765 = vunpack.c.h.b16 %v2674
    %v2766 = vunpack.c.l.b16 %v2675
    %v2767 = vunpack.c.h.b16 %v2675
    %v2768 = vunpack.c.l.b16 %v2676
    %v2769 = vunpack.c.h.b16 %v2676
    %v2770 = vunpack.c.l.b16 %v2677
    %v2771 = vunpack.c.h.b16 %v2677
    %v2772 = vunpack.c.l.b16 %v2678
    %v2773 = vunpack.c.h.b16 %v2678
    %v2774 = vunpack.c.l.b16 %v2679
    %v2775 = vunpack.c.h.b16 %v2679
    %v2776 = vunpack.c.l.b16 %v2680
    %v2777 = vunpack.c.h.b16 %v2680
    %v2778 = vunpack.c.l.b16 %v2681
    %v2779 = vunpack.c.h.b16 %v2681
    %v2780 = vunpack.c.l.b16 %v2682
    %v2781 = vunpack.c.h.b16 %v2682
    %v2782 = vunpack.c.l.b16 %v2683
    %v2783 = vunpack.c.h.b16 %v2683
    %v2784 = vunpack.c.l.b16 %v2684
    %v2785 = vunpack.c.h.b16 %v2684
    %v2786 = vunpack.c.l.b16 %v2685
    %v2787 = vunpack.c.h.b16 %v2685
    %v2788 = vunpack.c.l.b16 %v2686
    %v2789 = vunpack.c.h.b16 %v2686
    %v2790 = vpack.c.b16 %v2730, %v2726
    %v2791 = vpack.c.b16 %v2731, %v2727
    %v2792 = vpack.c.b16 %v2732, %v2728
    %v2793 = vpack.c.b16 %v2733, %v2729
    %v2794 = vpack.c.b16 %v2738, %v2734
    %v2795 = vpack.c.b16 %v2739, %v2735
    %v2796 = vpack.c.b16 %v2740, %v2736
    %v2797 = vpack.c.b16 %v2741, %v2737
    %v2798 = vpack.c.b16 %v2746, %v2742
    %v2799 = vpack.c.b16 %v2747, %v2743
    %v2800 = vpack.c.b16 %v2748, %v2744
    %v2801 = vpack.c.b16 %v2749, %v2745
    %v2802 = vpack.c.b16 %v2754, %v2750
    %v2803 = vpack.c.b16 %v2755, %v2751
    %v2804 = vpack.c.b16 %v2756, %v2752
    %v2805 = vpack.c.b16 %v2757, %v2753
    %v2806 = vpack.c.b16 %v2762, %v2758
    %v2807 = vpack.c.b16 %v2763, %v2759
    %v2808 = vpack.c.b16 %v2764, %v2760
    %v2809 = vpack.c.b16 %v2765, %v2761
    %v2810 = vpack.c.b16 %v2770, %v2766
    %v2811 = vpack.c.b16 %v2771, %v2767
    %v2812 = vpack.c.b16 %v2772, %v2768
    %v2813 = vpack.c.b16 %v2773, %v2769
    %v2814 = vpack.c.b16 %v2778, %v2774
    %v2815 = vpack.c.b16 %v2779, %v2775
    %v2816 = vpack.c.b16 %v2780, %v2776
    %v2817 = vpack.c.b16 %v2781, %v2777
    %v2818 = vpack.c.b16 %v2786, %v2782
    %v2819 = vpack.c.b16 %v2787, %v2783
    %v2820 = vpack.c.b16 %v2788, %v2784
    %v2821 = vpack.c.b16 %v2789, %v2785
    %2854 = vmatprep.subr.bf16.mxu0 %v2819
    %2855 = vmatpush1.bf16.msra.mxu0 %v2818
    %2856 = vmatprep.subr.bf16.mxu0 %v2815
    %2857 = vmatpush1.bf16.msra.mxu0 %v2814
    %2858 = vmatprep.subr.bf16.mxu0 %v2811
    %2859 = vmatpush1.bf16.msra.mxu0 %v2810
    %2860 = vmatprep.subr.bf16.mxu0 %v2807
    %2861 = vmatpush1.bf16.msra.mxu0 %v2806
    %2862 = vmatprep.subr.bf16.mxu0 %v2803
    %2863 = vmatpush1.bf16.msra.mxu0 %v2802
    %2864 = vmatprep.subr.bf16.mxu0 %v2799
    %2865 = vmatpush1.bf16.msra.mxu0 %v2798
    %2866 = vmatprep.subr.bf16.mxu0 %v2795
    %2867 = vmatpush1.bf16.msra.mxu0 %v2794
    %2868 = vmatprep.subr.bf16.mxu0 %v2791
    %2869 = vmatpush1.bf16.msra.mxu0 %v2790
    %2870 = vmatprep.subr.bf16.mxu0 0
    %2871 = vmatpush2.bf16.msra.mxu0 0
    %2872 = vmatprep.subr.bf16.mxu0 0
    %2873 = vmatpush2.bf16.msra.mxu0 0
    %2874 = vmatprep.subr.bf16.mxu0 0
    %2875 = vmatpush2.bf16.msra.mxu0 0
    %2876 = vmatprep.subr.bf16.mxu0 0
    %2877 = vmatpush2.bf16.msra.mxu0 0
    %2878 = vmatprep.subr.bf16.mxu0 0
    %2879 = vmatpush2.bf16.msra.mxu0 0
    %2880 = vmatprep.subr.bf16.mxu0 0
    %2881 = vmatpush2.bf16.msra.mxu0 0
    %2882 = vmatprep.subr.bf16.mxu0 0
    %2883 = vmatpush2.bf16.msra.mxu0 0
    %2884 = vmatprep.subr.bf16.mxu0 0
    %2885 = vmatpush2.bf16.msra.mxu0 0
    %2886 = vmatprep.mubr.bf16.mxu0 0
    %2887 = vmatmul.mubr.bf16.gmra.mxu0 %v2654
    %v2888 = vpop.f32.mrf.mxu0
    %v2889 = vadd.f32 %v2690, %v2888
    %v2890 = vpop.f32.mrf.mxu0
    %v2891 = vadd.f32 %v2691, %v2890
    %v2892 = vpop.f32.mrf.mxu0
    %v2893 = vpop.f32.mrf.mxu0
    %2894 = vdwg.mxu0
    %2895 = vmatprep.subr.bf16.mxu0 %v2821
    %2896 = vmatpush1.bf16.msra.mxu0 %v2820
    %2897 = vmatprep.subr.bf16.mxu0 %v2817
    %2898 = vmatpush1.bf16.msra.mxu0 %v2816
    %2899 = vmatprep.subr.bf16.mxu0 %v2813
    %2900 = vmatpush1.bf16.msra.mxu0 %v2812
    %2901 = vmatprep.subr.bf16.mxu0 %v2809
    %2902 = vmatpush1.bf16.msra.mxu0 %v2808
    %2903 = vmatprep.subr.bf16.mxu0 %v2805
    %2904 = vmatpush1.bf16.msra.mxu0 %v2804
    %2905 = vmatprep.subr.bf16.mxu0 %v2801
    %2906 = vmatpush1.bf16.msra.mxu0 %v2800
    %2907 = vmatprep.subr.bf16.mxu0 %v2797
    %2908 = vmatpush1.bf16.msra.mxu0 %v2796
    %2909 = vmatprep.subr.bf16.mxu0 %v2793
    %2910 = vmatpush1.bf16.msra.mxu0 %v2792
    %2911 = vmatprep.subr.bf16.mxu0 0
    %2912 = vmatpush2.bf16.msra.mxu0 0
    %2913 = vmatprep.subr.bf16.mxu0 0
    %2914 = vmatpush2.bf16.msra.mxu0 0
    %2915 = vmatprep.subr.bf16.mxu0 0
    %2916 = vmatpush2.bf16.msra.mxu0 0
    %2917 = vmatprep.subr.bf16.mxu0 0
    %2918 = vmatpush2.bf16.msra.mxu0 0
    %2919 = vmatprep.subr.bf16.mxu0 0
    %2920 = vmatpush2.bf16.msra.mxu0 0
    %2921 = vmatprep.subr.bf16.mxu0 0
    %2922 = vmatpush2.bf16.msra.mxu0 0
    %2923 = vmatprep.subr.bf16.mxu0 0
    %2924 = vmatpush2.bf16.msra.mxu0 0
    %2925 = vmatprep.subr.bf16.mxu0 0
    %2926 = vmatpush2.bf16.msra.mxu0 0
    %2927 = vmatprep.mubr.bf16.mxu0 0
    %2928 = vmatmul.mubr.bf16.gmra.mxu0 %v2654
    %v2929 = vpop.f32.mrf.mxu0
    %v2930 = vadd.f32 %v2692, %v2929
    %v2931 = vpop.f32.mrf.mxu0
    %v2932 = vadd.f32 %v2693, %v2931
    %v2933 = vpop.f32.mrf.mxu0
    %v2934 = vpop.f32.mrf.mxu0
    %2935 = vdwg.mxu0
    %v2936 = vxor.u32 %v2889, 2147483648
    %v2937 = vxor.u32 %v2891, 2147483648
    %v2938 = vmul.f32 %v2936, 1.442695
    %v2939 = vpow.pop %v2938
    %v2940 = vmul.f32 %v2937, 1.442695
    %v2941 = vpow.pop %v2940
    %v2942 = vadd.f32 %v2939, 1.0
    %v2943 = vadd.f32 %v2941, 1.0
    %v2944 = vrcp.pop %v2942
    %v2945 = vmul.f32 1.0, %v2944
    %v2946 = vrcp.pop %v2943
    %v2947 = vmul.f32 1.0, %v2946
    %v2948 = vtanh.pop %v2930
    %v2949 = vxor.u32 %v2932, 2147483648
    %v2950 = vmul.f32 %v2949, 1.442695
    %v2951 = vpow.pop %v2950
    %v2952 = vadd.f32 %v2951, 1.0
    %v2953 = vrcp.pop %v2952
    %v2954 = vmul.f32 1.0, %v2953
    %v2955 = vmul.f32 %v2947, %v2645
    %v2956 = vmul.f32 %v2945, %v2948
    %v2957 = vadd.f32 %v2955, %v2956
    %v2958 = vtanh.pop %v2957
    %v2959 = vmul.f32 %v2954, %v2958
    %v2960 = vmul.f32 %v2959, %v768
    %2961 = vadd.xlane.f32.xlu0 %v2960
    %v2962 = vpop.xlane.xlu0 %2961
    %v2963 = vadd.f32 %v2962, %v777
    %s2964 = scalar_lea.vmem %s8, 56
    %2965 = vst.msk [vmem:[%s2964] sm:$0xff] %vm780, %v2963
    %2966 = vst [vmem:[#allocation7] sm:$0xff] %v2959
    %2967 = vst [vmem:[#allocation8] sm:$0xff] %v2957
    // Predicated region
    $region38: #{tpu_custom_call.1} parent=1 // pred_check
      _
    $region39: #{tpu_custom_call.1} parent=1 // pred_check_branch
      %2969 = sbr.rel (0) target = $region41
    $region40: #{tpu_custom_call.1} parent=1 // pred_region
      _
    $region41: #{tpu_custom_call.1} parent=1 // pred_fallthru
      _
    // Predicated region
    $region42: #{tpu_custom_call.1} parent=1 // pred_check
      _
    $region43: #{tpu_custom_call.1} parent=1 // pred_check_branch
      %2971 = sbr.rel (0) target = $region45
    $region44: #{tpu_custom_call.1} parent=1 // pred_region
      %s2973 = ssub.s32 128, 128
      %2974 = vsyncadd [#allocation6], %s2973
      %s2976 = sshll.u32 [#allocation7], 4
      %s2977 = int_to_ptr.vmem [resolvable:$true] %s2976
      %2979 = dma.vmem_to_hbm [thread:$0]  %s2977, 128, %s9, [#allocation6]
    $region45: #{tpu_custom_call.1} parent=1 // pred_fallthru
      _
    // Predicated region
    $region46: #{tpu_custom_call.1} parent=1 // pred_check
      _
    $region47: #{tpu_custom_call.1} parent=1 // pred_check_branch
      %2981 = sbr.rel (0) target = $region49
    $region48: #{tpu_custom_call.1} parent=1 // pred_region
      %s2983 = ssub.s32 128, 128
      %2984 = vsyncadd [#allocation9], %s2983
      %s2986 = sshll.u32 [#allocation8], 4
      %s2987 = int_to_ptr.vmem [resolvable:$true] %s2986
      %2989 = dma.vmem_to_hbm [thread:$0]  %s2987, 128, %s10, [#allocation9]
    $region49: #{tpu_custom_call.1} parent=1 // pred_fallthru
      _
    // Predicated region
    $region50: #{tpu_custom_call.1} parent=1 // pred_check
      _
    $region51: #{tpu_custom_call.1} parent=1 // pred_check_branch
      %2991 = sbr.rel (0) target = $region53
    $region52: #{tpu_custom_call.1} parent=1 // pred_region
      _
    $region53: #{tpu_custom_call.1} parent=1 // pred_fallthru
      _
    // Predicated region
    $region54: #{tpu_custom_call.1} parent=1 // pred_check
      _
    $region55: #{tpu_custom_call.1} parent=1 // pred_check_branch
      %2993 = sbr.rel (0) target = $region57
    $region56: #{tpu_custom_call.1} parent=1 // pred_region
      %2994 = dma.done [#allocation6], 128
    $region57: #{tpu_custom_call.1} parent=1 // pred_fallthru
      _
    // Predicated region
    $region58: #{tpu_custom_call.1} parent=1 // pred_check
      _
    $region59: #{tpu_custom_call.1} parent=1 // pred_check_branch
      %2996 = sbr.rel (0) target = $region61
    $region60: #{tpu_custom_call.1} parent=1 // pred_region
      %2997 = dma.done [#allocation9], 128
    $region61: #{tpu_custom_call.1} parent=1 // pred_fallthru
      _
    %2998 = vsyncpa [#allocation5], 1
    %2999 = vsyncpa [#allocation6], 1
    %3000 = vsyncpa [#allocation9], 1

</llo_original>
